<compile_context>
chip_gen: v7x
topology: tpu7x:2x2x1
jax: 0.10.0
libtpu: 0.0.40
codegen_flags: <defaults>
</compile_context>

<pallas_src>
import math
import functools

import jax
import jax.numpy as jnp
from jax.experimental import pallas as pl
from jax.experimental.pallas import tpu as pltpu

EPS = 1e-6  # norm_layer = partial(LayerNorm, eps=1e-6)
_SQRT_2_OVER_PI = math.sqrt(2.0 / math.pi)


# ---------------------------------------------------------------------------
# in-kernel helpers
# ---------------------------------------------------------------------------
def _layernorm(x, w, b):
    mu = jnp.mean(x, axis=-1, keepdims=True)
    xc = x - mu
    var = jnp.mean(xc * xc, axis=-1, keepdims=True)
    inv = jax.lax.rsqrt(var + EPS)
    return xc * inv * w + b


def _gelu_tanh(x):
    return 0.5 * x * (1.0 + jnp.tanh(_SQRT_2_OVER_PI * (x + 0.044715 * x * x * x)))


# ---------------------------------------------------------------------------
# fused encoder kernel: patch-embed + pos + depth x (MHSA + MLP) + final LN
# ---------------------------------------------------------------------------
def make_encoder_kernel(num_heads, head_dim, G, L, D):
    scale = head_dim ** -0.5
    GL = G * L

    def kernel(tok_ref, pw_ref, pb_ref, pos_ref,
               ln1w_ref, ln1b_ref, wqkv_ref, bqkv_ref, wo_ref, bo_ref,
               ln2w_ref, ln2b_ref, w1_ref, b1_ref, w2_ref, b2_ref,
               nw_ref, nb_ref,
               o_ref, xs_ref):
        d_idx = pl.program_id(1)
        n_depth = pl.num_programs(1)

        # ---- depth == 0: patch embedding (conv == per-patch matmul) + pos ----
        @pl.when(d_idx == 0)
        def _():
            t = tok_ref[0]                                   # (GL, C*p*p) bf16
            x0 = (jnp.dot(t, pw_ref[...], preferred_element_type=jnp.float32)
                  + pb_ref[...])                             # (GL, D) f32
            # pos_embed (L, D) broadcast over the G packed views
            x0 = (x0.reshape(G, L, D) + pos_ref[...]).reshape(GL, D)
            xs_ref[...] = x0

        x = xs_ref[...]                                      # (GL, D) f32

        # ---- attention branch: x + proj(MHSA(LN1(x))) ----
        h = _layernorm(x, ln1w_ref[0], ln1b_ref[0]).astype(jnp.bfloat16)
        qkv = (jnp.dot(h, wqkv_ref[0], preferred_element_type=jnp.float32)
               + bqkv_ref[0])                                # (GL, 3D) f32
        q = (qkv[:, 0:D] * scale).astype(jnp.bfloat16)       # pre-scaled once
        k = qkv[:, D:2 * D].astype(jnp.bfloat16)
        v = qkv[:, 2 * D:3 * D].astype(jnp.bfloat16)

        # stack heads along the leading batch dim -> one batched attention
        qs, ks, vs = [], [], []
        for hh in range(num_heads):
            s = hh * head_dim
            qs.append(q[:, s:s + head_dim].reshape(G, L, head_dim))
            ks.append(k[:, s:s + head_dim].reshape(G, L, head_dim))
            vs.append(v[:, s:s + head_dim].reshape(G, L, head_dim))
        qb = jnp.concatenate(qs, axis=0)                     # (H*G, L, hd) bf16
        kb = jnp.concatenate(ks, axis=0)
        vb = jnp.concatenate(vs, axis=0)

        sc = jnp.einsum('bqd,bkd->bqk', qb, kb,
                        preferred_element_type=jnp.float32)  # (H*G, L, L) f32
        sc = sc - jnp.max(sc, axis=-1, keepdims=True)
        p = jnp.exp(sc)
        p = p * pl.reciprocal(jnp.sum(p, axis=-1, keepdims=True), approx=True)
        ob = jnp.einsum('bqk,bkd->bqd', p.astype(jnp.bfloat16), vb,
                        preferred_element_type=jnp.float32)  # (H*G, L, hd) f32
        ob = ob.astype(jnp.bfloat16)

        # lane-concat head outputs -> single full-K output projection matmul
        heads_out = jnp.concatenate(
            [ob[hh * G:(hh + 1) * G].reshape(GL, head_dim)
             for hh in range(num_heads)], axis=-1)           # (GL, D) bf16
        attn = jnp.dot(heads_out, wo_ref[0],
                       preferred_element_type=jnp.float32)   # (GL, D) f32
        x = x + attn + bo_ref[0]

        # ---- MLP branch: x + W2(GELU(W1(LN2(x)))) ----
        h2 = _layernorm(x, ln2w_ref[0], ln2b_ref[0]).astype(jnp.bfloat16)
        h2 = jnp.dot(h2, w1_ref[0], preferred_element_type=jnp.float32) + b1_ref[0]
        h2 = _gelu_tanh(h2).astype(jnp.bfloat16)
        h2 = jnp.dot(h2, w2_ref[0], preferred_element_type=jnp.float32) + b2_ref[0]
        x = x + h2

        xs_ref[...] = x                                      # resident over depth

        # ---- last depth step: final LayerNorm, write output block ----
        @pl.when(d_idx == n_depth - 1)
        def _():
            o_ref[0] = _layernorm(x, nw_ref[...], nb_ref[...])

    return kernel


# ---------------------------------------------------------------------------
# glue (plain JAX)
# ---------------------------------------------------------------------------
def extract_patches(x, patch):
    # x: (N, C, H, W) -> (N, num_patches, C*p*p); flatten order (C, p, p)
    # matches Conv2d(weight=(D, C, p, p), stride=kernel=p).
    N, C, H, W = x.shape
    gh, gw = H // patch, W // patch
    x = x.reshape(N, C, gh, patch, gw, patch)
    x = x.transpose(0, 2, 4, 1, 3, 5)                        # (N, gh, gw, C, p, p)
    return x.reshape(N, gh * gw, C * patch * patch)


def _pick_group(BV, L, max_rows=512):
    # Pack G views per grid step so each tile has G*L rows (MXU-friendly).
    # Enforce GL % 8 == 0 (sublane alignment) and prefer keeping >= 2 view
    # groups so the "parallel" grid axis can split across both v7x TCs.
    cands = [g for g in range(1, BV + 1)
             if BV % g == 0 and g * L <= max_rows and (g * L) % 8 == 0]
    if not cands:
        return 1
    multi = [g for g in cands if BV // g >= 2]
    return max(multi) if multi else max(cands)


def _vmem_limit_bytes():
    # Leave headroom under physical VMEM; cap at 100 MiB (v6e weight-DMA hiding),
    # yields ~52 MiB on v7x (64 MiB physical). Fallback: 48 MiB.
    try:
        cap = pltpu.get_tpu_info().vmem_capacity_bytes
        return int(min(100 * 1024 * 1024,
                       max(32 * 1024 * 1024, cap - 12 * 1024 * 1024)))
    except Exception:
        return 48 * 1024 * 1024


def _const_spec(shape):
    n = len(shape)
    return pl.BlockSpec(tuple(shape), lambda v, d, n=n: (0,) * n)


def _depth_spec(shape_wo_depth):
    n = len(shape_wo_depth)
    return pl.BlockSpec((1,) + tuple(shape_wo_depth),
                        lambda v, d, n=n: (d,) + (0,) * n)


def init_params(key, *, in_chans, patch, embed_dim, depth, num_heads, mlp_ratio,
                num_patches):
    D = embed_dim
    hidden = int(D * mlp_ratio)
    Cpp = in_chans * patch * patch
    ks = jax.random.split(key, 6)

    def tn(k, shape, dtype=jnp.float32):  # trunc_normal(std=0.02) surrogate
        return (0.02 * jax.random.normal(k, shape, jnp.float32)).astype(dtype)

    return {
        # conv weight (D, C, p, p) stored directly as linear (C*p*p, D), bf16
        "patch_w": tn(ks[0], (Cpp, D), jnp.bfloat16),
        "patch_b": jnp.zeros((1, D), jnp.float32),
        # distilled model: pos_embed has num_patches + 2 rows; forward uses [:, 2:, :]
        "pos_embed": tn(ks[1], (1, num_patches + 2, D)),
        # per-layer params stacked along a leading depth axis
        "ln1_w": jnp.ones((depth, 1, D), jnp.float32),
        "ln1_b": jnp.zeros((depth, 1, D), jnp.float32),
        "w_qkv": tn(ks[2], (depth, D, 3 * D), jnp.bfloat16),   # fused Q|K|V
        "b_qkv": jnp.zeros((depth, 1, 3 * D), jnp.float32),
        "w_o":   tn(ks[3], (depth, D, D), jnp.bfloat16),
        "b_o":   jnp.zeros((depth, 1, D), jnp.float32),
        "ln2_w": jnp.ones((depth, 1, D), jnp.float32),
        "ln2_b": jnp.zeros((depth, 1, D), jnp.float32),
        "w1":    tn(ks[4], (depth, D, hidden), jnp.bfloat16),
        "b1":    jnp.zeros((depth, 1, hidden), jnp.float32),
        "w2":    tn(ks[5], (depth, hidden, D), jnp.bfloat16),
        "b2":    jnp.zeros((depth, 1, D), jnp.float32),
        "norm_w": jnp.ones((1, D), jnp.float32),
        "norm_b": jnp.zeros((1, D), jnp.float32),
    }


def encoder_forward(images, params, *, patch, num_heads, group=None, max_rows=512):
    B, V, C, H, W = images.shape
    x = images.reshape(B * V, C, H, W)                       # '(b v) c h w'
    tokens = extract_patches(x, patch)                       # (BV, L, C*p*p) f32
    BV, L, P = tokens.shape
    D = params["patch_w"].shape[1]
    depth = params["w_qkv"].shape[0]
    hidden = params["w1"].shape[2]
    head_dim = D // num_heads

    G = _pick_group(BV, L, max_rows) if group is None else group
    assert BV % G == 0
    nv = BV // G
    GL = G * L

    # bf16 tokens: halves the token HBM read + double-buffered VMEM footprint
    tokens_g = tokens.reshape(nv, GL, P).astype(jnp.bfloat16)
    pos = params["pos_embed"][0, 2:, :]                      # (L, D), untiled

    kernel = make_encoder_kernel(num_heads, head_dim, G, L, D)

    in_specs = [
        pl.BlockSpec((1, GL, P), lambda v, d: (v, 0, 0)),    # patch tokens (bf16)
        _const_spec((P, D)),                                 # patch_w
        _const_spec((1, D)),                                 # patch_b
        _const_spec((L, D)),                                 # pos (broadcast in-kernel)
        _depth_spec((1, D)),                                 # ln1_w
        _depth_spec((1, D)),                                 # ln1_b
        _depth_spec((D, 3 * D)),                             # w_qkv
        _depth_spec((1, 3 * D)),                             # b_qkv
        _depth_spec((D, D)),                                 # w_o
        _depth_spec((1, D)),                                 # b_o
        _depth_spec((1, D)),                                 # ln2_w
        _depth_spec((1, D)),                                 # ln2_b
        _depth_spec((D, hidden)),                            # w1
        _depth_spec((1, hidden)),                            # b1
        _depth_spec((hidden, D)),                            # w2
        _depth_spec((1, D)),                                 # b2
        _const_spec((1, D)),                                 # final norm_w
        _const_spec((1, D)),                                 # final norm_b
    ]

    out = pl.pallas_call(
        kernel,
        grid=(nv, depth),
        in_specs=in_specs,
        out_specs=pl.BlockSpec((1, GL, D), lambda v, d: (v, 0, 0)),
        out_shape=jax.ShapeDtypeStruct((nv, GL, D), jnp.float32),
        scratch_shapes=[pltpu.VMEM((GL, D), jnp.float32)],   # resident token tile
        compiler_params=pltpu.CompilerParams(
            dimension_semantics=("parallel", "arbitrary"),
            vmem_limit_bytes=_vmem_limit_bytes()),
    )(tokens_g,
      params["patch_w"], params["patch_b"], pos,
      params["ln1_w"], params["ln1_b"], params["w_qkv"], params["b_qkv"],
      params["w_o"], params["b_o"], params["ln2_w"], params["ln2_b"],
      params["w1"], params["b1"], params["w2"], params["b2"],
      params["norm_w"], params["norm_b"])

    # '(b v) l d -> b v l d'
    return out.reshape(B, V, L, D)


# ---------------------------------------------------------------------------
if __name__ == "__main__":
    # small, structure-consistent shapes
    B, V, C = 2, 2, 3
    H = W = 64
    PATCH = 16
    EMBED_DIM = 128
    DEPTH = 2
    NUM_HEADS = 4
    MLP_RATIO = 4.0
    NUM_PATCHES = (H // PATCH) * (W // PATCH)                # 16 tokens per view

    key = jax.random.PRNGKey(0)
    k_img, k_par = jax.random.split(key)
    images = jax.random.normal(k_img, (B, V, C, H, W), jnp.float32)
    params = init_params(
        k_par,
        in_chans=C,
        patch=PATCH,
        embed_dim=EMBED_DIM,
        depth=DEPTH,
        num_heads=NUM_HEADS,
        mlp_ratio=MLP_RATIO,
        num_patches=NUM_PATCHES,
    )

    fwd = jax.jit(
        functools.partial(encoder_forward, patch=PATCH, num_heads=NUM_HEADS)
    )
    out = fwd(images, params)
    out = jax.block_until_ready(out)
    assert out.shape == (B, V, NUM_PATCHES, EMBED_DIM), out.shape
    assert bool(jnp.all(jnp.isfinite(out)))
    print("KERNEL_OK")
</pallas_src>

<mosaic_0001>
module attributes {stable_mosaic.version = 11 : i64} {
  func.func @kernel(%arg0: i32, %arg1: i32, %arg2: memref<1x32x768xbf16, #tpu.memory_space<vmem>>, %arg3: memref<768x128xbf16, #tpu.memory_space<vmem>>, %arg4: memref<1x128xf32, #tpu.memory_space<vmem>>, %arg5: memref<16x128xf32, #tpu.memory_space<vmem>>, %arg6: memref<1x1x128xf32, #tpu.memory_space<vmem>>, %arg7: memref<1x1x128xf32, #tpu.memory_space<vmem>>, %arg8: memref<1x128x384xbf16, #tpu.memory_space<vmem>>, %arg9: memref<1x1x384xf32, #tpu.memory_space<vmem>>, %arg10: memref<1x128x128xbf16, #tpu.memory_space<vmem>>, %arg11: memref<1x1x128xf32, #tpu.memory_space<vmem>>, %arg12: memref<1x1x128xf32, #tpu.memory_space<vmem>>, %arg13: memref<1x1x128xf32, #tpu.memory_space<vmem>>, %arg14: memref<1x128x512xbf16, #tpu.memory_space<vmem>>, %arg15: memref<1x1x512xf32, #tpu.memory_space<vmem>>, %arg16: memref<1x512x128xbf16, #tpu.memory_space<vmem>>, %arg17: memref<1x1x128xf32, #tpu.memory_space<vmem>>, %arg18: memref<1x128xf32, #tpu.memory_space<vmem>>, %arg19: memref<1x128xf32, #tpu.memory_space<vmem>>, %arg20: memref<1x32x128xf32, #tpu.memory_space<vmem>>, %arg21: memref<32x128xf32, #tpu.memory_space<vmem>>) attributes {dimension_semantics = [#tpu.dimension_semantics<parallel>, #tpu.dimension_semantics<arbitrary>], iteration_bounds = array<i64: 2, 2>, scalar_prefetch = 0 : i64, scratch_operands = 1 : i64, tpu.core_type = #tpu.core_type<tc>, window_params = [{transform_indices = @transform_0, window_bounds = array<i64: 1, 32, 768>}, {pipeline_mode = #tpu.pipeline_mode<synchronous>, transform_indices = @transform_1, window_bounds = array<i64: 768, 128>}, {pipeline_mode = #tpu.pipeline_mode<synchronous>, transform_indices = @transform_2, window_bounds = array<i64: 1, 128>}, {pipeline_mode = #tpu.pipeline_mode<synchronous>, transform_indices = @transform_3, window_bounds = array<i64: 16, 128>}, {transform_indices = @transform_4, window_bounds = array<i64: 1, 1, 128>}, {transform_indices = @transform_5, window_bounds = array<i64: 1, 1, 128>}, {transform_indices = @transform_6, window_bounds = array<i64: 1, 128, 384>}, {transform_indices = @transform_7, window_bounds = array<i64: 1, 1, 384>}, {transform_indices = @transform_8, window_bounds = array<i64: 1, 128, 128>}, {transform_indices = @transform_9, window_bounds = array<i64: 1, 1, 128>}, {transform_indices = @transform_10, window_bounds = array<i64: 1, 1, 128>}, {transform_indices = @transform_11, window_bounds = array<i64: 1, 1, 128>}, {transform_indices = @transform_12, window_bounds = array<i64: 1, 128, 512>}, {transform_indices = @transform_13, window_bounds = array<i64: 1, 1, 512>}, {transform_indices = @transform_14, window_bounds = array<i64: 1, 512, 128>}, {transform_indices = @transform_15, window_bounds = array<i64: 1, 1, 128>}, {pipeline_mode = #tpu.pipeline_mode<synchronous>, transform_indices = @transform_16, window_bounds = array<i64: 1, 128>}, {pipeline_mode = #tpu.pipeline_mode<synchronous>, transform_indices = @transform_17, window_bounds = array<i64: 1, 128>}, {transform_indices = @transform_18, window_bounds = array<i64: 1, 32, 128>}]} {
    %c0_i32 = arith.constant 0 : i32
    %0 = arith.cmpi eq, %arg1, %c0_i32 : i32
    %1 = arith.extui %0 : i1 to i32
    %c0_i32_0 = arith.constant 0 : i32
    %2 = arith.cmpi ne, %1, %c0_i32_0 : i32
    scf.if %2 {
      %c0_63 = arith.constant 0 : index
      %c0_64 = arith.constant 0 : index
      %c0_65 = arith.constant 0 : index
      %160 = vector.load %arg2[%c0_63, %c0_64, %c0_65] : memref<1x32x768xbf16, #tpu.memory_space<vmem>>, vector<1x32x768xbf16>
      %161 = vector.shape_cast %160 : vector<1x32x768xbf16> to vector<32x768xbf16>
      %c0_66 = arith.constant 0 : index
      %c0_67 = arith.constant 0 : index
      %162 = vector.load %arg3[%c0_66, %c0_67] : memref<768x128xbf16, #tpu.memory_space<vmem>>, vector<768x128xbf16>
      %cst_68 = arith.constant dense<0.000000e+00> : vector<32x128xf32>
      %163 = tpu.matmul %161, %162, %cst_68 {dimension_numbers = #tpu.dot_dimension_numbers<[1], [0], [0], [1], [0, 0, 1, 1], [], []>} : vector<32x768xbf16>, vector<768x128xbf16>, vector<32x128xf32> -> vector<32x128xf32>
      %c0_69 = arith.constant 0 : index
      %c0_70 = arith.constant 0 : index
      %164 = vector.load %arg4[%c0_69, %c0_70] : memref<1x128xf32, #tpu.memory_space<vmem>>, vector<1x128xf32>
      %165 = vector.broadcast %164 : vector<1x128xf32> to vector<32x128xf32>
      %166 = arith.addf %163, %165 : vector<32x128xf32>
      %167 = vector.shape_cast %166 : vector<32x128xf32> to vector<2x16x128xf32>
      %c0_71 = arith.constant 0 : index
      %c0_72 = arith.constant 0 : index
      %168 = vector.load %arg5[%c0_71, %c0_72] : memref<16x128xf32, #tpu.memory_space<vmem>>, vector<16x128xf32>
      %169 = vector.shape_cast %168 : vector<16x128xf32> to vector<1x16x128xf32>
      %170 = vector.broadcast %169 : vector<1x16x128xf32> to vector<2x16x128xf32>
      %171 = arith.addf %167, %170 : vector<2x16x128xf32>
      %172 = vector.shape_cast %171 : vector<2x16x128xf32> to vector<32x128xf32>
      %c0_73 = arith.constant 0 : index
      %c0_74 = arith.constant 0 : index
      %173 = vector.load %arg21[%c0_73, %c0_74] : memref<32x128xf32, #tpu.memory_space<vmem>>, vector<32x128xf32>
      tpu.vector_store %arg21[%c0_73, %c0_74], %172 {strides = array<i32>} : memref<32x128xf32, #tpu.memory_space<vmem>>, vector<32x128xf32>,
    } else {
    }
    %c0 = arith.constant 0 : index
    %c0_1 = arith.constant 0 : index
    %3 = vector.load %arg21[%c0, %c0_1] : memref<32x128xf32, #tpu.memory_space<vmem>>, vector<32x128xf32>
    %c0_2 = arith.constant 0 : index
    %c0_3 = arith.constant 0 : index
    %c0_4 = arith.constant 0 : index
    %4 = vector.load %arg6[%c0_2, %c0_3, %c0_4] : memref<1x1x128xf32, #tpu.memory_space<vmem>>, vector<1x1x128xf32>
    %5 = vector.shape_cast %4 : vector<1x1x128xf32> to vector<1x128xf32>
    %c0_5 = arith.constant 0 : index
    %c0_6 = arith.constant 0 : index
    %c0_7 = arith.constant 0 : index
    %6 = vector.load %arg7[%c0_5, %c0_6, %c0_7] : memref<1x1x128xf32, #tpu.memory_space<vmem>>, vector<1x1x128xf32>
    %7 = vector.shape_cast %6 : vector<1x1x128xf32> to vector<1x128xf32>
    %cst = arith.constant dense<0.000000e+00> : vector<32xf32>
    %8 = vector.multi_reduction <add>, %3, %cst [1] : vector<32x128xf32> to vector<32xf32>
    %9 = vector.shape_cast %8 : vector<32xf32> to vector<32x1xf32>
    %cst_8 = arith.constant 1.280000e+02 : f32
    %10 = vector.broadcast %cst_8 : f32 to vector<32x1xf32>
    %11 = arith.divf %9, %10 : vector<32x1xf32>
    %12 = vector.broadcast %11 : vector<32x1xf32> to vector<32x128xf32>
    %13 = arith.subf %3, %12 : vector<32x128xf32>
    %14 = arith.mulf %13, %13 : vector<32x128xf32>
    %cst_9 = arith.constant dense<0.000000e+00> : vector<32xf32>
    %15 = vector.multi_reduction <add>, %14, %cst_9 [1] : vector<32x128xf32> to vector<32xf32>
    %16 = vector.shape_cast %15 : vector<32xf32> to vector<32x1xf32>
    %cst_10 = arith.constant 1.280000e+02 : f32
    %17 = vector.broadcast %cst_10 : f32 to vector<32x1xf32>
    %18 = arith.divf %16, %17 : vector<32x1xf32>
    %cst_11 = arith.constant 9.99999997E-7 : f32
    %19 = vector.broadcast %cst_11 : f32 to vector<32x1xf32>
    %20 = arith.addf %18, %19 : vector<32x1xf32>
    %21 = math.rsqrt %20 : vector<32x1xf32>
    %22 = vector.broadcast %21 : vector<32x1xf32> to vector<32x128xf32>
    %23 = arith.mulf %13, %22 : vector<32x128xf32>
    %24 = vector.broadcast %5 : vector<1x128xf32> to vector<32x128xf32>
    %25 = arith.mulf %23, %24 : vector<32x128xf32>
    %26 = vector.broadcast %7 : vector<1x128xf32> to vector<32x128xf32>
    %27 = arith.addf %25, %26 : vector<32x128xf32>
    %28 = arith.truncf %27 : vector<32x128xf32> to vector<32x128xbf16>
    %c0_12 = arith.constant 0 : index
    %c0_13 = arith.constant 0 : index
    %c0_14 = arith.constant 0 : index
    %29 = vector.load %arg8[%c0_12, %c0_13, %c0_14] : memref<1x128x384xbf16, #tpu.memory_space<vmem>>, vector<1x128x384xbf16>
    %30 = vector.shape_cast %29 : vector<1x128x384xbf16> to vector<128x384xbf16>
    %cst_15 = arith.constant dense<0.000000e+00> : vector<32x384xf32>
    %31 = tpu.matmul %28, %30, %cst_15 {dimension_numbers = #tpu.dot_dimension_numbers<[1], [0], [0], [1], [0, 0, 1, 1], [], []>} : vector<32x128xbf16>, vector<128x384xbf16>, vector<32x384xf32> -> vector<32x384xf32>
    %c0_16 = arith.constant 0 : index
    %c0_17 = arith.constant 0 : index
    %c0_18 = arith.constant 0 : index
    %32 = vector.load %arg9[%c0_16, %c0_17, %c0_18] : memref<1x1x384xf32, #tpu.memory_space<vmem>>, vector<1x1x384xf32>
    %33 = vector.shape_cast %32 : vector<1x1x384xf32> to vector<1x384xf32>
    %34 = vector.broadcast %33 : vector<1x384xf32> to vector<32x384xf32>
    %35 = arith.addf %31, %34 : vector<32x384xf32>
    %36 = vector.extract_strided_slice %35 {offsets = [0, 0], sizes = [32, 128], strides = [1, 1]} : vector<32x384xf32> to vector<32x128xf32>
    %cst_19 = arith.constant 0.176776692 : f32
    %37 = vector.broadcast %cst_19 : f32 to vector<32x128xf32>
    %38 = arith.mulf %36, %37 : vector<32x128xf32>
    %39 = arith.truncf %38 : vector<32x128xf32> to vector<32x128xbf16>
    %40 = vector.extract_strided_slice %35 {offsets = [0, 128], sizes = [32, 128], strides = [1, 1]} : vector<32x384xf32> to vector<32x128xf32>
    %41 = arith.truncf %40 : vector<32x128xf32> to vector<32x128xbf16>
    %42 = vector.extract_strided_slice %35 {offsets = [0, 256], sizes = [32, 128], strides = [1, 1]} : vector<32x384xf32> to vector<32x128xf32>
    %43 = arith.truncf %42 : vector<32x128xf32> to vector<32x128xbf16>
    %44 = vector.extract_strided_slice %39 {offsets = [0, 0], sizes = [32, 32], strides = [1, 1]} : vector<32x128xbf16> to vector<32x32xbf16>
    %45 = vector.shape_cast %44 : vector<32x32xbf16> to vector<2x16x32xbf16>
    %46 = vector.extract_strided_slice %41 {offsets = [0, 0], sizes = [32, 32], strides = [1, 1]} : vector<32x128xbf16> to vector<32x32xbf16>
    %47 = vector.shape_cast %46 : vector<32x32xbf16> to vector<2x16x32xbf16>
    %48 = vector.extract_strided_slice %43 {offsets = [0, 0], sizes = [32, 32], strides = [1, 1]} : vector<32x128xbf16> to vector<32x32xbf16>
    %49 = vector.shape_cast %48 : vector<32x32xbf16> to vector<2x16x32xbf16>
    %50 = vector.extract_strided_slice %39 {offsets = [0, 32], sizes = [32, 32], strides = [1, 1]} : vector<32x128xbf16> to vector<32x32xbf16>
    %51 = vector.shape_cast %50 : vector<32x32xbf16> to vector<2x16x32xbf16>
    %52 = vector.extract_strided_slice %41 {offsets = [0, 32], sizes = [32, 32], strides = [1, 1]} : vector<32x128xbf16> to vector<32x32xbf16>
    %53 = vector.shape_cast %52 : vector<32x32xbf16> to vector<2x16x32xbf16>
    %54 = vector.extract_strided_slice %43 {offsets = [0, 32], sizes = [32, 32], strides = [1, 1]} : vector<32x128xbf16> to vector<32x32xbf16>
    %55 = vector.shape_cast %54 : vector<32x32xbf16> to vector<2x16x32xbf16>
    %56 = vector.extract_strided_slice %39 {offsets = [0, 64], sizes = [32, 32], strides = [1, 1]} : vector<32x128xbf16> to vector<32x32xbf16>
    %57 = vector.shape_cast %56 : vector<32x32xbf16> to vector<2x16x32xbf16>
    %58 = vector.extract_strided_slice %41 {offsets = [0, 64], sizes = [32, 32], strides = [1, 1]} : vector<32x128xbf16> to vector<32x32xbf16>
    %59 = vector.shape_cast %58 : vector<32x32xbf16> to vector<2x16x32xbf16>
    %60 = vector.extract_strided_slice %43 {offsets = [0, 64], sizes = [32, 32], strides = [1, 1]} : vector<32x128xbf16> to vector<32x32xbf16>
    %61 = vector.shape_cast %60 : vector<32x32xbf16> to vector<2x16x32xbf16>
    %62 = vector.extract_strided_slice %39 {offsets = [0, 96], sizes = [32, 32], strides = [1, 1]} : vector<32x128xbf16> to vector<32x32xbf16>
    %63 = vector.shape_cast %62 : vector<32x32xbf16> to vector<2x16x32xbf16>
    %64 = vector.extract_strided_slice %41 {offsets = [0, 96], sizes = [32, 32], strides = [1, 1]} : vector<32x128xbf16> to vector<32x32xbf16>
    %65 = vector.shape_cast %64 : vector<32x32xbf16> to vector<2x16x32xbf16>
    %66 = vector.extract_strided_slice %43 {offsets = [0, 96], sizes = [32, 32], strides = [1, 1]} : vector<32x128xbf16> to vector<32x32xbf16>
    %67 = vector.shape_cast %66 : vector<32x32xbf16> to vector<2x16x32xbf16>
    %68 = tpu.concatenate %45, %51, %57, %63 in 0 : vector<2x16x32xbf16>, vector<2x16x32xbf16>, vector<2x16x32xbf16>, vector<2x16x32xbf16> -> vector<8x16x32xbf16>
    %69 = tpu.concatenate %47, %53, %59, %65 in 0 : vector<2x16x32xbf16>, vector<2x16x32xbf16>, vector<2x16x32xbf16>, vector<2x16x32xbf16> -> vector<8x16x32xbf16>
    %70 = tpu.concatenate %49, %55, %61, %67 in 0 : vector<2x16x32xbf16>, vector<2x16x32xbf16>, vector<2x16x32xbf16>, vector<2x16x32xbf16> -> vector<8x16x32xbf16>
    "tpu.trace_start"() <{level = 10 : i32, message = "bqd,bkd->bqk"}> : () -> ()
    %cst_20 = arith.constant dense<0.000000e+00> : vector<8x16x16xf32>
    %71 = tpu.matmul %68, %69, %cst_20 {dimension_numbers = #tpu.dot_dimension_numbers<[2], [2], [1], [1], [0, 0, 0, 1, 1, 1], [0], [0]>} : vector<8x16x32xbf16>, vector<8x16x32xbf16>, vector<8x16x16xf32> -> vector<8x16x16xf32>
    "tpu.trace_stop"() : () -> ()
    %cst_21 = arith.constant dense<0xFF800000> : vector<8x16xf32>
    %72 = vector.multi_reduction <maximumf>, %71, %cst_21 [2] : vector<8x16x16xf32> to vector<8x16xf32>
    %73 = vector.shape_cast %72 : vector<8x16xf32> to vector<8x16x1xf32>
    %74 = vector.broadcast %73 : vector<8x16x1xf32> to vector<8x16x16xf32>
    %75 = arith.subf %71, %74 : vector<8x16x16xf32>
    %76 = math.exp %75 : vector<8x16x16xf32>
    %cst_22 = arith.constant dense<0.000000e+00> : vector<8x16xf32>
    %77 = vector.multi_reduction <add>, %76, %cst_22 [2] : vector<8x16x16xf32> to vector<8x16xf32>
    %78 = vector.shape_cast %77 : vector<8x16xf32> to vector<8x16x1xf32>
    %79 = tpu.reciprocal %78 {approx = true} : vector<8x16x1xf32> -> vector<8x16x1xf32>
    %80 = vector.broadcast %79 : vector<8x16x1xf32> to vector<8x16x16xf32>
    %81 = arith.mulf %76, %80 : vector<8x16x16xf32>
    %82 = arith.truncf %81 : vector<8x16x16xf32> to vector<8x16x16xbf16>
    "tpu.trace_start"() <{level = 10 : i32, message = "bqk,bkd->bqd"}> : () -> ()
    %cst_23 = arith.constant dense<0.000000e+00> : vector<8x16x32xf32>
    %83 = tpu.matmul %82, %70, %cst_23 {dimension_numbers = #tpu.dot_dimension_numbers<[2], [1], [1], [2], [0, 0, 0, 1, 1, 2], [0], [0]>} : vector<8x16x16xbf16>, vector<8x16x32xbf16>, vector<8x16x32xf32> -> vector<8x16x32xf32>
    "tpu.trace_stop"() : () -> ()
    %84 = arith.truncf %83 : vector<8x16x32xf32> to vector<8x16x32xbf16>
    %85 = vector.extract_strided_slice %84 {offsets = [0, 0, 0], sizes = [2, 16, 32], strides = [1, 1, 1]} : vector<8x16x32xbf16> to vector<2x16x32xbf16>
    %86 = vector.shape_cast %85 : vector<2x16x32xbf16> to vector<32x32xbf16>
    %87 = vector.extract_strided_slice %84 {offsets = [2, 0, 0], sizes = [2, 16, 32], strides = [1, 1, 1]} : vector<8x16x32xbf16> to vector<2x16x32xbf16>
    %88 = vector.shape_cast %87 : vector<2x16x32xbf16> to vector<32x32xbf16>
    %89 = vector.extract_strided_slice %84 {offsets = [4, 0, 0], sizes = [2, 16, 32], strides = [1, 1, 1]} : vector<8x16x32xbf16> to vector<2x16x32xbf16>
    %90 = vector.shape_cast %89 : vector<2x16x32xbf16> to vector<32x32xbf16>
    %91 = vector.extract_strided_slice %84 {offsets = [6, 0, 0], sizes = [2, 16, 32], strides = [1, 1, 1]} : vector<8x16x32xbf16> to vector<2x16x32xbf16>
    %92 = vector.shape_cast %91 : vector<2x16x32xbf16> to vector<32x32xbf16>
    %93 = tpu.concatenate %86, %88, %90, %92 in 1 : vector<32x32xbf16>, vector<32x32xbf16>, vector<32x32xbf16>, vector<32x32xbf16> -> vector<32x128xbf16>
    %c0_24 = arith.constant 0 : index
    %c0_25 = arith.constant 0 : index
    %c0_26 = arith.constant 0 : index
    %94 = vector.load %arg10[%c0_24, %c0_25, %c0_26] : memref<1x128x128xbf16, #tpu.memory_space<vmem>>, vector<1x128x128xbf16>
    %95 = vector.shape_cast %94 : vector<1x128x128xbf16> to vector<128x128xbf16>
    %cst_27 = arith.constant dense<0.000000e+00> : vector<32x128xf32>
    %96 = tpu.matmul %93, %95, %cst_27 {dimension_numbers = #tpu.dot_dimension_numbers<[1], [0], [0], [1], [0, 0, 1, 1], [], []>} : vector<32x128xbf16>, vector<128x128xbf16>, vector<32x128xf32> -> vector<32x128xf32>
    %97 = arith.addf %3, %96 : vector<32x128xf32>
    %c0_28 = arith.constant 0 : index
    %c0_29 = arith.constant 0 : index
    %c0_30 = arith.constant 0 : index
    %98 = vector.load %arg11[%c0_28, %c0_29, %c0_30] : memref<1x1x128xf32, #tpu.memory_space<vmem>>, vector<1x1x128xf32>
    %99 = vector.shape_cast %98 : vector<1x1x128xf32> to vector<1x128xf32>
    %100 = vector.broadcast %99 : vector<1x128xf32> to vector<32x128xf32>
    %101 = arith.addf %97, %100 : vector<32x128xf32>
    %c0_31 = arith.constant 0 : index
    %c0_32 = arith.constant 0 : index
    %c0_33 = arith.constant 0 : index
    %102 = vector.load %arg12[%c0_31, %c0_32, %c0_33] : memref<1x1x128xf32, #tpu.memory_space<vmem>>, vector<1x1x128xf32>
    %103 = vector.shape_cast %102 : vector<1x1x128xf32> to vector<1x128xf32>
    %c0_34 = arith.constant 0 : index
    %c0_35 = arith.constant 0 : index
    %c0_36 = arith.constant 0 : index
    %104 = vector.load %arg13[%c0_34, %c0_35, %c0_36] : memref<1x1x128xf32, #tpu.memory_space<vmem>>, vector<1x1x128xf32>
    %105 = vector.shape_cast %104 : vector<1x1x128xf32> to vector<1x128xf32>
    %cst_37 = arith.constant dense<0.000000e+00> : vector<32xf32>
    %106 = vector.multi_reduction <add>, %101, %cst_37 [1] : vector<32x128xf32> to vector<32xf32>
    %107 = vector.shape_cast %106 : vector<32xf32> to vector<32x1xf32>
    %cst_38 = arith.constant 1.280000e+02 : f32
    %108 = vector.broadcast %cst_38 : f32 to vector<32x1xf32>
    %109 = arith.divf %107, %108 : vector<32x1xf32>
    %110 = vector.broadcast %109 : vector<32x1xf32> to vector<32x128xf32>
    %111 = arith.subf %101, %110 : vector<32x128xf32>
    %112 = arith.mulf %111, %111 : vector<32x128xf32>
    %cst_39 = arith.constant dense<0.000000e+00> : vector<32xf32>
    %113 = vector.multi_reduction <add>, %112, %cst_39 [1] : vector<32x128xf32> to vector<32xf32>
    %114 = vector.shape_cast %113 : vector<32xf32> to vector<32x1xf32>
    %cst_40 = arith.constant 1.280000e+02 : f32
    %115 = vector.broadcast %cst_40 : f32 to vector<32x1xf32>
    %116 = arith.divf %114, %115 : vector<32x1xf32>
    %cst_41 = arith.constant 9.99999997E-7 : f32
    %117 = vector.broadcast %cst_41 : f32 to vector<32x1xf32>
    %118 = arith.addf %116, %117 : vector<32x1xf32>
    %119 = math.rsqrt %118 : vector<32x1xf32>
    %120 = vector.broadcast %119 : vector<32x1xf32> to vector<32x128xf32>
    %121 = arith.mulf %111, %120 : vector<32x128xf32>
    %122 = vector.broadcast %103 : vector<1x128xf32> to vector<32x128xf32>
    %123 = arith.mulf %121, %122 : vector<32x128xf32>
    %124 = vector.broadcast %105 : vector<1x128xf32> to vector<32x128xf32>
    %125 = arith.addf %123, %124 : vector<32x128xf32>
    %126 = arith.truncf %125 : vector<32x128xf32> to vector<32x128xbf16>
    %c0_42 = arith.constant 0 : index
    %c0_43 = arith.constant 0 : index
    %c0_44 = arith.constant 0 : index
    %127 = vector.load %arg14[%c0_42, %c0_43, %c0_44] : memref<1x128x512xbf16, #tpu.memory_space<vmem>>, vector<1x128x512xbf16>
    %128 = vector.shape_cast %127 : vector<1x128x512xbf16> to vector<128x512xbf16>
    %cst_45 = arith.constant dense<0.000000e+00> : vector<32x512xf32>
    %129 = tpu.matmul %126, %128, %cst_45 {dimension_numbers = #tpu.dot_dimension_numbers<[1], [0], [0], [1], [0, 0, 1, 1], [], []>} : vector<32x128xbf16>, vector<128x512xbf16>, vector<32x512xf32> -> vector<32x512xf32>
    %c0_46 = arith.constant 0 : index
    %c0_47 = arith.constant 0 : index
    %c0_48 = arith.constant 0 : index
    %130 = vector.load %arg15[%c0_46, %c0_47, %c0_48] : memref<1x1x512xf32, #tpu.memory_space<vmem>>, vector<1x1x512xf32>
    %131 = vector.shape_cast %130 : vector<1x1x512xf32> to vector<1x512xf32>
    %132 = vector.broadcast %131 : vector<1x512xf32> to vector<32x512xf32>
    %133 = arith.addf %129, %132 : vector<32x512xf32>
    %cst_49 = arith.constant 5.000000e-01 : f32
    %134 = vector.broadcast %cst_49 : f32 to vector<32x512xf32>
    %135 = arith.mulf %134, %133 : vector<32x512xf32>
    %cst_50 = arith.constant 4.471500e-02 : f32
    %136 = vector.broadcast %cst_50 : f32 to vector<32x512xf32>
    %137 = arith.mulf %136, %133 : vector<32x512xf32>
    %138 = arith.mulf %137, %133 : vector<32x512xf32>
    %139 = arith.mulf %138, %133 : vector<32x512xf32>
    %140 = arith.addf %133, %139 : vector<32x512xf32>
    %cst_51 = arith.constant 0.797884583 : f32
    %141 = vector.broadcast %cst_51 : f32 to vector<32x512xf32>
    %142 = arith.mulf %141, %140 : vector<32x512xf32>
    %143 = math.tanh %142 : vector<32x512xf32>
    %cst_52 = arith.constant 1.000000e+00 : f32
    %144 = vector.broadcast %cst_52 : f32 to vector<32x512xf32>
    %145 = arith.addf %144, %143 : vector<32x512xf32>
    %146 = arith.mulf %135, %145 : vector<32x512xf32>
    %147 = arith.truncf %146 : vector<32x512xf32> to vector<32x512xbf16>
    %c0_53 = arith.constant 0 : index
    %c0_54 = arith.constant 0 : index
    %c0_55 = arith.constant 0 : index
    %148 = vector.load %arg16[%c0_53, %c0_54, %c0_55] : memref<1x512x128xbf16, #tpu.memory_space<vmem>>, vector<1x512x128xbf16>
    %149 = vector.shape_cast %148 : vector<1x512x128xbf16> to vector<512x128xbf16>
    %cst_56 = arith.constant dense<0.000000e+00> : vector<32x128xf32>
    %150 = tpu.matmul %147, %149, %cst_56 {dimension_numbers = #tpu.dot_dimension_numbers<[1], [0], [0], [1], [0, 0, 1, 1], [], []>} : vector<32x512xbf16>, vector<512x128xbf16>, vector<32x128xf32> -> vector<32x128xf32>
    %c0_57 = arith.constant 0 : index
    %c0_58 = arith.constant 0 : index
    %c0_59 = arith.constant 0 : index
    %151 = vector.load %arg17[%c0_57, %c0_58, %c0_59] : memref<1x1x128xf32, #tpu.memory_space<vmem>>, vector<1x1x128xf32>
    %152 = vector.shape_cast %151 : vector<1x1x128xf32> to vector<1x128xf32>
    %153 = vector.broadcast %152 : vector<1x128xf32> to vector<32x128xf32>
    %154 = arith.addf %150, %153 : vector<32x128xf32>
    %155 = arith.addf %101, %154 : vector<32x128xf32>
    %c0_60 = arith.constant 0 : index
    %c0_61 = arith.constant 0 : index
    %156 = vector.load %arg21[%c0_60, %c0_61] : memref<32x128xf32, #tpu.memory_space<vmem>>, vector<32x128xf32>
    tpu.vector_store %arg21[%c0_60, %c0_61], %155 {strides = array<i32>} : memref<32x128xf32, #tpu.memory_space<vmem>>, vector<32x128xf32>,
    %c1_i32 = arith.constant 1 : i32
    %157 = arith.cmpi eq, %arg1, %c1_i32 : i32
    %158 = arith.extui %157 : i1 to i32
    %c0_i32_62 = arith.constant 0 : i32
    %159 = arith.cmpi ne, %158, %c0_i32_62 : i32
    scf.if %159 {
      %c0_63 = arith.constant 0 : index
      %c0_64 = arith.constant 0 : index
      %160 = vector.load %arg18[%c0_63, %c0_64] : memref<1x128xf32, #tpu.memory_space<vmem>>, vector<1x128xf32>
      %c0_65 = arith.constant 0 : index
      %c0_66 = arith.constant 0 : index
      %161 = vector.load %arg19[%c0_65, %c0_66] : memref<1x128xf32, #tpu.memory_space<vmem>>, vector<1x128xf32>
      %cst_67 = arith.constant dense<0.000000e+00> : vector<32xf32>
      %162 = vector.multi_reduction <add>, %155, %cst_67 [1] : vector<32x128xf32> to vector<32xf32>
      %163 = vector.shape_cast %162 : vector<32xf32> to vector<32x1xf32>
      %cst_68 = arith.constant 1.280000e+02 : f32
      %164 = vector.broadcast %cst_68 : f32 to vector<32x1xf32>
      %165 = arith.divf %163, %164 : vector<32x1xf32>
      %166 = vector.broadcast %165 : vector<32x1xf32> to vector<32x128xf32>
      %167 = arith.subf %155, %166 : vector<32x128xf32>
      %168 = arith.mulf %167, %167 : vector<32x128xf32>
      %cst_69 = arith.constant dense<0.000000e+00> : vector<32xf32>
      %169 = vector.multi_reduction <add>, %168, %cst_69 [1] : vector<32x128xf32> to vector<32xf32>
      %170 = vector.shape_cast %169 : vector<32xf32> to vector<32x1xf32>
      %cst_70 = arith.constant 1.280000e+02 : f32
      %171 = vector.broadcast %cst_70 : f32 to vector<32x1xf32>
      %172 = arith.divf %170, %171 : vector<32x1xf32>
      %cst_71 = arith.constant 9.99999997E-7 : f32
      %173 = vector.broadcast %cst_71 : f32 to vector<32x1xf32>
      %174 = arith.addf %172, %173 : vector<32x1xf32>
      %175 = math.rsqrt %174 : vector<32x1xf32>
      %176 = vector.broadcast %175 : vector<32x1xf32> to vector<32x128xf32>
      %177 = arith.mulf %167, %176 : vector<32x128xf32>
      %178 = vector.broadcast %160 : vector<1x128xf32> to vector<32x128xf32>
      %179 = arith.mulf %177, %178 : vector<32x128xf32>
      %180 = vector.broadcast %161 : vector<1x128xf32> to vector<32x128xf32>
      %181 = arith.addf %179, %180 : vector<32x128xf32>
      %c0_72 = arith.constant 0 : index
      %c0_73 = arith.constant 0 : index
      %c0_74 = arith.constant 0 : index
      %182 = vector.load %arg20[%c0_72, %c0_73, %c0_74] : memref<1x32x128xf32, #tpu.memory_space<vmem>>, vector<1x32x128xf32>
      %183 = vector.shape_cast %182 : vector<1x32x128xf32> to vector<32x128xf32>
      %184 = vector.shape_cast %181 : vector<32x128xf32> to vector<1x32x128xf32>
      tpu.vector_store %arg20[%c0_72, %c0_73, %c0_74], %184 {strides = array<i32>} : memref<1x32x128xf32, #tpu.memory_space<vmem>>, vector<1x32x128xf32>,
    } else {
    }
    return
  }
  func.func @transform_0(%arg0: i32, %arg1: i32) -> (i32, i32, i32) {
    %c0_i32 = arith.constant 0 : i32
    %c0_i32_0 = arith.constant 0 : i32
    %c0_i32_1 = arith.constant 0 : i32
    return %arg0, %c0_i32, %c0_i32_0 : i32, i32, i32
  }
  func.func @transform_1(%arg0: i32, %arg1: i32) -> (i32, i32) {
    %c0_i32 = arith.constant 0 : i32
    %c0_i32_0 = arith.constant 0 : i32
    %c0_i32_1 = arith.constant 0 : i32
    return %c0_i32, %c0_i32_0 : i32, i32
  }
  func.func @transform_2(%arg0: i32, %arg1: i32) -> (i32, i32) {
    %c0_i32 = arith.constant 0 : i32
    %c0_i32_0 = arith.constant 0 : i32
    %c0_i32_1 = arith.constant 0 : i32
    return %c0_i32, %c0_i32_0 : i32, i32
  }
  func.func @transform_3(%arg0: i32, %arg1: i32) -> (i32, i32) {
    %c0_i32 = arith.constant 0 : i32
    %c0_i32_0 = arith.constant 0 : i32
    %c0_i32_1 = arith.constant 0 : i32
    return %c0_i32, %c0_i32_0 : i32, i32
  }
  func.func @transform_4(%arg0: i32, %arg1: i32) -> (i32, i32, i32) {
    %c0_i32 = arith.constant 0 : i32
    %c0_i32_0 = arith.constant 0 : i32
    %c0_i32_1 = arith.constant 0 : i32
    return %arg1, %c0_i32, %c0_i32_0 : i32, i32, i32
  }
  func.func @transform_5(%arg0: i32, %arg1: i32) -> (i32, i32, i32) {
    %c0_i32 = arith.constant 0 : i32
    %c0_i32_0 = arith.constant 0 : i32
    %c0_i32_1 = arith.constant 0 : i32
    return %arg1, %c0_i32, %c0_i32_0 : i32, i32, i32
  }
  func.func @transform_6(%arg0: i32, %arg1: i32) -> (i32, i32, i32) {
    %c0_i32 = arith.constant 0 : i32
    %c0_i32_0 = arith.constant 0 : i32
    %c0_i32_1 = arith.constant 0 : i32
    return %arg1, %c0_i32, %c0_i32_0 : i32, i32, i32
  }
  func.func @transform_7(%arg0: i32, %arg1: i32) -> (i32, i32, i32) {
    %c0_i32 = arith.constant 0 : i32
    %c0_i32_0 = arith.constant 0 : i32
    %c0_i32_1 = arith.constant 0 : i32
    return %arg1, %c0_i32, %c0_i32_0 : i32, i32, i32
  }
  func.func @transform_8(%arg0: i32, %arg1: i32) -> (i32, i32, i32) {
    %c0_i32 = arith.constant 0 : i32
    %c0_i32_0 = arith.constant 0 : i32
    %c0_i32_1 = arith.constant 0 : i32
    return %arg1, %c0_i32, %c0_i32_0 : i32, i32, i32
  }
  func.func @transform_9(%arg0: i32, %arg1: i32) -> (i32, i32, i32) {
    %c0_i32 = arith.constant 0 : i32
    %c0_i32_0 = arith.constant 0 : i32
    %c0_i32_1 = arith.constant 0 : i32
    return %arg1, %c0_i32, %c0_i32_0 : i32, i32, i32
  }
  func.func @transform_10(%arg0: i32, %arg1: i32) -> (i32, i32, i32) {
    %c0_i32 = arith.constant 0 : i32
    %c0_i32_0 = arith.constant 0 : i32
    %c0_i32_1 = arith.constant 0 : i32
    return %arg1, %c0_i32, %c0_i32_0 : i32, i32, i32
  }
  func.func @transform_11(%arg0: i32, %arg1: i32) -> (i32, i32, i32) {
    %c0_i32 = arith.constant 0 : i32
    %c0_i32_0 = arith.constant 0 : i32
    %c0_i32_1 = arith.constant 0 : i32
    return %arg1, %c0_i32, %c0_i32_0 : i32, i32, i32
  }
  func.func @transform_12(%arg0: i32, %arg1: i32) -> (i32, i32, i32) {
    %c0_i32 = arith.constant 0 : i32
    %c0_i32_0 = arith.constant 0 : i32
    %c0_i32_1 = arith.constant 0 : i32
    return %arg1, %c0_i32, %c0_i32_0 : i32, i32, i32
  }
  func.func @transform_13(%arg0: i32, %arg1: i32) -> (i32, i32, i32) {
    %c0_i32 = arith.constant 0 : i32
    %c0_i32_0 = arith.constant 0 : i32
    %c0_i32_1 = arith.constant 0 : i32
    return %arg1, %c0_i32, %c0_i32_0 : i32, i32, i32
  }
  func.func @transform_14(%arg0: i32, %arg1: i32) -> (i32, i32, i32) {
    %c0_i32 = arith.constant 0 : i32
    %c0_i32_0 = arith.constant 0 : i32
    %c0_i32_1 = arith.constant 0 : i32
    return %arg1, %c0_i32, %c0_i32_0 : i32, i32, i32
  }
  func.func @transform_15(%arg0: i32, %arg1: i32) -> (i32, i32, i32) {
    %c0_i32 = arith.constant 0 : i32
    %c0_i32_0 = arith.constant 0 : i32
    %c0_i32_1 = arith.constant 0 : i32
    return %arg1, %c0_i32, %c0_i32_0 : i32, i32, i32
  }
  func.func @transform_16(%arg0: i32, %arg1: i32) -> (i32, i32) {
    %c0_i32 = arith.constant 0 : i32
    %c0_i32_0 = arith.constant 0 : i32
    %c0_i32_1 = arith.constant 0 : i32
    return %c0_i32, %c0_i32_0 : i32, i32
  }
  func.func @transform_17(%arg0: i32, %arg1: i32) -> (i32, i32) {
    %c0_i32 = arith.constant 0 : i32
    %c0_i32_0 = arith.constant 0 : i32
    %c0_i32_1 = arith.constant 0 : i32
    return %c0_i32, %c0_i32_0 : i32, i32
  }
  func.func @transform_18(%arg0: i32, %arg1: i32) -> (i32, i32, i32) {
    %c0_i32 = arith.constant 0 : i32
    %c0_i32_0 = arith.constant 0 : i32
    %c0_i32_1 = arith.constant 0 : i32
    return %arg0, %c0_i32, %c0_i32_0 : i32, i32, i32
  }
}

</mosaic_0001>

<llo_original>
// kernel: encoder_forward.1
$region0: #{encoder_forward.1}
  #allocation0 [shape = 'u32[]', space=smem, size = 0x4, offset = 0x4, fixed_abs, tag = 'smem constant byte address 0x4 - core index']
  #allocation1 [shape = 'u32[144,128]{1,0:T(1,128)}', space=vmem, size = 0x12000, scoped, tag = 'internal scratch']
  #allocation2 [shape = 'f32[32,128]{1,0:T(8,128)}', space=vmem, size = 0x4000, scoped, tag = 'scratch operand']
  %s0 = inlined_call_operand.vmem [shape: bf16[2,32,768], index: 0, kind: input, shape index: {}]
  %s1 = inlined_call_operand.vmem [shape: bf16[768,128], index: 1, kind: input, shape index: {}]
  %s2 = inlined_call_operand.vmem [shape: f32[1,128], index: 2, kind: input, shape index: {}]
  %s3 = inlined_call_operand.vmem [shape: f32[16,128], index: 3, kind: input, shape index: {}]
  %s4 = inlined_call_operand.vmem [shape: f32[2,1,128], index: 4, kind: input, shape index: {}]
  %s5 = inlined_call_operand.vmem [shape: f32[2,1,128], index: 5, kind: input, shape index: {}]
  %s6 = inlined_call_operand.vmem [shape: bf16[2,128,384], index: 6, kind: input, shape index: {}]
  %s7 = inlined_call_operand.vmem [shape: f32[2,1,384], index: 7, kind: input, shape index: {}]
  %s8 = inlined_call_operand.vmem [shape: bf16[2,128,128], index: 8, kind: input, shape index: {}]
  %s9 = inlined_call_operand.vmem [shape: f32[2,1,128], index: 9, kind: input, shape index: {}]
  %s10 = inlined_call_operand.vmem [shape: f32[2,1,128], index: 10, kind: input, shape index: {}]
  %s11 = inlined_call_operand.vmem [shape: f32[2,1,128], index: 11, kind: input, shape index: {}]
  %s12 = inlined_call_operand.vmem [shape: bf16[2,128,512], index: 12, kind: input, shape index: {}]
  %s13 = inlined_call_operand.vmem [shape: f32[2,1,512], index: 13, kind: input, shape index: {}]
  %s14 = inlined_call_operand.vmem [shape: bf16[2,512,128], index: 14, kind: input, shape index: {}]
  %s15 = inlined_call_operand.vmem [shape: f32[2,1,128], index: 15, kind: input, shape index: {}]
  %s16 = inlined_call_operand.vmem [shape: f32[1,128], index: 16, kind: input, shape index: {}]
  %s17 = inlined_call_operand.vmem [shape: f32[1,128], index: 17, kind: input, shape index: {}]
  %s18 = inlined_call_operand.hbm [shape: f32[2,32,128], index: 18, kind: output, shape index: {}]
  %s19 = sld [smem:[#allocation0]]
  $region113: #{encoder_forward.1} parent=0
    _
  %s21 = ssub.s32 1, %s19
  %s22 = scalar_select 0, %s21, %s19
  $region1: #{encoder_forward.1} parent=0
    #allocation3 [shape = 'u8[32768]{0}', space=vmem, size = 0x8000, scoped, tag = 'output window, operand 0']
    #allocation4 [shape = 's32[2]{0}', space=sflag, size = 0x8, scoped, tag = 'scoped memory for encoder_forward.1']
    %23 = vsyncpa [#allocation4], 0
    %s24 = scalar_lea.sflag [#allocation4], 1
    %25 = vsyncpa %s24, 0
    loop: start=0, step=1, limit=6
    $region2: #{encoder_forward.1} parent=1 // loop_pre_header
      _
    $region3: #{encoder_forward.1} parent=1 // loop_header
      %s27 = sphi 0, %s31
      %p28 = scmp.ge.s32.totalorder %s27, 6
      %s34 = sphi 0, %s46
      %s35 = sphi 0, %s42
      %s36 = sphi 0, %s34
      %s37 = sphi 0, %s35
      %s38 = sphi 0, %s36
      %s39 = sphi 0, %s37
      %s49 = sphi 0, %s51
      %s52 = sphi 0, %s49
      %s53 = sphi 0, %s52
      %s69 = sphi 0, %s53
      %s73 = sphi 0, %s73
      %s75 = sphi 0, %s73
      %s76 = sphi 0, %s75
      %s90 = sphi 0, %s76
      %s94 = sphi 0, %s94
      %s96 = sphi 0, %s94
      %s97 = sphi 0, %s96
      %s111 = sphi 0, %s97
      %s115 = sphi 0, %s115
      %s117 = sphi 0, %s115
      %s118 = sphi 0, %s117
      %s132 = sphi 0, %s118
      %s138 = sphi 0, %s140
      %s141 = sphi 0, %s138
      %s142 = sphi 0, %s141
      %s158 = sphi 0, %s142
      %s164 = sphi 0, %s166
      %s167 = sphi 0, %s164
      %s168 = sphi 0, %s167
      %s184 = sphi 0, %s168
      %s190 = sphi 0, %s192
      %s193 = sphi 0, %s190
      %s194 = sphi 0, %s193
      %s210 = sphi 0, %s194
      %s216 = sphi 0, %s218
      %s219 = sphi 0, %s216
      %s220 = sphi 0, %s219
      %s236 = sphi 0, %s220
      %s242 = sphi 0, %s244
      %s245 = sphi 0, %s242
      %s246 = sphi 0, %s245
      %s262 = sphi 0, %s246
      %s268 = sphi 0, %s270
      %s271 = sphi 0, %s268
      %s272 = sphi 0, %s271
      %s288 = sphi 0, %s272
      %s294 = sphi 0, %s296
      %s297 = sphi 0, %s294
      %s298 = sphi 0, %s297
      %s314 = sphi 0, %s298
      %s320 = sphi 0, %s322
      %s323 = sphi 0, %s320
      %s324 = sphi 0, %s323
      %s340 = sphi 0, %s324
      %s346 = sphi 0, %s348
      %s349 = sphi 0, %s346
      %s350 = sphi 0, %s349
      %s366 = sphi 0, %s350
      %s372 = sphi 0, %s374
      %s375 = sphi 0, %s372
      %s376 = sphi 0, %s375
      %s392 = sphi 0, %s376
      %s398 = sphi 0, %s400
      %s401 = sphi 0, %s398
      %s402 = sphi 0, %s401
      %s418 = sphi 0, %s402
      %s424 = sphi 0, %s426
      %s427 = sphi 0, %s424
      %s428 = sphi 0, %s427
      %s444 = sphi 0, %s428
      %s448 = sphi 0, %s448
      %s450 = sphi 0, %s448
      %s451 = sphi 0, %s450
      %s465 = sphi 0, %s451
      %s469 = sphi 0, %s469
      %s471 = sphi 0, %s469
      %s472 = sphi 0, %s471
      %s486 = sphi 0, %s472
      %s492 = sphi 0, %s494
      %s495 = sphi 0, %s492
      %s496 = sphi 0, %s495
      %s512 = sphi 0, %s496
    $region4: #{encoder_forward.1} parent=1 // loop_header_branch
      %30 = sbr.rel (%p28) target = $region8
    $region5: #{encoder_forward.1} parent=1 // loop_body
      %s32 = ssub.s32 %s27, 1
      %s33 = ssub.s32 %s27, 2
      %s40 = sadd.s32 1, %s35
      %p41 = scmp.ge.s32.totalorder %s40, 2
      %s42 = scalar_select %p41, 0, %s40
      %s43 = sadd.s32 1, %s34
      %s44 = scalar_select %p41, %s43, %s34
      %p45 = scmp.ge.s32.totalorder %s44, 2
      %s46 = scalar_select %p45, 0, %s44
      %s47 = ssub.s32 %s34, %s46
      %p48 = scmp.eq.s32.totalorder %s47, 0
      %s50 = sadd.s32 %s49, 1
      %s51 = scalar_select %p48, %s49, %s50
      %p54 = pneg %p48
      %p55 = scmp.eq.s32.totalorder %s27, 3
      %p56 = por %p54, %p55
      %p57 = scmp.ne.s32.totalorder %s49, %s52
      %p58 = scmp.eq.s32.totalorder %s27, 0
      %p59 = por %p57, %p58
      %p60 = scmp.ne.s32.totalorder %s49, %s52
      %p61 = scmp.eq.s32.totalorder %s32, 3
      %p62 = por %p60, %p61
      %p63 = scmp.ne.s32.totalorder %s52, %s53
      %p64 = scmp.eq.s32.totalorder %s32, 0
      %p65 = por %p63, %p64
      %p66 = scmp.ne.s32.totalorder %s52, %s53
      %p67 = scmp.eq.s32.totalorder %s33, 3
      %p68 = por %p66, %p67
      %p70 = scmp.ne.s32.totalorder %s53, %s69
      %p71 = scmp.eq.s32.totalorder %s33, 0
      %p72 = por %p70, %p71
      %s74 = sadd.s32 %s73, 1
      %p77 = scmp.eq.s32.totalorder %s27, 3
      %p78 = scmp.ne.s32.totalorder %s73, %s75
      %p79 = scmp.eq.s32.totalorder %s27, 0
      %p80 = por %p78, %p79
      %p81 = scmp.ne.s32.totalorder %s73, %s75
      %p82 = scmp.eq.s32.totalorder %s32, 3
      %p83 = por %p81, %p82
      %p84 = scmp.ne.s32.totalorder %s75, %s76
      %p85 = scmp.eq.s32.totalorder %s32, 0
      %p86 = por %p84, %p85
      %p87 = scmp.ne.s32.totalorder %s75, %s76
      %p88 = scmp.eq.s32.totalorder %s33, 3
      %p89 = por %p87, %p88
      %p91 = scmp.ne.s32.totalorder %s76, %s90
      %p92 = scmp.eq.s32.totalorder %s33, 0
      %p93 = por %p91, %p92
      %s95 = sadd.s32 %s94, 1
      %p98 = scmp.eq.s32.totalorder %s27, 3
      %p99 = scmp.ne.s32.totalorder %s94, %s96
      %p100 = scmp.eq.s32.totalorder %s27, 0
      %p101 = por %p99, %p100
      %p102 = scmp.ne.s32.totalorder %s94, %s96
      %p103 = scmp.eq.s32.totalorder %s32, 3
      %p104 = por %p102, %p103
      %p105 = scmp.ne.s32.totalorder %s96, %s97
      %p106 = scmp.eq.s32.totalorder %s32, 0
      %p107 = por %p105, %p106
      %p108 = scmp.ne.s32.totalorder %s96, %s97
      %p109 = scmp.eq.s32.totalorder %s33, 3
      %p110 = por %p108, %p109
      %p112 = scmp.ne.s32.totalorder %s97, %s111
      %p113 = scmp.eq.s32.totalorder %s33, 0
      %p114 = por %p112, %p113
      %s116 = sadd.s32 %s115, 1
      %p119 = scmp.eq.s32.totalorder %s27, 3
      %p120 = scmp.ne.s32.totalorder %s115, %s117
      %p121 = scmp.eq.s32.totalorder %s27, 0
      %p122 = por %p120, %p121
      %p123 = scmp.ne.s32.totalorder %s115, %s117
      %p124 = scmp.eq.s32.totalorder %s32, 3
      %p125 = por %p123, %p124
      %p126 = scmp.ne.s32.totalorder %s117, %s118
      %p127 = scmp.eq.s32.totalorder %s32, 0
      %p128 = por %p126, %p127
      %p129 = scmp.ne.s32.totalorder %s117, %s118
      %p130 = scmp.eq.s32.totalorder %s33, 3
      %p131 = por %p129, %p130
      %p133 = scmp.ne.s32.totalorder %s118, %s132
      %p134 = scmp.eq.s32.totalorder %s33, 0
      %p135 = por %p133, %p134
      %s136 = ssub.s32 %s35, %s42
      %p137 = scmp.eq.s32.totalorder %s136, 0
      %s139 = sadd.s32 %s138, 1
      %s140 = scalar_select %p137, %s138, %s139
      %p143 = pneg %p137
      %p144 = scmp.eq.s32.totalorder %s27, 3
      %p145 = por %p143, %p144
      %p146 = scmp.ne.s32.totalorder %s138, %s141
      %p147 = scmp.eq.s32.totalorder %s27, 0
      %p148 = por %p146, %p147
      %p149 = scmp.ne.s32.totalorder %s138, %s141
      %p150 = scmp.eq.s32.totalorder %s32, 3
      %p151 = por %p149, %p150
      %p152 = scmp.ne.s32.totalorder %s141, %s142
      %p153 = scmp.eq.s32.totalorder %s32, 0
      %p154 = por %p152, %p153
      %p155 = scmp.ne.s32.totalorder %s141, %s142
      %p156 = scmp.eq.s32.totalorder %s33, 3
      %p157 = por %p155, %p156
      %p159 = scmp.ne.s32.totalorder %s142, %s158
      %p160 = scmp.eq.s32.totalorder %s33, 0
      %p161 = por %p159, %p160
      %s162 = ssub.s32 %s35, %s42
      %p163 = scmp.eq.s32.totalorder %s162, 0
      %s165 = sadd.s32 %s164, 1
      %s166 = scalar_select %p163, %s164, %s165
      %p169 = pneg %p163
      %p170 = scmp.eq.s32.totalorder %s27, 3
      %p171 = por %p169, %p170
      %p172 = scmp.ne.s32.totalorder %s164, %s167
      %p173 = scmp.eq.s32.totalorder %s27, 0
      %p174 = por %p172, %p173
      %p175 = scmp.ne.s32.totalorder %s164, %s167
      %p176 = scmp.eq.s32.totalorder %s32, 3
      %p177 = por %p175, %p176
      %p178 = scmp.ne.s32.totalorder %s167, %s168
      %p179 = scmp.eq.s32.totalorder %s32, 0
      %p180 = por %p178, %p179
      %p181 = scmp.ne.s32.totalorder %s167, %s168
      %p182 = scmp.eq.s32.totalorder %s33, 3
      %p183 = por %p181, %p182
      %p185 = scmp.ne.s32.totalorder %s168, %s184
      %p186 = scmp.eq.s32.totalorder %s33, 0
      %p187 = por %p185, %p186
      %s188 = ssub.s32 %s35, %s42
      %p189 = scmp.eq.s32.totalorder %s188, 0
      %s191 = sadd.s32 %s190, 1
      %s192 = scalar_select %p189, %s190, %s191
      %p195 = pneg %p189
      %p196 = scmp.eq.s32.totalorder %s27, 3
      %p197 = por %p195, %p196
      %p198 = scmp.ne.s32.totalorder %s190, %s193
      %p199 = scmp.eq.s32.totalorder %s27, 0
      %p200 = por %p198, %p199
      %p201 = scmp.ne.s32.totalorder %s190, %s193
      %p202 = scmp.eq.s32.totalorder %s32, 3
      %p203 = por %p201, %p202
      %p204 = scmp.ne.s32.totalorder %s193, %s194
      %p205 = scmp.eq.s32.totalorder %s32, 0
      %p206 = por %p204, %p205
      %p207 = scmp.ne.s32.totalorder %s193, %s194
      %p208 = scmp.eq.s32.totalorder %s33, 3
      %p209 = por %p207, %p208
      %p211 = scmp.ne.s32.totalorder %s194, %s210
      %p212 = scmp.eq.s32.totalorder %s33, 0
      %p213 = por %p211, %p212
      %s214 = ssub.s32 %s35, %s42
      %p215 = scmp.eq.s32.totalorder %s214, 0
      %s217 = sadd.s32 %s216, 1
      %s218 = scalar_select %p215, %s216, %s217
      %p221 = pneg %p215
      %p222 = scmp.eq.s32.totalorder %s27, 3
      %p223 = por %p221, %p222
      %p224 = scmp.ne.s32.totalorder %s216, %s219
      %p225 = scmp.eq.s32.totalorder %s27, 0
      %p226 = por %p224, %p225
      %p227 = scmp.ne.s32.totalorder %s216, %s219
      %p228 = scmp.eq.s32.totalorder %s32, 3
      %p229 = por %p227, %p228
      %p230 = scmp.ne.s32.totalorder %s219, %s220
      %p231 = scmp.eq.s32.totalorder %s32, 0
      %p232 = por %p230, %p231
      %p233 = scmp.ne.s32.totalorder %s219, %s220
      %p234 = scmp.eq.s32.totalorder %s33, 3
      %p235 = por %p233, %p234
      %p237 = scmp.ne.s32.totalorder %s220, %s236
      %p238 = scmp.eq.s32.totalorder %s33, 0
      %p239 = por %p237, %p238
      %s240 = ssub.s32 %s35, %s42
      %p241 = scmp.eq.s32.totalorder %s240, 0
      %s243 = sadd.s32 %s242, 1
      %s244 = scalar_select %p241, %s242, %s243
      %p247 = pneg %p241
      %p248 = scmp.eq.s32.totalorder %s27, 3
      %p249 = por %p247, %p248
      %p250 = scmp.ne.s32.totalorder %s242, %s245
      %p251 = scmp.eq.s32.totalorder %s27, 0
      %p252 = por %p250, %p251
      %p253 = scmp.ne.s32.totalorder %s242, %s245
      %p254 = scmp.eq.s32.totalorder %s32, 3
      %p255 = por %p253, %p254
      %p256 = scmp.ne.s32.totalorder %s245, %s246
      %p257 = scmp.eq.s32.totalorder %s32, 0
      %p258 = por %p256, %p257
      %p259 = scmp.ne.s32.totalorder %s245, %s246
      %p260 = scmp.eq.s32.totalorder %s33, 3
      %p261 = por %p259, %p260
      %p263 = scmp.ne.s32.totalorder %s246, %s262
      %p264 = scmp.eq.s32.totalorder %s33, 0
      %p265 = por %p263, %p264
      %s266 = ssub.s32 %s35, %s42
      %p267 = scmp.eq.s32.totalorder %s266, 0
      %s269 = sadd.s32 %s268, 1
      %s270 = scalar_select %p267, %s268, %s269
      %p273 = pneg %p267
      %p274 = scmp.eq.s32.totalorder %s27, 3
      %p275 = por %p273, %p274
      %p276 = scmp.ne.s32.totalorder %s268, %s271
      %p277 = scmp.eq.s32.totalorder %s27, 0
      %p278 = por %p276, %p277
      %p279 = scmp.ne.s32.totalorder %s268, %s271
      %p280 = scmp.eq.s32.totalorder %s32, 3
      %p281 = por %p279, %p280
      %p282 = scmp.ne.s32.totalorder %s271, %s272
      %p283 = scmp.eq.s32.totalorder %s32, 0
      %p284 = por %p282, %p283
      %p285 = scmp.ne.s32.totalorder %s271, %s272
      %p286 = scmp.eq.s32.totalorder %s33, 3
      %p287 = por %p285, %p286
      %p289 = scmp.ne.s32.totalorder %s272, %s288
      %p290 = scmp.eq.s32.totalorder %s33, 0
      %p291 = por %p289, %p290
      %s292 = ssub.s32 %s35, %s42
      %p293 = scmp.eq.s32.totalorder %s292, 0
      %s295 = sadd.s32 %s294, 1
      %s296 = scalar_select %p293, %s294, %s295
      %p299 = pneg %p293
      %p300 = scmp.eq.s32.totalorder %s27, 3
      %p301 = por %p299, %p300
      %p302 = scmp.ne.s32.totalorder %s294, %s297
      %p303 = scmp.eq.s32.totalorder %s27, 0
      %p304 = por %p302, %p303
      %p305 = scmp.ne.s32.totalorder %s294, %s297
      %p306 = scmp.eq.s32.totalorder %s32, 3
      %p307 = por %p305, %p306
      %p308 = scmp.ne.s32.totalorder %s297, %s298
      %p309 = scmp.eq.s32.totalorder %s32, 0
      %p310 = por %p308, %p309
      %p311 = scmp.ne.s32.totalorder %s297, %s298
      %p312 = scmp.eq.s32.totalorder %s33, 3
      %p313 = por %p311, %p312
      %p315 = scmp.ne.s32.totalorder %s298, %s314
      %p316 = scmp.eq.s32.totalorder %s33, 0
      %p317 = por %p315, %p316
      %s318 = ssub.s32 %s35, %s42
      %p319 = scmp.eq.s32.totalorder %s318, 0
      %s321 = sadd.s32 %s320, 1
      %s322 = scalar_select %p319, %s320, %s321
      %p325 = pneg %p319
      %p326 = scmp.eq.s32.totalorder %s27, 3
      %p327 = por %p325, %p326
      %p328 = scmp.ne.s32.totalorder %s320, %s323
      %p329 = scmp.eq.s32.totalorder %s27, 0
      %p330 = por %p328, %p329
      %p331 = scmp.ne.s32.totalorder %s320, %s323
      %p332 = scmp.eq.s32.totalorder %s32, 3
      %p333 = por %p331, %p332
      %p334 = scmp.ne.s32.totalorder %s323, %s324
      %p335 = scmp.eq.s32.totalorder %s32, 0
      %p336 = por %p334, %p335
      %p337 = scmp.ne.s32.totalorder %s323, %s324
      %p338 = scmp.eq.s32.totalorder %s33, 3
      %p339 = por %p337, %p338
      %p341 = scmp.ne.s32.totalorder %s324, %s340
      %p342 = scmp.eq.s32.totalorder %s33, 0
      %p343 = por %p341, %p342
      %s344 = ssub.s32 %s35, %s42
      %p345 = scmp.eq.s32.totalorder %s344, 0
      %s347 = sadd.s32 %s346, 1
      %s348 = scalar_select %p345, %s346, %s347
      %p351 = pneg %p345
      %p352 = scmp.eq.s32.totalorder %s27, 3
      %p353 = por %p351, %p352
      %p354 = scmp.ne.s32.totalorder %s346, %s349
      %p355 = scmp.eq.s32.totalorder %s27, 0
      %p356 = por %p354, %p355
      %p357 = scmp.ne.s32.totalorder %s346, %s349
      %p358 = scmp.eq.s32.totalorder %s32, 3
      %p359 = por %p357, %p358
      %p360 = scmp.ne.s32.totalorder %s349, %s350
      %p361 = scmp.eq.s32.totalorder %s32, 0
      %p362 = por %p360, %p361
      %p363 = scmp.ne.s32.totalorder %s349, %s350
      %p364 = scmp.eq.s32.totalorder %s33, 3
      %p365 = por %p363, %p364
      %p367 = scmp.ne.s32.totalorder %s350, %s366
      %p368 = scmp.eq.s32.totalorder %s33, 0
      %p369 = por %p367, %p368
      %s370 = ssub.s32 %s35, %s42
      %p371 = scmp.eq.s32.totalorder %s370, 0
      %s373 = sadd.s32 %s372, 1
      %s374 = scalar_select %p371, %s372, %s373
      %p377 = pneg %p371
      %p378 = scmp.eq.s32.totalorder %s27, 3
      %p379 = por %p377, %p378
      %p380 = scmp.ne.s32.totalorder %s372, %s375
      %p381 = scmp.eq.s32.totalorder %s27, 0
      %p382 = por %p380, %p381
      %p383 = scmp.ne.s32.totalorder %s372, %s375
      %p384 = scmp.eq.s32.totalorder %s32, 3
      %p385 = por %p383, %p384
      %p386 = scmp.ne.s32.totalorder %s375, %s376
      %p387 = scmp.eq.s32.totalorder %s32, 0
      %p388 = por %p386, %p387
      %p389 = scmp.ne.s32.totalorder %s375, %s376
      %p390 = scmp.eq.s32.totalorder %s33, 3
      %p391 = por %p389, %p390
      %p393 = scmp.ne.s32.totalorder %s376, %s392
      %p394 = scmp.eq.s32.totalorder %s33, 0
      %p395 = por %p393, %p394
      %s396 = ssub.s32 %s35, %s42
      %p397 = scmp.eq.s32.totalorder %s396, 0
      %s399 = sadd.s32 %s398, 1
      %s400 = scalar_select %p397, %s398, %s399
      %p403 = pneg %p397
      %p404 = scmp.eq.s32.totalorder %s27, 3
      %p405 = por %p403, %p404
      %p406 = scmp.ne.s32.totalorder %s398, %s401
      %p407 = scmp.eq.s32.totalorder %s27, 0
      %p408 = por %p406, %p407
      %p409 = scmp.ne.s32.totalorder %s398, %s401
      %p410 = scmp.eq.s32.totalorder %s32, 3
      %p411 = por %p409, %p410
      %p412 = scmp.ne.s32.totalorder %s401, %s402
      %p413 = scmp.eq.s32.totalorder %s32, 0
      %p414 = por %p412, %p413
      %p415 = scmp.ne.s32.totalorder %s401, %s402
      %p416 = scmp.eq.s32.totalorder %s33, 3
      %p417 = por %p415, %p416
      %p419 = scmp.ne.s32.totalorder %s402, %s418
      %p420 = scmp.eq.s32.totalorder %s33, 0
      %p421 = por %p419, %p420
      %s422 = ssub.s32 %s35, %s42
      %p423 = scmp.eq.s32.totalorder %s422, 0
      %s425 = sadd.s32 %s424, 1
      %s426 = scalar_select %p423, %s424, %s425
      %p429 = pneg %p423
      %p430 = scmp.eq.s32.totalorder %s27, 3
      %p431 = por %p429, %p430
      %p432 = scmp.ne.s32.totalorder %s424, %s427
      %p433 = scmp.eq.s32.totalorder %s27, 0
      %p434 = por %p432, %p433
      %p435 = scmp.ne.s32.totalorder %s424, %s427
      %p436 = scmp.eq.s32.totalorder %s32, 3
      %p437 = por %p435, %p436
      %p438 = scmp.ne.s32.totalorder %s427, %s428
      %p439 = scmp.eq.s32.totalorder %s32, 0
      %p440 = por %p438, %p439
      %p441 = scmp.ne.s32.totalorder %s427, %s428
      %p442 = scmp.eq.s32.totalorder %s33, 3
      %p443 = por %p441, %p442
      %p445 = scmp.ne.s32.totalorder %s428, %s444
      %p446 = scmp.eq.s32.totalorder %s33, 0
      %p447 = por %p445, %p446
      %s449 = sadd.s32 %s448, 1
      %p452 = scmp.eq.s32.totalorder %s27, 3
      %p453 = scmp.ne.s32.totalorder %s448, %s450
      %p454 = scmp.eq.s32.totalorder %s27, 0
      %p455 = por %p453, %p454
      %p456 = scmp.ne.s32.totalorder %s448, %s450
      %p457 = scmp.eq.s32.totalorder %s32, 3
      %p458 = por %p456, %p457
      %p459 = scmp.ne.s32.totalorder %s450, %s451
      %p460 = scmp.eq.s32.totalorder %s32, 0
      %p461 = por %p459, %p460
      %p462 = scmp.ne.s32.totalorder %s450, %s451
      %p463 = scmp.eq.s32.totalorder %s33, 3
      %p464 = por %p462, %p463
      %p466 = scmp.ne.s32.totalorder %s451, %s465
      %p467 = scmp.eq.s32.totalorder %s33, 0
      %p468 = por %p466, %p467
      %s470 = sadd.s32 %s469, 1
      %p473 = scmp.eq.s32.totalorder %s27, 3
      %p474 = scmp.ne.s32.totalorder %s469, %s471
      %p475 = scmp.eq.s32.totalorder %s27, 0
      %p476 = por %p474, %p475
      %p477 = scmp.ne.s32.totalorder %s469, %s471
      %p478 = scmp.eq.s32.totalorder %s32, 3
      %p479 = por %p477, %p478
      %p480 = scmp.ne.s32.totalorder %s471, %s472
      %p481 = scmp.eq.s32.totalorder %s32, 0
      %p482 = por %p480, %p481
      %p483 = scmp.ne.s32.totalorder %s471, %s472
      %p484 = scmp.eq.s32.totalorder %s33, 3
      %p485 = por %p483, %p484
      %p487 = scmp.ne.s32.totalorder %s472, %s486
      %p488 = scmp.eq.s32.totalorder %s33, 0
      %p489 = por %p487, %p488
      %s490 = ssub.s32 %s34, %s46
      %p491 = scmp.eq.s32.totalorder %s490, 0
      %s493 = sadd.s32 %s492, 1
      %s494 = scalar_select %p491, %s492, %s493
      %p497 = pneg %p491
      %p498 = scmp.eq.s32.totalorder %s27, 3
      %p499 = por %p497, %p498
      %p500 = scmp.ne.s32.totalorder %s492, %s495
      %p501 = scmp.eq.s32.totalorder %s27, 0
      %p502 = por %p500, %p501
      %p503 = scmp.ne.s32.totalorder %s492, %s495
      %p504 = scmp.eq.s32.totalorder %s32, 3
      %p505 = por %p503, %p504
      %p506 = scmp.ne.s32.totalorder %s495, %s496
      %p507 = scmp.eq.s32.totalorder %s32, 0
      %p508 = por %p506, %p507
      %p509 = scmp.ne.s32.totalorder %s495, %s496
      %p510 = scmp.eq.s32.totalorder %s33, 3
      %p511 = por %p509, %p510
      %p513 = scmp.ne.s32.totalorder %s496, %s512
      %p514 = scmp.eq.s32.totalorder %s33, 0
      %p515 = por %p513, %p514
      %p516 = scmp.le.s32.totalorder 1, %s27
      %p517 = scmp.lt.s32.totalorder %s27, 5
      %p518 = pnand %p516, %p517
      %p519 = pneg %p518
      // Predicated region
      $region9: #{encoder_forward.1} parent=5 // pred_check
        _
      $region10: #{encoder_forward.1} parent=5 // pred_check_branch
        %521 = sbr.rel (%p518) target = $region12
      $region11: #{encoder_forward.1} parent=5 // pred_region
        %s522 = ssub.s32 %s27, 1
        // Predicated region
        $region13: #{encoder_forward.1} parent=11 // pred_check
          %p523 = pneg %p86
        $region14: #{encoder_forward.1} parent=11 // pred_check_branch
          %525 = sbr.rel (%p523) target = $region16
        $region15: #{encoder_forward.1} parent=11 // pred_region
          _
        $region16: #{encoder_forward.1} parent=11 // pred_fallthru
          _
        // Predicated region
        $region17: #{encoder_forward.1} parent=11 // pred_check
          %p526 = pneg %p107
        $region18: #{encoder_forward.1} parent=11 // pred_check_branch
          %528 = sbr.rel (%p526) target = $region20
        $region19: #{encoder_forward.1} parent=11 // pred_region
          _
        $region20: #{encoder_forward.1} parent=11 // pred_fallthru
          _
        // Predicated region
        $region21: #{encoder_forward.1} parent=11 // pred_check
          %p529 = pneg %p128
        $region22: #{encoder_forward.1} parent=11 // pred_check_branch
          %531 = sbr.rel (%p529) target = $region24
        $region23: #{encoder_forward.1} parent=11 // pred_region
          _
        $region24: #{encoder_forward.1} parent=11 // pred_fallthru
          _
        // Predicated region
        $region25: #{encoder_forward.1} parent=11 // pred_check
          %p532 = pneg %p461
        $region26: #{encoder_forward.1} parent=11 // pred_check_branch
          %534 = sbr.rel (%p532) target = $region28
        $region27: #{encoder_forward.1} parent=11 // pred_region
          _
        $region28: #{encoder_forward.1} parent=11 // pred_fallthru
          _
        // Predicated region
        $region29: #{encoder_forward.1} parent=11 // pred_check
          %p535 = pneg %p482
        $region30: #{encoder_forward.1} parent=11 // pred_check_branch
          %537 = sbr.rel (%p535) target = $region32
        $region31: #{encoder_forward.1} parent=11 // pred_region
          _
        $region32: #{encoder_forward.1} parent=11 // pred_fallthru
          _
      $region12: #{encoder_forward.1} parent=5 // pred_fallthru
        _
      %p538 = scmp.lt.s32.totalorder %s27, 4
      // Predicated region
      $region33: #{encoder_forward.1} parent=5 // pred_check
        %p539 = pneg %p538
      $region34: #{encoder_forward.1} parent=5 // pred_check_branch
        %541 = sbr.rel (%p539) target = $region36
      $region35: #{encoder_forward.1} parent=5 // pred_region
        // Predicated region
        $region37: #{encoder_forward.1} parent=35 // pred_check
          %p542 = pneg %p59
        $region38: #{encoder_forward.1} parent=35 // pred_check_branch
          %544 = sbr.rel (%p542) target = $region40
        $region39: #{encoder_forward.1} parent=35 // pred_region
          %p545 = scmp.lt.s32.totalorder %s34, 1
          %s546 = scalar_select %p545, %s34, 1
          %s547 = smul.addr %s546, 24
          %s548 = smul.addr %s547, 4
          %s549 = scalar_lea.vmem %s0, %s548
        $region40: #{encoder_forward.1} parent=35 // pred_fallthru
          _
        // Predicated region
        $region41: #{encoder_forward.1} parent=35 // pred_check
          %p550 = pneg %p148
        $region42: #{encoder_forward.1} parent=35 // pred_check_branch
          %552 = sbr.rel (%p550) target = $region44
        $region43: #{encoder_forward.1} parent=35 // pred_region
          %p553 = scmp.lt.s32.totalorder %s35, 1
          %s554 = scalar_select %p553, %s35, 1
          %s555 = scalar_lea.vmem %s4, %s554
        $region44: #{encoder_forward.1} parent=35 // pred_fallthru
          _
        // Predicated region
        $region45: #{encoder_forward.1} parent=35 // pred_check
          %p556 = pneg %p174
        $region46: #{encoder_forward.1} parent=35 // pred_check_branch
          %558 = sbr.rel (%p556) target = $region48
        $region47: #{encoder_forward.1} parent=35 // pred_region
          %p559 = scmp.lt.s32.totalorder %s35, 1
          %s560 = scalar_select %p559, %s35, 1
          %s561 = scalar_lea.vmem %s5, %s560
        $region48: #{encoder_forward.1} parent=35 // pred_fallthru
          _
        // Predicated region
        $region49: #{encoder_forward.1} parent=35 // pred_check
          %p562 = pneg %p200
        $region50: #{encoder_forward.1} parent=35 // pred_check_branch
          %564 = sbr.rel (%p562) target = $region52
        $region51: #{encoder_forward.1} parent=35 // pred_region
          %p565 = scmp.lt.s32.totalorder %s35, 1
          %s566 = scalar_select %p565, %s35, 1
          %s567 = smul.addr %s566, 48
          %s568 = smul.addr %s567, 4
          %s569 = scalar_lea.vmem %s6, %s568
        $region52: #{encoder_forward.1} parent=35 // pred_fallthru
          _
        // Predicated region
        $region53: #{encoder_forward.1} parent=35 // pred_check
          %p570 = pneg %p226
        $region54: #{encoder_forward.1} parent=35 // pred_check_branch
          %572 = sbr.rel (%p570) target = $region56
        $region55: #{encoder_forward.1} parent=35 // pred_region
          %p573 = scmp.lt.s32.totalorder %s35, 1
          %s574 = scalar_select %p573, %s35, 1
          %s575 = smul.addr %s574, 3
          %s576 = scalar_lea.vmem %s7, %s575
        $region56: #{encoder_forward.1} parent=35 // pred_fallthru
          _
        // Predicated region
        $region57: #{encoder_forward.1} parent=35 // pred_check
          %p577 = pneg %p252
        $region58: #{encoder_forward.1} parent=35 // pred_check_branch
          %579 = sbr.rel (%p577) target = $region60
        $region59: #{encoder_forward.1} parent=35 // pred_region
          %p580 = scmp.lt.s32.totalorder %s35, 1
          %s581 = scalar_select %p580, %s35, 1
          %s582 = smul.addr %s581, 16
          %s583 = smul.addr %s582, 4
          %s584 = scalar_lea.vmem %s8, %s583
        $region60: #{encoder_forward.1} parent=35 // pred_fallthru
          _
        // Predicated region
        $region61: #{encoder_forward.1} parent=35 // pred_check
          %p585 = pneg %p278
        $region62: #{encoder_forward.1} parent=35 // pred_check_branch
          %587 = sbr.rel (%p585) target = $region64
        $region63: #{encoder_forward.1} parent=35 // pred_region
          %p588 = scmp.lt.s32.totalorder %s35, 1
          %s589 = scalar_select %p588, %s35, 1
          %s590 = scalar_lea.vmem %s9, %s589
        $region64: #{encoder_forward.1} parent=35 // pred_fallthru
          _
        // Predicated region
        $region65: #{encoder_forward.1} parent=35 // pred_check
          %p591 = pneg %p304
        $region66: #{encoder_forward.1} parent=35 // pred_check_branch
          %593 = sbr.rel (%p591) target = $region68
        $region67: #{encoder_forward.1} parent=35 // pred_region
          %p594 = scmp.lt.s32.totalorder %s35, 1
          %s595 = scalar_select %p594, %s35, 1
          %s596 = scalar_lea.vmem %s10, %s595
        $region68: #{encoder_forward.1} parent=35 // pred_fallthru
          _
        // Predicated region
        $region69: #{encoder_forward.1} parent=35 // pred_check
          %p597 = pneg %p330
        $region70: #{encoder_forward.1} parent=35 // pred_check_branch
          %599 = sbr.rel (%p597) target = $region72
        $region71: #{encoder_forward.1} parent=35 // pred_region
          %p600 = scmp.lt.s32.totalorder %s35, 1
          %s601 = scalar_select %p600, %s35, 1
          %s602 = scalar_lea.vmem %s11, %s601
        $region72: #{encoder_forward.1} parent=35 // pred_fallthru
          _
        // Predicated region
        $region73: #{encoder_forward.1} parent=35 // pred_check
          %p603 = pneg %p356
        $region74: #{encoder_forward.1} parent=35 // pred_check_branch
          %605 = sbr.rel (%p603) target = $region76
        $region75: #{encoder_forward.1} parent=35 // pred_region
          %p606 = scmp.lt.s32.totalorder %s35, 1
          %s607 = scalar_select %p606, %s35, 1
          %s608 = smul.addr %s607, 64
          %s609 = smul.addr %s608, 4
          %s610 = scalar_lea.vmem %s12, %s609
        $region76: #{encoder_forward.1} parent=35 // pred_fallthru
          _
        // Predicated region
        $region77: #{encoder_forward.1} parent=35 // pred_check
          %p611 = pneg %p382
        $region78: #{encoder_forward.1} parent=35 // pred_check_branch
          %613 = sbr.rel (%p611) target = $region80
        $region79: #{encoder_forward.1} parent=35 // pred_region
          %p614 = scmp.lt.s32.totalorder %s35, 1
          %s615 = scalar_select %p614, %s35, 1
          %s616 = smul.addr %s615, 4
          %s617 = scalar_lea.vmem %s13, %s616
        $region80: #{encoder_forward.1} parent=35 // pred_fallthru
          _
        // Predicated region
        $region81: #{encoder_forward.1} parent=35 // pred_check
          %p618 = pneg %p408
        $region82: #{encoder_forward.1} parent=35 // pred_check_branch
          %620 = sbr.rel (%p618) target = $region84
        $region83: #{encoder_forward.1} parent=35 // pred_region
          %p621 = scmp.lt.s32.totalorder %s35, 1
          %s622 = scalar_select %p621, %s35, 1
          %s623 = smul.addr %s622, 64
          %s624 = smul.addr %s623, 4
          %s625 = scalar_lea.vmem %s14, %s624
        $region84: #{encoder_forward.1} parent=35 // pred_fallthru
          _
        // Predicated region
        $region85: #{encoder_forward.1} parent=35 // pred_check
          %p626 = pneg %p434
        $region86: #{encoder_forward.1} parent=35 // pred_check_branch
          %628 = sbr.rel (%p626) target = $region88
        $region87: #{encoder_forward.1} parent=35 // pred_region
          %p629 = scmp.lt.s32.totalorder %s35, 1
          %s630 = scalar_select %p629, %s35, 1
          %s631 = scalar_lea.vmem %s15, %s630
        $region88: #{encoder_forward.1} parent=35 // pred_fallthru
          _
      $region36: #{encoder_forward.1} parent=5 // pred_fallthru
        _
      %p632 = scmp.le.s32.totalorder 1, %s27
      %p633 = scmp.lt.s32.totalorder %s27, 5
      %p634 = pnand %p632, %p633
      %p635 = pneg %p634
      // Predicated region
      $region89: #{encoder_forward.1} parent=5 // pred_check
        _
      $region90: #{encoder_forward.1} parent=5 // pred_check_branch
        %637 = sbr.rel (%p634) target = $region92
      $region91: #{encoder_forward.1} parent=5 // pred_region
        %s638 = ssub.s32 %s27, 1
        %p639 = scmp.lt.s32.totalorder %s36, 1
        %s640 = scalar_select %p639, %s36, 1
        %s641 = smul.addr %s640, 24
        %s642 = smul.addr %s641, 4
        %s643 = scalar_lea.vmem %s0, %s642
        %p644 = pneg %p65
        %p645 = pneg %p62
        %p646 = pneg %p86
        %p647 = pneg %p83
        %p648 = pneg %p107
        %p649 = pneg %p104
        %p650 = pneg %p128
        %p651 = pneg %p125
        %p652 = scmp.lt.s32.totalorder %s37, 1
        %s653 = scalar_select %p652, %s37, 1
        %s654 = scalar_lea.vmem %s4, %s653
        %p655 = pneg %p154
        %p656 = pneg %p151
        %p657 = scmp.lt.s32.totalorder %s37, 1
        %s658 = scalar_select %p657, %s37, 1
        %s659 = scalar_lea.vmem %s5, %s658
        %p660 = pneg %p180
        %p661 = pneg %p177
        %p662 = scmp.lt.s32.totalorder %s37, 1
        %s663 = scalar_select %p662, %s37, 1
        %s664 = smul.addr %s663, 48
        %s665 = smul.addr %s664, 4
        %s666 = scalar_lea.vmem %s6, %s665
        %p667 = pneg %p206
        %p668 = pneg %p203
        %p669 = scmp.lt.s32.totalorder %s37, 1
        %s670 = scalar_select %p669, %s37, 1
        %s671 = smul.addr %s670, 3
        %s672 = scalar_lea.vmem %s7, %s671
        %p673 = pneg %p232
        %p674 = pneg %p229
        %p675 = scmp.lt.s32.totalorder %s37, 1
        %s676 = scalar_select %p675, %s37, 1
        %s677 = smul.addr %s676, 16
        %s678 = smul.addr %s677, 4
        %s679 = scalar_lea.vmem %s8, %s678
        %p680 = pneg %p258
        %p681 = pneg %p255
        %p682 = scmp.lt.s32.totalorder %s37, 1
        %s683 = scalar_select %p682, %s37, 1
        %s684 = scalar_lea.vmem %s9, %s683
        %p685 = pneg %p284
        %p686 = pneg %p281
        %p687 = scmp.lt.s32.totalorder %s37, 1
        %s688 = scalar_select %p687, %s37, 1
        %s689 = scalar_lea.vmem %s10, %s688
        %p690 = pneg %p310
        %p691 = pneg %p307
        %p692 = scmp.lt.s32.totalorder %s37, 1
        %s693 = scalar_select %p692, %s37, 1
        %s694 = scalar_lea.vmem %s11, %s693
        %p695 = pneg %p336
        %p696 = pneg %p333
        %p697 = scmp.lt.s32.totalorder %s37, 1
        %s698 = scalar_select %p697, %s37, 1
        %s699 = smul.addr %s698, 64
        %s700 = smul.addr %s699, 4
        %s701 = scalar_lea.vmem %s12, %s700
        %p702 = pneg %p362
        %p703 = pneg %p359
        %p704 = scmp.lt.s32.totalorder %s37, 1
        %s705 = scalar_select %p704, %s37, 1
        %s706 = smul.addr %s705, 4
        %s707 = scalar_lea.vmem %s13, %s706
        %p708 = pneg %p388
        %p709 = pneg %p385
        %p710 = scmp.lt.s32.totalorder %s37, 1
        %s711 = scalar_select %p710, %s37, 1
        %s712 = smul.addr %s711, 64
        %s713 = smul.addr %s712, 4
        %s714 = scalar_lea.vmem %s14, %s713
        %p715 = pneg %p414
        %p716 = pneg %p411
        %p717 = scmp.lt.s32.totalorder %s37, 1
        %s718 = scalar_select %p717, %s37, 1
        %s719 = scalar_lea.vmem %s15, %s718
        %p720 = pneg %p440
        %p721 = pneg %p437
        %p722 = pneg %p461
        %p723 = pneg %p458
        %p724 = pneg %p482
        %p725 = pneg %p479
        %p726 = pneg %p508
        %p727 = pneg %p505
        %s728 = sand.u32 %s495, 1
        %s729 = scalar_lea.sflag [#allocation4], %s728
        %s730 = sand.u32 %s495, 1
        %s731 = smul.addr %s730, 32
        %s732 = scalar_lea.vmem [#allocation3], %s731
        %p733 = scmp.lt.s32.totalorder %s36, 1
        %s734 = scalar_select %p733, %s36, 1
        %s735 = smul.addr %s734, 24
        %s736 = smul.addr %s735, 4
        %s737 = scalar_lea.vmem %s0, %s736
        %p738 = scmp.lt.s32.totalorder %s37, 1
        %s739 = scalar_select %p738, %s37, 1
        %s740 = scalar_lea.vmem %s4, %s739
        %p741 = scmp.lt.s32.totalorder %s37, 1
        %s742 = scalar_select %p741, %s37, 1
        %s743 = scalar_lea.vmem %s5, %s742
        %p744 = scmp.lt.s32.totalorder %s37, 1
        %s745 = scalar_select %p744, %s37, 1
        %s746 = smul.addr %s745, 48
        %s747 = smul.addr %s746, 4
        %s748 = scalar_lea.vmem %s6, %s747
        %p749 = scmp.lt.s32.totalorder %s37, 1
        %s750 = scalar_select %p749, %s37, 1
        %s751 = smul.addr %s750, 3
        %s752 = scalar_lea.vmem %s7, %s751
        %p753 = scmp.lt.s32.totalorder %s37, 1
        %s754 = scalar_select %p753, %s37, 1
        %s755 = smul.addr %s754, 16
        %s756 = smul.addr %s755, 4
        %s757 = scalar_lea.vmem %s8, %s756
        %p758 = scmp.lt.s32.totalorder %s37, 1
        %s759 = scalar_select %p758, %s37, 1
        %s760 = scalar_lea.vmem %s9, %s759
        %p761 = scmp.lt.s32.totalorder %s37, 1
        %s762 = scalar_select %p761, %s37, 1
        %s763 = scalar_lea.vmem %s10, %s762
        %p764 = scmp.lt.s32.totalorder %s37, 1
        %s765 = scalar_select %p764, %s37, 1
        %s766 = scalar_lea.vmem %s11, %s765
        %p767 = scmp.lt.s32.totalorder %s37, 1
        %s768 = scalar_select %p767, %s37, 1
        %s769 = smul.addr %s768, 64
        %s770 = smul.addr %s769, 4
        %s771 = scalar_lea.vmem %s12, %s770
        %p772 = scmp.lt.s32.totalorder %s37, 1
        %s773 = scalar_select %p772, %s37, 1
        %s774 = smul.addr %s773, 4
        %s775 = scalar_lea.vmem %s13, %s774
        %p776 = scmp.lt.s32.totalorder %s37, 1
        %s777 = scalar_select %p776, %s37, 1
        %s778 = smul.addr %s777, 64
        %s779 = smul.addr %s778, 4
        %s780 = scalar_lea.vmem %s14, %s779
        %p781 = scmp.lt.s32.totalorder %s37, 1
        %s782 = scalar_select %p781, %s37, 1
        %s783 = scalar_lea.vmem %s15, %s782
        %p785 = scmp.eq.s32.totalorder %s37, 0
        // Predicated region
        $region93: #{encoder_forward.1} parent=91 // pred_check
          %p786 = pneg %p785
        $region94: #{encoder_forward.1} parent=91 // pred_check_branch
          %788 = sbr.rel (%p786) target = $region96
        $region95: #{encoder_forward.1} parent=91 // pred_region
          %v789 = vld [vmem:[%s737] sm:$0xff]
          %v790 = vld [vmem:[%s737 + $0x8] sm:$0xff]
          %v791 = vld [vmem:[%s737 + $0x10] sm:$0xff]
          %v792 = vld [vmem:[%s737 + $0x18] sm:$0xff]
          %v793 = vld [vmem:[%s737 + $0x20] sm:$0xff]
          %v794 = vld [vmem:[%s737 + $0x28] sm:$0xff]
          %v795 = vld [vmem:[%s737 + $0x30] sm:$0xff]
          %v796 = vld [vmem:[%s737 + $0x38] sm:$0xff]
          %v797 = vld [vmem:[%s737 + $0x40] sm:$0xff]
          %v798 = vld [vmem:[%s737 + $0x48] sm:$0xff]
          %v799 = vld [vmem:[%s737 + $0x50] sm:$0xff]
          %v800 = vld [vmem:[%s737 + $0x58] sm:$0xff]
          %v801 = vld [vmem:[%s1] sm:$0xf]
          %v802 = vld [vmem:[%s1 + $0x4] sm:$0xf]
          %v803 = vld [vmem:[%s1 + $0x8] sm:$0xf]
          %v804 = vld [vmem:[%s1 + $0xc] sm:$0xf]
          %v805 = vld [vmem:[%s1 + $0x10] sm:$0xf]
          %v806 = vld [vmem:[%s1 + $0x14] sm:$0xf]
          %v807 = vld [vmem:[%s1 + $0x18] sm:$0xf]
          %v808 = vld [vmem:[%s1 + $0x1c] sm:$0xf]
          %v809 = vld [vmem:[%s1 + $0x20] sm:$0xf]
          %v810 = vld [vmem:[%s1 + $0x24] sm:$0xf]
          %v811 = vld [vmem:[%s1 + $0x28] sm:$0xf]
          %v812 = vld [vmem:[%s1 + $0x2c] sm:$0xf]
          %v813 = vld [vmem:[%s1 + $0x30] sm:$0xf]
          %v814 = vld [vmem:[%s1 + $0x34] sm:$0xf]
          %v815 = vld [vmem:[%s1 + $0x38] sm:$0xf]
          %v816 = vld [vmem:[%s1 + $0x3c] sm:$0xf]
          %v817 = vld [vmem:[%s1 + $0x40] sm:$0xf]
          %v818 = vld [vmem:[%s1 + $0x44] sm:$0xf]
          %v819 = vld [vmem:[%s1 + $0x48] sm:$0xf]
          %v820 = vld [vmem:[%s1 + $0x4c] sm:$0xf]
          %v821 = vld [vmem:[%s1 + $0x50] sm:$0xf]
          %v822 = vld [vmem:[%s1 + $0x54] sm:$0xf]
          %v823 = vld [vmem:[%s1 + $0x58] sm:$0xf]
          %v824 = vld [vmem:[%s1 + $0x5c] sm:$0xf]
          %v825 = vld [vmem:[%s1 + $0x60] sm:$0xf]
          %v826 = vld [vmem:[%s1 + $0x64] sm:$0xf]
          %v827 = vld [vmem:[%s1 + $0x68] sm:$0xf]
          %v828 = vld [vmem:[%s1 + $0x6c] sm:$0xf]
          %v829 = vld [vmem:[%s1 + $0x70] sm:$0xf]
          %v830 = vld [vmem:[%s1 + $0x74] sm:$0xf]
          %v831 = vld [vmem:[%s1 + $0x78] sm:$0xf]
          %v832 = vld [vmem:[%s1 + $0x7c] sm:$0xf]
          %v833 = vld [vmem:[%s1 + $0x80] sm:$0xf]
          %v834 = vld [vmem:[%s1 + $0x84] sm:$0xf]
          %v835 = vld [vmem:[%s1 + $0x88] sm:$0xf]
          %v836 = vld [vmem:[%s1 + $0x8c] sm:$0xf]
          %v837 = vld [vmem:[%s1 + $0x90] sm:$0xf]
          %v838 = vld [vmem:[%s1 + $0x94] sm:$0xf]
          %v839 = vld [vmem:[%s1 + $0x98] sm:$0xf]
          %v840 = vld [vmem:[%s1 + $0x9c] sm:$0xf]
          %v841 = vld [vmem:[%s1 + $0xa0] sm:$0xf]
          %v842 = vld [vmem:[%s1 + $0xa4] sm:$0xf]
          %v843 = vld [vmem:[%s1 + $0xa8] sm:$0xf]
          %v844 = vld [vmem:[%s1 + $0xac] sm:$0xf]
          %v845 = vld [vmem:[%s1 + $0xb0] sm:$0xf]
          %v846 = vld [vmem:[%s1 + $0xb4] sm:$0xf]
          %v847 = vld [vmem:[%s1 + $0xb8] sm:$0xf]
          %v848 = vld [vmem:[%s1 + $0xbc] sm:$0xf]
          %v849 = vld [vmem:[%s1 + $0xc0] sm:$0xf]
          %v850 = vld [vmem:[%s1 + $0xc4] sm:$0xf]
          %v851 = vld [vmem:[%s1 + $0xc8] sm:$0xf]
          %v852 = vld [vmem:[%s1 + $0xcc] sm:$0xf]
          %v853 = vld [vmem:[%s1 + $0xd0] sm:$0xf]
          %v854 = vld [vmem:[%s1 + $0xd4] sm:$0xf]
          %v855 = vld [vmem:[%s1 + $0xd8] sm:$0xf]
          %v856 = vld [vmem:[%s1 + $0xdc] sm:$0xf]
          %v857 = vld [vmem:[%s1 + $0xe0] sm:$0xf]
          %v858 = vld [vmem:[%s1 + $0xe4] sm:$0xf]
          %v859 = vld [vmem:[%s1 + $0xe8] sm:$0xf]
          %v860 = vld [vmem:[%s1 + $0xec] sm:$0xf]
          %v861 = vld [vmem:[%s1 + $0xf0] sm:$0xf]
          %v862 = vld [vmem:[%s1 + $0xf4] sm:$0xf]
          %v863 = vld [vmem:[%s1 + $0xf8] sm:$0xf]
          %v864 = vld [vmem:[%s1 + $0xfc] sm:$0xf]
          %v865 = vld [vmem:[%s1 + $0x100] sm:$0xf]
          %v866 = vld [vmem:[%s1 + $0x104] sm:$0xf]
          %v867 = vld [vmem:[%s1 + $0x108] sm:$0xf]
          %v868 = vld [vmem:[%s1 + $0x10c] sm:$0xf]
          %v869 = vld [vmem:[%s1 + $0x110] sm:$0xf]
          %v870 = vld [vmem:[%s1 + $0x114] sm:$0xf]
          %v871 = vld [vmem:[%s1 + $0x118] sm:$0xf]
          %v872 = vld [vmem:[%s1 + $0x11c] sm:$0xf]
          %v873 = vld [vmem:[%s1 + $0x120] sm:$0xf]
          %v874 = vld [vmem:[%s1 + $0x124] sm:$0xf]
          %v875 = vld [vmem:[%s1 + $0x128] sm:$0xf]
          %v876 = vld [vmem:[%s1 + $0x12c] sm:$0xf]
          %v877 = vld [vmem:[%s1 + $0x130] sm:$0xf]
          %v878 = vld [vmem:[%s1 + $0x134] sm:$0xf]
          %v879 = vld [vmem:[%s1 + $0x138] sm:$0xf]
          %v880 = vld [vmem:[%s1 + $0x13c] sm:$0xf]
          %v881 = vld [vmem:[%s1 + $0x140] sm:$0xf]
          %v882 = vld [vmem:[%s1 + $0x144] sm:$0xf]
          %v883 = vld [vmem:[%s1 + $0x148] sm:$0xf]
          %v884 = vld [vmem:[%s1 + $0x14c] sm:$0xf]
          %v885 = vld [vmem:[%s1 + $0x150] sm:$0xf]
          %v886 = vld [vmem:[%s1 + $0x154] sm:$0xf]
          %v887 = vld [vmem:[%s1 + $0x158] sm:$0xf]
          %v888 = vld [vmem:[%s1 + $0x15c] sm:$0xf]
          %v889 = vld [vmem:[%s1 + $0x160] sm:$0xf]
          %v890 = vld [vmem:[%s1 + $0x164] sm:$0xf]
          %v891 = vld [vmem:[%s1 + $0x168] sm:$0xf]
          %v892 = vld [vmem:[%s1 + $0x16c] sm:$0xf]
          %v893 = vld [vmem:[%s1 + $0x170] sm:$0xf]
          %v894 = vld [vmem:[%s1 + $0x174] sm:$0xf]
          %v895 = vld [vmem:[%s1 + $0x178] sm:$0xf]
          %v896 = vld [vmem:[%s1 + $0x17c] sm:$0xf]
          %v897 = vld [vmem:[%s2] sm:$0x1]
          %v899 = vlaneseq
          %v900 = vshrl.u32 %v899, 7
          %v901 = vsub.s32 0, %v900
          %v902 = vrot.slane %v897, %v901
          %v916 = vunpack.c.l.b16 %v789
          %v917 = vunpack.c.h.b16 %v789
          %v918 = vunpack.c.l.b16 %v790
          %v919 = vunpack.c.h.b16 %v790
          %v920 = vunpack.c.l.b16 %v791
          %v921 = vunpack.c.h.b16 %v791
          %v922 = vunpack.c.l.b16 %v792
          %v923 = vunpack.c.h.b16 %v792
          %v924 = vunpack.c.l.b16 %v793
          %v925 = vunpack.c.h.b16 %v793
          %v926 = vunpack.c.l.b16 %v794
          %v927 = vunpack.c.h.b16 %v794
          %v928 = vunpack.c.l.b16 %v795
          %v929 = vunpack.c.h.b16 %v795
          %v930 = vunpack.c.l.b16 %v796
          %v931 = vunpack.c.h.b16 %v796
          %v932 = vunpack.c.l.b16 %v797
          %v933 = vunpack.c.h.b16 %v797
          %v934 = vunpack.c.l.b16 %v798
          %v935 = vunpack.c.h.b16 %v798
          %v936 = vunpack.c.l.b16 %v799
          %v937 = vunpack.c.h.b16 %v799
          %v938 = vunpack.c.l.b16 %v800
          %v939 = vunpack.c.h.b16 %v800
          %v940 = vpack.c.b16 %v922, %v916
          %v941 = vpack.c.b16 %v923, %v917
          %v942 = vpack.c.b16 %v924, %v918
          %v943 = vpack.c.b16 %v925, %v919
          %v944 = vpack.c.b16 %v926, %v920
          %v945 = vpack.c.b16 %v927, %v921
          %v946 = vpack.c.b16 %v934, %v928
          %v947 = vpack.c.b16 %v935, %v929
          %v948 = vpack.c.b16 %v936, %v930
          %v949 = vpack.c.b16 %v937, %v931
          %v950 = vpack.c.b16 %v938, %v932
          %v951 = vpack.c.b16 %v939, %v933
          %v1060 = vunpack.c.l.b16 %v801
          %v1061 = vunpack.c.l.b16 %v802
          %v1062 = vunpack.c.l.b16 %v803
          %v1063 = vunpack.c.l.b16 %v804
          %v1064 = vunpack.c.l.b16 %v805
          %v1065 = vunpack.c.l.b16 %v806
          %v1066 = vunpack.c.l.b16 %v807
          %v1067 = vunpack.c.l.b16 %v808
          %v1068 = vunpack.c.l.b16 %v809
          %v1069 = vunpack.c.l.b16 %v810
          %v1070 = vunpack.c.l.b16 %v811
          %v1071 = vunpack.c.l.b16 %v812
          %v1072 = vunpack.c.l.b16 %v813
          %v1073 = vunpack.c.l.b16 %v814
          %v1074 = vunpack.c.l.b16 %v815
          %v1075 = vunpack.c.l.b16 %v816
          %v1076 = vunpack.c.l.b16 %v817
          %v1077 = vunpack.c.l.b16 %v818
          %v1078 = vunpack.c.l.b16 %v819
          %v1079 = vunpack.c.l.b16 %v820
          %v1080 = vunpack.c.l.b16 %v821
          %v1081 = vunpack.c.l.b16 %v822
          %v1082 = vunpack.c.l.b16 %v823
          %v1083 = vunpack.c.l.b16 %v824
          %v1084 = vunpack.c.l.b16 %v825
          %v1085 = vunpack.c.l.b16 %v826
          %v1086 = vunpack.c.l.b16 %v827
          %v1087 = vunpack.c.l.b16 %v828
          %v1088 = vunpack.c.l.b16 %v829
          %v1089 = vunpack.c.l.b16 %v830
          %v1090 = vunpack.c.l.b16 %v831
          %v1091 = vunpack.c.l.b16 %v832
          %v1092 = vunpack.c.l.b16 %v833
          %v1093 = vunpack.c.l.b16 %v834
          %v1094 = vunpack.c.l.b16 %v835
          %v1095 = vunpack.c.l.b16 %v836
          %v1096 = vunpack.c.l.b16 %v837
          %v1097 = vunpack.c.l.b16 %v838
          %v1098 = vunpack.c.l.b16 %v839
          %v1099 = vunpack.c.l.b16 %v840
          %v1100 = vunpack.c.l.b16 %v841
          %v1101 = vunpack.c.l.b16 %v842
          %v1102 = vunpack.c.l.b16 %v843
          %v1103 = vunpack.c.l.b16 %v844
          %v1104 = vunpack.c.l.b16 %v845
          %v1105 = vunpack.c.l.b16 %v846
          %v1106 = vunpack.c.l.b16 %v847
          %v1107 = vunpack.c.l.b16 %v848
          %v1108 = vunpack.c.l.b16 %v849
          %v1109 = vunpack.c.l.b16 %v850
          %v1110 = vunpack.c.l.b16 %v851
          %v1111 = vunpack.c.l.b16 %v852
          %v1112 = vunpack.c.l.b16 %v853
          %v1113 = vunpack.c.l.b16 %v854
          %v1114 = vunpack.c.l.b16 %v855
          %v1115 = vunpack.c.l.b16 %v856
          %v1116 = vunpack.c.l.b16 %v857
          %v1117 = vunpack.c.l.b16 %v858
          %v1118 = vunpack.c.l.b16 %v859
          %v1119 = vunpack.c.l.b16 %v860
          %v1120 = vunpack.c.l.b16 %v861
          %v1121 = vunpack.c.l.b16 %v862
          %v1122 = vunpack.c.l.b16 %v863
          %v1123 = vunpack.c.l.b16 %v864
          %v1124 = vunpack.c.l.b16 %v865
          %v1125 = vunpack.c.l.b16 %v866
          %v1126 = vunpack.c.l.b16 %v867
          %v1127 = vunpack.c.l.b16 %v868
          %v1128 = vunpack.c.l.b16 %v869
          %v1129 = vunpack.c.l.b16 %v870
          %v1130 = vunpack.c.l.b16 %v871
          %v1131 = vunpack.c.l.b16 %v872
          %v1132 = vunpack.c.l.b16 %v873
          %v1133 = vunpack.c.l.b16 %v874
          %v1134 = vunpack.c.l.b16 %v875
          %v1135 = vunpack.c.l.b16 %v876
          %v1136 = vunpack.c.l.b16 %v877
          %v1137 = vunpack.c.l.b16 %v878
          %v1138 = vunpack.c.l.b16 %v879
          %v1139 = vunpack.c.l.b16 %v880
          %v1140 = vunpack.c.l.b16 %v881
          %v1141 = vunpack.c.l.b16 %v882
          %v1142 = vunpack.c.l.b16 %v883
          %v1143 = vunpack.c.l.b16 %v884
          %v1144 = vunpack.c.l.b16 %v885
          %v1145 = vunpack.c.l.b16 %v886
          %v1146 = vunpack.c.l.b16 %v887
          %v1147 = vunpack.c.l.b16 %v888
          %v1148 = vunpack.c.l.b16 %v889
          %v1149 = vunpack.c.l.b16 %v890
          %v1150 = vunpack.c.l.b16 %v891
          %v1151 = vunpack.c.l.b16 %v892
          %v1152 = vunpack.c.l.b16 %v893
          %v1153 = vunpack.c.l.b16 %v894
          %v1154 = vunpack.c.l.b16 %v895
          %v1155 = vunpack.c.l.b16 %v896
          %v1156 = vpack.c.b16 %v1061, %v1060
          %v1157 = vpack.c.b16 %v1063, %v1062
          %v1158 = vpack.c.b16 %v1065, %v1064
          %v1159 = vpack.c.b16 %v1067, %v1066
          %v1160 = vpack.c.b16 %v1069, %v1068
          %v1161 = vpack.c.b16 %v1071, %v1070
          %v1162 = vpack.c.b16 %v1073, %v1072
          %v1163 = vpack.c.b16 %v1075, %v1074
          %v1164 = vpack.c.b16 %v1077, %v1076
          %v1165 = vpack.c.b16 %v1079, %v1078
          %v1166 = vpack.c.b16 %v1081, %v1080
          %v1167 = vpack.c.b16 %v1083, %v1082
          %v1168 = vpack.c.b16 %v1085, %v1084
          %v1169 = vpack.c.b16 %v1087, %v1086
          %v1170 = vpack.c.b16 %v1089, %v1088
          %v1171 = vpack.c.b16 %v1091, %v1090
          %v1172 = vpack.c.b16 %v1093, %v1092
          %v1173 = vpack.c.b16 %v1095, %v1094
          %v1174 = vpack.c.b16 %v1097, %v1096
          %v1175 = vpack.c.b16 %v1099, %v1098
          %v1176 = vpack.c.b16 %v1101, %v1100
          %v1177 = vpack.c.b16 %v1103, %v1102
          %v1178 = vpack.c.b16 %v1105, %v1104
          %v1179 = vpack.c.b16 %v1107, %v1106
          %v1180 = vpack.c.b16 %v1109, %v1108
          %v1181 = vpack.c.b16 %v1111, %v1110
          %v1182 = vpack.c.b16 %v1113, %v1112
          %v1183 = vpack.c.b16 %v1115, %v1114
          %v1184 = vpack.c.b16 %v1117, %v1116
          %v1185 = vpack.c.b16 %v1119, %v1118
          %v1186 = vpack.c.b16 %v1121, %v1120
          %v1187 = vpack.c.b16 %v1123, %v1122
          %v1188 = vpack.c.b16 %v1125, %v1124
          %v1189 = vpack.c.b16 %v1127, %v1126
          %v1190 = vpack.c.b16 %v1129, %v1128
          %v1191 = vpack.c.b16 %v1131, %v1130
          %v1192 = vpack.c.b16 %v1133, %v1132
          %v1193 = vpack.c.b16 %v1135, %v1134
          %v1194 = vpack.c.b16 %v1137, %v1136
          %v1195 = vpack.c.b16 %v1139, %v1138
          %v1196 = vpack.c.b16 %v1141, %v1140
          %v1197 = vpack.c.b16 %v1143, %v1142
          %v1198 = vpack.c.b16 %v1145, %v1144
          %v1199 = vpack.c.b16 %v1147, %v1146
          %v1200 = vpack.c.b16 %v1149, %v1148
          %v1201 = vpack.c.b16 %v1151, %v1150
          %v1202 = vpack.c.b16 %v1153, %v1152
          %v1203 = vpack.c.b16 %v1155, %v1154
          %1252 = vmatprep.subr.bf16.mxu0 0
          %1253 = vmatpush1.bf16.msra.mxu0 %v1156
          %1254 = vmatprep.subr.bf16.mxu0 0
          %1255 = vmatpush1.bf16.msra.mxu0 %v1157
          %1256 = vmatprep.subr.bf16.mxu0 0
          %1257 = vmatpush1.bf16.msra.mxu0 %v1158
          %1258 = vmatprep.subr.bf16.mxu0 0
          %1259 = vmatpush1.bf16.msra.mxu0 %v1159
          %1260 = vmatprep.subr.bf16.mxu0 0
          %1261 = vmatpush1.bf16.msra.mxu0 %v1160
          %1262 = vmatprep.subr.bf16.mxu0 0
          %1263 = vmatpush1.bf16.msra.mxu0 %v1161
          %1264 = vmatprep.subr.bf16.mxu0 0
          %1265 = vmatpush1.bf16.msra.mxu0 %v1162
          %1266 = vmatprep.subr.bf16.mxu0 0
          %1267 = vmatpush1.bf16.msra.mxu0 %v1163
          %1268 = vmatprep.subr.bf16.mxu0 0
          %1269 = vmatpush1.bf16.msra.mxu0 %v1164
          %1270 = vmatprep.subr.bf16.mxu0 0
          %1271 = vmatpush1.bf16.msra.mxu0 %v1165
          %1272 = vmatprep.subr.bf16.mxu0 0
          %1273 = vmatpush1.bf16.msra.mxu0 %v1166
          %1274 = vmatprep.subr.bf16.mxu0 0
          %1275 = vmatpush1.bf16.msra.mxu0 %v1167
          %1276 = vmatprep.subr.bf16.mxu0 0
          %1277 = vmatpush1.bf16.msra.mxu0 %v1168
          %1278 = vmatprep.subr.bf16.mxu0 0
          %1279 = vmatpush1.bf16.msra.mxu0 %v1169
          %1280 = vmatprep.subr.bf16.mxu0 0
          %1281 = vmatpush1.bf16.msra.mxu0 %v1170
          %1282 = vmatprep.subr.bf16.mxu0 0
          %1283 = vmatpush1.bf16.msra.mxu0 %v1171
          %1284 = vmatprep.mubr.bf16.mxu0 %v941
          %1285 = vmatmul.mubr.bf16.gmra.mrb[0].mxu0 %v940
          %v1286 = vpop.f32.mrb[0].mxu0
          %v1287 = vadd.f32 %v902, %v1286
          %v1288 = vpop.f32.mrb[0].mxu0
          %v1289 = vpop.f32.mrb[0].mxu0
          %v1290 = vadd.f32 %v902, %v1289
          %v1291 = vpop.f32.mrb[0].mxu0
          %1292 = vmatprep.mubr.bf16.mxu0 %v947
          %1293 = vmatmul.mubr.bf16.gmra.mrb[0].mxu0 %v946
          %v1294 = vpop.f32.mrb[0].mxu0
          %v1295 = vadd.f32 %v902, %v1294
          %v1296 = vpop.f32.mrb[0].mxu0
          %v1297 = vpop.f32.mrb[0].mxu0
          %v1298 = vadd.f32 %v902, %v1297
          %v1299 = vpop.f32.mrb[0].mxu0
          %1300 = vdwg.mxu0
          %1301 = vmatprep.subr.bf16.mxu0 0
          %1302 = vmatpush1.bf16.msra.mxu0 %v1172
          %1303 = vmatprep.subr.bf16.mxu0 0
          %1304 = vmatpush1.bf16.msra.mxu0 %v1173
          %1305 = vmatprep.subr.bf16.mxu0 0
          %1306 = vmatpush1.bf16.msra.mxu0 %v1174
          %1307 = vmatprep.subr.bf16.mxu0 0
          %1308 = vmatpush1.bf16.msra.mxu0 %v1175
          %1309 = vmatprep.subr.bf16.mxu0 0
          %1310 = vmatpush1.bf16.msra.mxu0 %v1176
          %1311 = vmatprep.subr.bf16.mxu0 0
          %1312 = vmatpush1.bf16.msra.mxu0 %v1177
          %1313 = vmatprep.subr.bf16.mxu0 0
          %1314 = vmatpush1.bf16.msra.mxu0 %v1178
          %1315 = vmatprep.subr.bf16.mxu0 0
          %1316 = vmatpush1.bf16.msra.mxu0 %v1179
          %1317 = vmatprep.subr.bf16.mxu0 0
          %1318 = vmatpush1.bf16.msra.mxu0 %v1180
          %1319 = vmatprep.subr.bf16.mxu0 0
          %1320 = vmatpush1.bf16.msra.mxu0 %v1181
          %1321 = vmatprep.subr.bf16.mxu0 0
          %1322 = vmatpush1.bf16.msra.mxu0 %v1182
          %1323 = vmatprep.subr.bf16.mxu0 0
          %1324 = vmatpush1.bf16.msra.mxu0 %v1183
          %1325 = vmatprep.subr.bf16.mxu0 0
          %1326 = vmatpush1.bf16.msra.mxu0 %v1184
          %1327 = vmatprep.subr.bf16.mxu0 0
          %1328 = vmatpush1.bf16.msra.mxu0 %v1185
          %1329 = vmatprep.subr.bf16.mxu0 0
          %1330 = vmatpush1.bf16.msra.mxu0 %v1186
          %1331 = vmatprep.subr.bf16.mxu0 0
          %1332 = vmatpush1.bf16.msra.mxu0 %v1187
          %1333 = vmatprep.mubr.bf16.mxu0 %v943
          %1334 = vmatmul.mubr.bf16.gmra.mrb[0].mxu0 %v942
          %v1335 = vpop.f32.mrb[0].mxu0
          %v1336 = vadd.f32 %v1287, %v1335
          %v1337 = vpop.f32.mrb[0].mxu0
          %v1338 = vpop.f32.mrb[0].mxu0
          %v1339 = vadd.f32 %v1290, %v1338
          %v1340 = vpop.f32.mrb[0].mxu0
          %1341 = vmatprep.mubr.bf16.mxu0 %v949
          %1342 = vmatmul.mubr.bf16.gmra.mrb[0].mxu0 %v948
          %v1343 = vpop.f32.mrb[0].mxu0
          %v1344 = vadd.f32 %v1295, %v1343
          %v1345 = vpop.f32.mrb[0].mxu0
          %v1346 = vpop.f32.mrb[0].mxu0
          %v1347 = vadd.f32 %v1298, %v1346
          %v1348 = vpop.f32.mrb[0].mxu0
          %1349 = vdwg.mxu0
          %1350 = vmatprep.subr.bf16.mxu0 0
          %1351 = vmatpush1.bf16.msra.mxu0 %v1188
          %1352 = vmatprep.subr.bf16.mxu0 0
          %1353 = vmatpush1.bf16.msra.mxu0 %v1189
          %1354 = vmatprep.subr.bf16.mxu0 0
          %1355 = vmatpush1.bf16.msra.mxu0 %v1190
          %1356 = vmatprep.subr.bf16.mxu0 0
          %1357 = vmatpush1.bf16.msra.mxu0 %v1191
          %1358 = vmatprep.subr.bf16.mxu0 0
          %1359 = vmatpush1.bf16.msra.mxu0 %v1192
          %1360 = vmatprep.subr.bf16.mxu0 0
          %1361 = vmatpush1.bf16.msra.mxu0 %v1193
          %1362 = vmatprep.subr.bf16.mxu0 0
          %1363 = vmatpush1.bf16.msra.mxu0 %v1194
          %1364 = vmatprep.subr.bf16.mxu0 0
          %1365 = vmatpush1.bf16.msra.mxu0 %v1195
          %1366 = vmatprep.subr.bf16.mxu0 0
          %1367 = vmatpush1.bf16.msra.mxu0 %v1196
          %1368 = vmatprep.subr.bf16.mxu0 0
          %1369 = vmatpush1.bf16.msra.mxu0 %v1197
          %1370 = vmatprep.subr.bf16.mxu0 0
          %1371 = vmatpush1.bf16.msra.mxu0 %v1198
          %1372 = vmatprep.subr.bf16.mxu0 0
          %1373 = vmatpush1.bf16.msra.mxu0 %v1199
          %1374 = vmatprep.subr.bf16.mxu0 0
          %1375 = vmatpush1.bf16.msra.mxu0 %v1200
          %1376 = vmatprep.subr.bf16.mxu0 0
          %1377 = vmatpush1.bf16.msra.mxu0 %v1201
          %1378 = vmatprep.subr.bf16.mxu0 0
          %1379 = vmatpush1.bf16.msra.mxu0 %v1202
          %1380 = vmatprep.subr.bf16.mxu0 0
          %1381 = vmatpush1.bf16.msra.mxu0 %v1203
          %1382 = vmatprep.mubr.bf16.mxu0 %v945
          %1383 = vmatmul.mubr.bf16.gmra.mrb[0].mxu0 %v944
          %v1384 = vpop.f32.mrb[0].mxu0
          %v1385 = vadd.f32 %v1336, %v1384
          %v1386 = vpop.f32.mrb[0].mxu0
          %v1387 = vpop.f32.mrb[0].mxu0
          %v1388 = vadd.f32 %v1339, %v1387
          %v1389 = vpop.f32.mrb[0].mxu0
          %1390 = vmatprep.mubr.bf16.mxu0 %v951
          %1391 = vmatmul.mubr.bf16.gmra.mrb[0].mxu0 %v950
          %v1392 = vpop.f32.mrb[0].mxu0
          %v1393 = vadd.f32 %v1344, %v1392
          %v1394 = vpop.f32.mrb[0].mxu0
          %v1395 = vpop.f32.mrb[0].mxu0
          %v1396 = vadd.f32 %v1347, %v1395
          %v1397 = vpop.f32.mrb[0].mxu0
          %1398 = vdwg.mxu0
          %v1399 = vld [vmem:[%s3] sm:$0xff]
          %v1400 = vld [vmem:[%s3 + $0x8] sm:$0xff]
          %v1401 = vadd.f32 %v1385, %v1399
          %v1402 = vadd.f32 %v1388, %v1400
          %v1403 = vadd.f32 %v1393, %v1399
          %v1404 = vadd.f32 %v1396, %v1400
          %1405 = vst [vmem:[#allocation2] sm:$0xff] %v1401
          %1406 = vst [vmem:[#allocation2 + $0x8] sm:$0xff] %v1402
          %1407 = vst [vmem:[#allocation2 + $0x10] sm:$0xff] %v1403
          %1408 = vst [vmem:[#allocation2 + $0x18] sm:$0xff] %v1404
        $region96: #{encoder_forward.1} parent=91 // pred_fallthru
          _
        %v1409 = vld [vmem:[#allocation2] sm:$0xff]
        %v1410 = vld [vmem:[#allocation2 + $0x8] sm:$0xff]
        %v1411 = vld [vmem:[#allocation2 + $0x10] sm:$0xff]
        %v1412 = vld [vmem:[#allocation2 + $0x18] sm:$0xff]
        %v1413 = vld [vmem:[%s740] sm:$0x1]
        %v1414 = vld [vmem:[%s743] sm:$0x1]
        %1415 = vadd.xlane.f32.xlu0 %v1409
        %v1416 = vpop.xlane.xlu0 %1415
        %1417 = vadd.xlane.f32.xlu0 %v1410
        %v1418 = vpop.xlane.xlu0 %1417
        %1419 = vadd.xlane.f32.xlu0 %v1411
        %v1420 = vpop.xlane.xlu0 %1419
        %1421 = vadd.xlane.f32.xlu0 %v1412
        %v1422 = vpop.xlane.xlu0 %1421
        %v1423 = vrcp.pop 128.0
        %v1424 = vmul.f32 %v1416, %v1423
        %v1425 = vmul.f32 %v1418, %v1423
        %v1426 = vmul.f32 %v1420, %v1423
        %v1427 = vmul.f32 %v1422, %v1423
        %v1428 = vsub.f32 %v1409, %v1424
        %v1429 = vsub.f32 %v1410, %v1425
        %v1430 = vsub.f32 %v1411, %v1426
        %v1431 = vsub.f32 %v1412, %v1427
        %v1432 = vmul.f32 %v1428, %v1428
        %v1433 = vmul.f32 %v1429, %v1429
        %v1434 = vmul.f32 %v1430, %v1430
        %v1435 = vmul.f32 %v1431, %v1431
        %1436 = vadd.xlane.f32.xlu0 %v1432
        %v1437 = vpop.xlane.xlu0 %1436
        %1438 = vadd.xlane.f32.xlu0 %v1433
        %v1439 = vpop.xlane.xlu0 %1438
        %1440 = vadd.xlane.f32.xlu0 %v1434
        %v1441 = vpop.xlane.xlu0 %1440
        %1442 = vadd.xlane.f32.xlu0 %v1435
        %v1443 = vpop.xlane.xlu0 %1442
        %v1444 = vmul.f32 %v1437, %v1423
        %v1445 = vmul.f32 %v1439, %v1423
        %v1446 = vmul.f32 %v1441, %v1423
        %v1447 = vmul.f32 %v1443, %v1423
        %v1448 = vadd.f32 %v1444, 1e-06
        %v1449 = vadd.f32 %v1445, 1e-06
        %v1450 = vadd.f32 %v1446, 1e-06
        %v1451 = vadd.f32 %v1447, 1e-06
        %v1452 = vrsqrt.pop %v1448
        %v1453 = vrsqrt.pop %v1449
        %v1454 = vrsqrt.pop %v1450
        %v1455 = vrsqrt.pop %v1451
        %v1456 = vmul.f32 %v1428, %v1452
        %v1457 = vmul.f32 %v1429, %v1453
        %v1458 = vmul.f32 %v1430, %v1454
        %v1459 = vmul.f32 %v1431, %v1455
        %v1461 = vlaneseq
        %v1462 = vshrl.u32 %v1461, 7
        %v1463 = vsub.s32 0, %v1462
        %v1464 = vrot.slane %v1413, %v1463
        %v1466 = vmul.f32 %v1456, %v1464
        %v1467 = vmul.f32 %v1457, %v1464
        %v1468 = vmul.f32 %v1458, %v1464
        %v1469 = vmul.f32 %v1459, %v1464
        %v1471 = vlaneseq
        %v1472 = vshrl.u32 %v1471, 7
        %v1473 = vsub.s32 0, %v1472
        %v1474 = vrot.slane %v1414, %v1473
        %v1476 = vadd.f32 %v1466, %v1474
        %v1477 = vadd.f32 %v1467, %v1474
        %v1478 = vadd.f32 %v1468, %v1474
        %v1479 = vadd.f32 %v1469, %v1474
        %v1480 = vpack.c.bf16 %v1477, %v1476
        %v1481 = vpack.c.bf16 %v1479, %v1478
        %v1482 = vld [vmem:[%s748] sm:$0xff]
        %v1483 = vld [vmem:[%s748 + $0x8] sm:$0xf]
        %v1484 = vld [vmem:[%s748 + $0xc] sm:$0xff]
        %v1485 = vld [vmem:[%s748 + $0x14] sm:$0xf]
        %v1486 = vld [vmem:[%s748 + $0x18] sm:$0xff]
        %v1487 = vld [vmem:[%s748 + $0x20] sm:$0xf]
        %v1488 = vld [vmem:[%s748 + $0x24] sm:$0xff]
        %v1489 = vld [vmem:[%s748 + $0x2c] sm:$0xf]
        %v1490 = vld [vmem:[%s748 + $0x30] sm:$0xff]
        %v1491 = vld [vmem:[%s748 + $0x38] sm:$0xf]
        %v1492 = vld [vmem:[%s748 + $0x3c] sm:$0xff]
        %v1493 = vld [vmem:[%s748 + $0x44] sm:$0xf]
        %v1494 = vld [vmem:[%s748 + $0x48] sm:$0xff]
        %v1495 = vld [vmem:[%s748 + $0x50] sm:$0xf]
        %v1496 = vld [vmem:[%s748 + $0x54] sm:$0xff]
        %v1497 = vld [vmem:[%s748 + $0x5c] sm:$0xf]
        %v1498 = vld [vmem:[%s748 + $0x60] sm:$0xff]
        %v1499 = vld [vmem:[%s748 + $0x68] sm:$0xf]
        %v1500 = vld [vmem:[%s748 + $0x6c] sm:$0xff]
        %v1501 = vld [vmem:[%s748 + $0x74] sm:$0xf]
        %v1502 = vld [vmem:[%s748 + $0x78] sm:$0xff]
        %v1503 = vld [vmem:[%s748 + $0x80] sm:$0xf]
        %v1504 = vld [vmem:[%s748 + $0x84] sm:$0xff]
        %v1505 = vld [vmem:[%s748 + $0x8c] sm:$0xf]
        %v1506 = vld [vmem:[%s748 + $0x90] sm:$0xff]
        %v1507 = vld [vmem:[%s748 + $0x98] sm:$0xf]
        %v1508 = vld [vmem:[%s748 + $0x9c] sm:$0xff]
        %v1509 = vld [vmem:[%s748 + $0xa4] sm:$0xf]
        %v1510 = vld [vmem:[%s748 + $0xa8] sm:$0xff]
        %v1511 = vld [vmem:[%s748 + $0xb0] sm:$0xf]
        %v1512 = vld [vmem:[%s748 + $0xb4] sm:$0xff]
        %v1513 = vld [vmem:[%s748 + $0xbc] sm:$0xf]
        %v1514 = vld [vmem:[%s752] sm:$0x7]
        %v1516 = vlaneseq
        %v1517 = vshrl.u32 %v1516, 7
        %v1518 = vsub.s32 0, %v1517
        %v1519 = vrot.slane %v1514, %v1518
        %v1520 = vlaneseq
        %v1521 = vshrl.u32 %v1520, 7
        %v1522 = vsub.s32 1, %v1521
        %v1523 = vrot.slane %v1514, %v1522
        %v1524 = vlaneseq
        %v1525 = vshrl.u32 %v1524, 7
        %v1526 = vsub.s32 2, %v1525
        %v1527 = vrot.slane %v1514, %v1526
        %v1563 = vunpack.c.l.b16 %v1482
        %v1564 = vunpack.c.h.b16 %v1482
        %v1565 = vunpack.c.l.b16 %v1483
        %v1566 = vunpack.c.l.b16 %v1484
        %v1567 = vunpack.c.h.b16 %v1484
        %v1568 = vunpack.c.l.b16 %v1485
        %v1569 = vunpack.c.l.b16 %v1486
        %v1570 = vunpack.c.h.b16 %v1486
        %v1571 = vunpack.c.l.b16 %v1487
        %v1572 = vunpack.c.l.b16 %v1488
        %v1573 = vunpack.c.h.b16 %v1488
        %v1574 = vunpack.c.l.b16 %v1489
        %v1575 = vunpack.c.l.b16 %v1490
        %v1576 = vunpack.c.h.b16 %v1490
        %v1577 = vunpack.c.l.b16 %v1491
        %v1578 = vunpack.c.l.b16 %v1492
        %v1579 = vunpack.c.h.b16 %v1492
        %v1580 = vunpack.c.l.b16 %v1493
        %v1581 = vunpack.c.l.b16 %v1494
        %v1582 = vunpack.c.h.b16 %v1494
        %v1583 = vunpack.c.l.b16 %v1495
        %v1584 = vunpack.c.l.b16 %v1496
        %v1585 = vunpack.c.h.b16 %v1496
        %v1586 = vunpack.c.l.b16 %v1497
        %v1587 = vunpack.c.l.b16 %v1498
        %v1588 = vunpack.c.h.b16 %v1498
        %v1589 = vunpack.c.l.b16 %v1499
        %v1590 = vunpack.c.l.b16 %v1500
        %v1591 = vunpack.c.h.b16 %v1500
        %v1592 = vunpack.c.l.b16 %v1501
        %v1593 = vunpack.c.l.b16 %v1502
        %v1594 = vunpack.c.h.b16 %v1502
        %v1595 = vunpack.c.l.b16 %v1503
        %v1596 = vunpack.c.l.b16 %v1504
        %v1597 = vunpack.c.h.b16 %v1504
        %v1598 = vunpack.c.l.b16 %v1505
        %v1599 = vunpack.c.l.b16 %v1506
        %v1600 = vunpack.c.h.b16 %v1506
        %v1601 = vunpack.c.l.b16 %v1507
        %v1602 = vunpack.c.l.b16 %v1508
        %v1603 = vunpack.c.h.b16 %v1508
        %v1604 = vunpack.c.l.b16 %v1509
        %v1605 = vunpack.c.l.b16 %v1510
        %v1606 = vunpack.c.h.b16 %v1510
        %v1607 = vunpack.c.l.b16 %v1511
        %v1608 = vunpack.c.l.b16 %v1512
        %v1609 = vunpack.c.h.b16 %v1512
        %v1610 = vunpack.c.l.b16 %v1513
        %v1611 = vpack.c.b16 %v1566, %v1563
        %v1612 = vpack.c.b16 %v1567, %v1564
        %v1613 = vpack.c.b16 %v1568, %v1565
        %v1614 = vpack.c.b16 %v1572, %v1569
        %v1615 = vpack.c.b16 %v1573, %v1570
        %v1616 = vpack.c.b16 %v1574, %v1571
        %v1617 = vpack.c.b16 %v1578, %v1575
        %v1618 = vpack.c.b16 %v1579, %v1576
        %v1619 = vpack.c.b16 %v1580, %v1577
        %v1620 = vpack.c.b16 %v1584, %v1581
        %v1621 = vpack.c.b16 %v1585, %v1582
        %v1622 = vpack.c.b16 %v1586, %v1583
        %v1623 = vpack.c.b16 %v1590, %v1587
        %v1624 = vpack.c.b16 %v1591, %v1588
        %v1625 = vpack.c.b16 %v1592, %v1589
        %v1626 = vpack.c.b16 %v1596, %v1593
        %v1627 = vpack.c.b16 %v1597, %v1594
        %v1628 = vpack.c.b16 %v1598, %v1595
        %v1629 = vpack.c.b16 %v1602, %v1599
        %v1630 = vpack.c.b16 %v1603, %v1600
        %v1631 = vpack.c.b16 %v1604, %v1601
        %v1632 = vpack.c.b16 %v1608, %v1605
        %v1633 = vpack.c.b16 %v1609, %v1606
        %v1634 = vpack.c.b16 %v1610, %v1607
        %1659 = vmatprep.subr.bf16.mxu0 %v1612
        %1660 = vmatpush1.bf16.msra.mxu0 %v1611
        %1661 = vmatprep.subr.bf16.mxu0 %v1615
        %1662 = vmatpush1.bf16.msra.mxu0 %v1614
        %1663 = vmatprep.subr.bf16.mxu0 %v1618
        %1664 = vmatpush1.bf16.msra.mxu0 %v1617
        %1665 = vmatprep.subr.bf16.mxu0 %v1621
        %1666 = vmatpush1.bf16.msra.mxu0 %v1620
        %1667 = vmatprep.subr.bf16.mxu0 %v1624
        %1668 = vmatpush1.bf16.msra.mxu0 %v1623
        %1669 = vmatprep.subr.bf16.mxu0 %v1627
        %1670 = vmatpush1.bf16.msra.mxu0 %v1626
        %1671 = vmatprep.subr.bf16.mxu0 %v1630
        %1672 = vmatpush1.bf16.msra.mxu0 %v1629
        %1673 = vmatprep.subr.bf16.mxu0 %v1633
        %1674 = vmatpush1.bf16.msra.mxu0 %v1632
        %1675 = vmatprep.subr.bf16.mxu0 0
        %1676 = vmatpush1.bf16.msra.mxu0 0
        %1677 = vmatprep.subr.bf16.mxu0 0
        %1678 = vmatpush1.bf16.msra.mxu0 0
        %1679 = vmatprep.subr.bf16.mxu0 0
        %1680 = vmatpush1.bf16.msra.mxu0 0
        %1681 = vmatprep.subr.bf16.mxu0 0
        %1682 = vmatpush1.bf16.msra.mxu0 0
        %1683 = vmatprep.subr.bf16.mxu0 0
        %1684 = vmatpush1.bf16.msra.mxu0 0
        %1685 = vmatprep.subr.bf16.mxu0 0
        %1686 = vmatpush1.bf16.msra.mxu0 0
        %1687 = vmatprep.subr.bf16.mxu0 0
        %1688 = vmatpush1.bf16.msra.mxu0 0
        %1689 = vmatprep.subr.bf16.mxu0 0
        %1690 = vmatpush1.bf16.msra.mxu0 0
        %1691 = vmatprep.mubr.bf16.mxu0 0
        %1692 = vmatmul.mubr.bf16.gmra.mrb[0].mxu0 %v1480
        %v1693 = vpop.f32.mrb[0].mxu0
        %v1694 = vadd.f32 %v1519, %v1693
        %v1695 = vpop.f32.mrb[0].mxu0
        %v1696 = vadd.f32 %v1523, %v1695
        %v1697 = vpop.f32.mrb[0].mxu0
        %v1698 = vadd.f32 %v1519, %v1697
        %v1699 = vpop.f32.mrb[0].mxu0
        %v1700 = vadd.f32 %v1523, %v1699
        %1701 = vmatprep.mubr.bf16.mxu0 0
        %1702 = vmatmul.mubr.bf16.gmra.mrb[0].mxu0 %v1481
        %v1703 = vpop.f32.mrb[0].mxu0
        %v1704 = vadd.f32 %v1519, %v1703
        %v1705 = vpop.f32.mrb[0].mxu0
        %v1706 = vadd.f32 %v1523, %v1705
        %v1707 = vpop.f32.mrb[0].mxu0
        %v1708 = vadd.f32 %v1519, %v1707
        %v1709 = vpop.f32.mrb[0].mxu0
        %v1710 = vadd.f32 %v1523, %v1709
        %1711 = vdwg.mxu0
        %1712 = vmatprep.subr.bf16.mxu0 0
        %1713 = vmatpush1.bf16.msra.mxu0 %v1613
        %1714 = vmatprep.subr.bf16.mxu0 0
        %1715 = vmatpush1.bf16.msra.mxu0 %v1616
        %1716 = vmatprep.subr.bf16.mxu0 0
        %1717 = vmatpush1.bf16.msra.mxu0 %v1619
        %1718 = vmatprep.subr.bf16.mxu0 0
        %1719 = vmatpush1.bf16.msra.mxu0 %v1622
        %1720 = vmatprep.subr.bf16.mxu0 0
        %1721 = vmatpush1.bf16.msra.mxu0 %v1625
        %1722 = vmatprep.subr.bf16.mxu0 0
        %1723 = vmatpush1.bf16.msra.mxu0 %v1628
        %1724 = vmatprep.subr.bf16.mxu0 0
        %1725 = vmatpush1.bf16.msra.mxu0 %v1631
        %1726 = vmatprep.subr.bf16.mxu0 0
        %1727 = vmatpush1.bf16.msra.mxu0 %v1634
        %1728 = vmatprep.subr.bf16.mxu0 0
        %1729 = vmatpush1.bf16.msra.mxu0 0
        %1730 = vmatprep.subr.bf16.mxu0 0
        %1731 = vmatpush1.bf16.msra.mxu0 0
        %1732 = vmatprep.subr.bf16.mxu0 0
        %1733 = vmatpush1.bf16.msra.mxu0 0
        %1734 = vmatprep.subr.bf16.mxu0 0
        %1735 = vmatpush1.bf16.msra.mxu0 0
        %1736 = vmatprep.subr.bf16.mxu0 0
        %1737 = vmatpush1.bf16.msra.mxu0 0
        %1738 = vmatprep.subr.bf16.mxu0 0
        %1739 = vmatpush1.bf16.msra.mxu0 0
        %1740 = vmatprep.subr.bf16.mxu0 0
        %1741 = vmatpush1.bf16.msra.mxu0 0
        %1742 = vmatprep.subr.bf16.mxu0 0
        %1743 = vmatpush1.bf16.msra.mxu0 0
        %1744 = vmatprep.mubr.bf16.mxu0 0
        %1745 = vmatmul.mubr.bf16.gmra.mrb[0].mxu0 %v1480
        %v1746 = vpop.f32.mrb[0].mxu0
        %v1747 = vadd.f32 %v1527, %v1746
        %v1748 = vpop.f32.mrb[0].mxu0
        %v1749 = vpop.f32.mrb[0].mxu0
        %v1750 = vadd.f32 %v1527, %v1749
        %v1751 = vpop.f32.mrb[0].mxu0
        %1752 = vmatprep.mubr.bf16.mxu0 0
        %1753 = vmatmul.mubr.bf16.gmra.mrb[0].mxu0 %v1481
        %v1754 = vpop.f32.mrb[0].mxu0
        %v1755 = vadd.f32 %v1527, %v1754
        %v1756 = vpop.f32.mrb[0].mxu0
        %v1757 = vpop.f32.mrb[0].mxu0
        %v1758 = vadd.f32 %v1527, %v1757
        %v1759 = vpop.f32.mrb[0].mxu0
        %1760 = vdwg.mxu0
        %v1761 = vmul.f32 %v1694, 0.17677669
        %v1762 = vmul.f32 %v1698, 0.17677669
        %v1763 = vmul.f32 %v1704, 0.17677669
        %v1764 = vmul.f32 %v1708, 0.17677669
        %v1765 = vpack.c.bf16 %v1762, %v1761
        %v1766 = vpack.c.bf16 %v1764, %v1763
        %v1767 = vpack.c.bf16 %v1700, %v1696
        %v1768 = vpack.c.bf16 %v1710, %v1706
        %v1769 = vpack.c.bf16 %v1750, %v1747
        %v1770 = vpack.c.bf16 %v1758, %v1755
        %1773 = vrot.lane.b32.xlu0 %v1765, 96
        %v1774 = vpop.permute.xlu0 %1773
        %1775 = vrot.lane.b32.xlu0 %v1766, 96
        %v1776 = vpop.permute.xlu0 %1775
        %1777 = vrot.lane.b32.xlu0 %v1765, 64
        %v1778 = vpop.permute.xlu0 %1777
        %1779 = vrot.lane.b32.xlu0 %v1766, 64
        %v1780 = vpop.permute.xlu0 %1779
        %1781 = vrot.lane.b32.xlu0 %v1765, 32
        %v1782 = vpop.permute.xlu0 %1781
        %1783 = vrot.lane.b32.xlu0 %v1766, 32
        %v1784 = vpop.permute.xlu0 %1783
        %1787 = vrot.lane.b32.xlu0 %v1767, 96
        %v1788 = vpop.permute.xlu0 %1787
        %1789 = vrot.lane.b32.xlu0 %v1768, 96
        %v1790 = vpop.permute.xlu0 %1789
        %1791 = vrot.lane.b32.xlu0 %v1767, 64
        %v1792 = vpop.permute.xlu0 %1791
        %1793 = vrot.lane.b32.xlu0 %v1768, 64
        %v1794 = vpop.permute.xlu0 %1793
        %1795 = vrot.lane.b32.xlu0 %v1767, 32
        %v1796 = vpop.permute.xlu0 %1795
        %1797 = vrot.lane.b32.xlu0 %v1768, 32
        %v1798 = vpop.permute.xlu0 %1797
        %1801 = vrot.lane.b32.xlu0 %v1769, 96
        %v1802 = vpop.permute.xlu0 %1801
        %1803 = vrot.lane.b32.xlu0 %v1770, 96
        %v1804 = vpop.permute.xlu0 %1803
        %1807 = vrot.lane.b32.xlu0 %v1769, 64
        %v1808 = vpop.permute.xlu0 %1807
        %1809 = vrot.lane.b32.xlu0 %v1770, 64
        %v1810 = vpop.permute.xlu0 %1809
        %1813 = vrot.lane.b32.xlu0 %v1769, 32
        %v1814 = vpop.permute.xlu0 %1813
        %1815 = vrot.lane.b32.xlu0 %v1770, 32
        %v1816 = vpop.permute.xlu0 %1815
        %vm1819 = vcmask 261120
        %v1821 = vsel %vm1819, %v1765, 0
        %v1824 = vsel %vm1819, %v1767, 0
        %1826 = vmatprep.subr.bf16.mxu0 0
        %1827 = vmatpush1.bf16.xpose.msra.mxu0 %v1824
        %1828 = vmatprep.subr.bf16.mxu0 0
        %1829 = vmatpush1.bf16.xpose.msra.mxu0 0
        %1830 = vmatprep.subr.bf16.mxu0 0
        %1831 = vmatpush1.bf16.xpose.msra.mxu0 0
        %1832 = vmatprep.subr.bf16.mxu0 0
        %1833 = vmatpush1.bf16.xpose.msra.mxu0 0
        %1834 = vmatprep.subr.bf16.mxu0 0
        %1835 = vmatpush1.bf16.xpose.msra.mxu0 0
        %1836 = vmatprep.subr.bf16.mxu0 0
        %1837 = vmatpush1.bf16.xpose.msra.mxu0 0
        %1838 = vmatprep.subr.bf16.mxu0 0
        %1839 = vmatpush1.bf16.xpose.msra.mxu0 0
        %1840 = vmatprep.subr.bf16.mxu0 0
        %1841 = vmatpush1.bf16.xpose.msra.mxu0 0
        %1842 = vmatprep.subr.bf16.mxu0 0
        %1843 = vmatpush1.bf16.xpose.msra.mxu0 0
        %1844 = vmatprep.subr.bf16.mxu0 0
        %1845 = vmatpush1.bf16.xpose.msra.mxu0 0
        %1846 = vmatprep.subr.bf16.mxu0 0
        %1847 = vmatpush1.bf16.xpose.msra.mxu0 0
        %1848 = vmatprep.subr.bf16.mxu0 0
        %1849 = vmatpush1.bf16.xpose.msra.mxu0 0
        %1850 = vmatprep.subr.bf16.mxu0 0
        %1851 = vmatpush1.bf16.xpose.msra.mxu0 0
        %1852 = vmatprep.subr.bf16.mxu0 0
        %1853 = vmatpush1.bf16.xpose.msra.mxu0 0
        %1854 = vmatprep.subr.bf16.mxu0 0
        %1855 = vmatpush1.bf16.xpose.msra.mxu0 0
        %1856 = vmatprep.subr.bf16.mxu0 0
        %1857 = vmatpush1.bf16.xpose.msra.mxu0 0
        %1858 = vmatprep.mubr.bf16.mxu0 0
        %1859 = vmatmul.mubr.bf16.gmra.mrb[0].mxu0 %v1821
        %v1860 = vpop.f32.mrb[0].mxu0
        %v1861 = vadd.f32 0.0, %v1860
        %v1862 = vpop.f32.mrb[0].mxu0
        %v1863 = vpop.f32.mrb[0].mxu0
        %v1864 = vadd.f32 0.0, %v1863
        %v1865 = vpop.f32.mrb[0].mxu0
        %1866 = vdwg.mxu0
        %v1868 = vsel %vm1819, %v1766, 0
        %v1871 = vsel %vm1819, %v1768, 0
        %1873 = vmatprep.subr.bf16.mxu0 0
        %1874 = vmatpush1.bf16.xpose.msra.mxu0 %v1871
        %1875 = vmatprep.subr.bf16.mxu0 0
        %1876 = vmatpush1.bf16.xpose.msra.mxu0 0
        %1877 = vmatprep.subr.bf16.mxu0 0
        %1878 = vmatpush1.bf16.xpose.msra.mxu0 0
        %1879 = vmatprep.subr.bf16.mxu0 0
        %1880 = vmatpush1.bf16.xpose.msra.mxu0 0
        %1881 = vmatprep.subr.bf16.mxu0 0
        %1882 = vmatpush1.bf16.xpose.msra.mxu0 0
        %1883 = vmatprep.subr.bf16.mxu0 0
        %1884 = vmatpush1.bf16.xpose.msra.mxu0 0
        %1885 = vmatprep.subr.bf16.mxu0 0
        %1886 = vmatpush1.bf16.xpose.msra.mxu0 0
        %1887 = vmatprep.subr.bf16.mxu0 0
        %1888 = vmatpush1.bf16.xpose.msra.mxu0 0
        %1889 = vmatprep.subr.bf16.mxu0 0
        %1890 = vmatpush1.bf16.xpose.msra.mxu0 0
        %1891 = vmatprep.subr.bf16.mxu0 0
        %1892 = vmatpush1.bf16.xpose.msra.mxu0 0
        %1893 = vmatprep.subr.bf16.mxu0 0
        %1894 = vmatpush1.bf16.xpose.msra.mxu0 0
        %1895 = vmatprep.subr.bf16.mxu0 0
        %1896 = vmatpush1.bf16.xpose.msra.mxu0 0
        %1897 = vmatprep.subr.bf16.mxu0 0
        %1898 = vmatpush1.bf16.xpose.msra.mxu0 0
        %1899 = vmatprep.subr.bf16.mxu0 0
        %1900 = vmatpush1.bf16.xpose.msra.mxu0 0
        %1901 = vmatprep.subr.bf16.mxu0 0
        %1902 = vmatpush1.bf16.xpose.msra.mxu0 0
        %1903 = vmatprep.subr.bf16.mxu0 0
        %1904 = vmatpush1.bf16.xpose.msra.mxu0 0
        %1905 = vmatprep.mubr.bf16.mxu0 0
        %1906 = vmatmul.mubr.bf16.gmra.mrb[0].mxu0 %v1868
        %v1907 = vpop.f32.mrb[0].mxu0
        %v1908 = vadd.f32 0.0, %v1907
        %v1909 = vpop.f32.mrb[0].mxu0
        %v1910 = vpop.f32.mrb[0].mxu0
        %v1911 = vadd.f32 0.0, %v1910
        %v1912 = vpop.f32.mrb[0].mxu0
        %1913 = vdwg.mxu0
        %v1915 = vsel %vm1819, %v1774, 0
        %v1918 = vsel %vm1819, %v1788, 0
        %1920 = vmatprep.subr.bf16.mxu0 0
        %1921 = vmatpush1.bf16.xpose.msra.mxu0 %v1918
        %1922 = vmatprep.subr.bf16.mxu0 0
        %1923 = vmatpush1.bf16.xpose.msra.mxu0 0
        %1924 = vmatprep.subr.bf16.mxu0 0
        %1925 = vmatpush1.bf16.xpose.msra.mxu0 0
        %1926 = vmatprep.subr.bf16.mxu0 0
        %1927 = vmatpush1.bf16.xpose.msra.mxu0 0
        %1928 = vmatprep.subr.bf16.mxu0 0
        %1929 = vmatpush1.bf16.xpose.msra.mxu0 0
        %1930 = vmatprep.subr.bf16.mxu0 0
        %1931 = vmatpush1.bf16.xpose.msra.mxu0 0
        %1932 = vmatprep.subr.bf16.mxu0 0
        %1933 = vmatpush1.bf16.xpose.msra.mxu0 0
        %1934 = vmatprep.subr.bf16.mxu0 0
        %1935 = vmatpush1.bf16.xpose.msra.mxu0 0
        %1936 = vmatprep.subr.bf16.mxu0 0
        %1937 = vmatpush1.bf16.xpose.msra.mxu0 0
        %1938 = vmatprep.subr.bf16.mxu0 0
        %1939 = vmatpush1.bf16.xpose.msra.mxu0 0
        %1940 = vmatprep.subr.bf16.mxu0 0
        %1941 = vmatpush1.bf16.xpose.msra.mxu0 0
        %1942 = vmatprep.subr.bf16.mxu0 0
        %1943 = vmatpush1.bf16.xpose.msra.mxu0 0
        %1944 = vmatprep.subr.bf16.mxu0 0
        %1945 = vmatpush1.bf16.xpose.msra.mxu0 0
        %1946 = vmatprep.subr.bf16.mxu0 0
        %1947 = vmatpush1.bf16.xpose.msra.mxu0 0
        %1948 = vmatprep.subr.bf16.mxu0 0
        %1949 = vmatpush1.bf16.xpose.msra.mxu0 0
        %1950 = vmatprep.subr.bf16.mxu0 0
        %1951 = vmatpush1.bf16.xpose.msra.mxu0 0
        %1952 = vmatprep.mubr.bf16.mxu0 0
        %1953 = vmatmul.mubr.bf16.gmra.mrb[0].mxu0 %v1915
        %v1954 = vpop.f32.mrb[0].mxu0
        %v1955 = vadd.f32 0.0, %v1954
        %v1956 = vpop.f32.mrb[0].mxu0
        %v1957 = vpop.f32.mrb[0].mxu0
        %v1958 = vadd.f32 0.0, %v1957
        %v1959 = vpop.f32.mrb[0].mxu0
        %1960 = vdwg.mxu0
        %v1962 = vsel %vm1819, %v1776, 0
        %v1965 = vsel %vm1819, %v1790, 0
        %1967 = vmatprep.subr.bf16.mxu0 0
        %1968 = vmatpush1.bf16.xpose.msra.mxu0 %v1965
        %1969 = vmatprep.subr.bf16.mxu0 0
        %1970 = vmatpush1.bf16.xpose.msra.mxu0 0
        %1971 = vmatprep.subr.bf16.mxu0 0
        %1972 = vmatpush1.bf16.xpose.msra.mxu0 0
        %1973 = vmatprep.subr.bf16.mxu0 0
        %1974 = vmatpush1.bf16.xpose.msra.mxu0 0
        %1975 = vmatprep.subr.bf16.mxu0 0
        %1976 = vmatpush1.bf16.xpose.msra.mxu0 0
        %1977 = vmatprep.subr.bf16.mxu0 0
        %1978 = vmatpush1.bf16.xpose.msra.mxu0 0
        %1979 = vmatprep.subr.bf16.mxu0 0
        %1980 = vmatpush1.bf16.xpose.msra.mxu0 0
        %1981 = vmatprep.subr.bf16.mxu0 0
        %1982 = vmatpush1.bf16.xpose.msra.mxu0 0
        %1983 = vmatprep.subr.bf16.mxu0 0
        %1984 = vmatpush1.bf16.xpose.msra.mxu0 0
        %1985 = vmatprep.subr.bf16.mxu0 0
        %1986 = vmatpush1.bf16.xpose.msra.mxu0 0
        %1987 = vmatprep.subr.bf16.mxu0 0
        %1988 = vmatpush1.bf16.xpose.msra.mxu0 0
        %1989 = vmatprep.subr.bf16.mxu0 0
        %1990 = vmatpush1.bf16.xpose.msra.mxu0 0
        %1991 = vmatprep.subr.bf16.mxu0 0
        %1992 = vmatpush1.bf16.xpose.msra.mxu0 0
        %1993 = vmatprep.subr.bf16.mxu0 0
        %1994 = vmatpush1.bf16.xpose.msra.mxu0 0
        %1995 = vmatprep.subr.bf16.mxu0 0
        %1996 = vmatpush1.bf16.xpose.msra.mxu0 0
        %1997 = vmatprep.subr.bf16.mxu0 0
        %1998 = vmatpush1.bf16.xpose.msra.mxu0 0
        %1999 = vmatprep.mubr.bf16.mxu0 0
        %2000 = vmatmul.mubr.bf16.gmra.mrb[0].mxu0 %v1962
        %v2001 = vpop.f32.mrb[0].mxu0
        %v2002 = vadd.f32 0.0, %v2001
        %v2003 = vpop.f32.mrb[0].mxu0
        %v2004 = vpop.f32.mrb[0].mxu0
        %v2005 = vadd.f32 0.0, %v2004
        %v2006 = vpop.f32.mrb[0].mxu0
        %2007 = vdwg.mxu0
        %v2009 = vsel %vm1819, %v1778, 0
        %v2012 = vsel %vm1819, %v1792, 0
        %2014 = vmatprep.subr.bf16.mxu0 0
        %2015 = vmatpush1.bf16.xpose.msra.mxu0 %v2012
        %2016 = vmatprep.subr.bf16.mxu0 0
        %2017 = vmatpush1.bf16.xpose.msra.mxu0 0
        %2018 = vmatprep.subr.bf16.mxu0 0
        %2019 = vmatpush1.bf16.xpose.msra.mxu0 0
        %2020 = vmatprep.subr.bf16.mxu0 0
        %2021 = vmatpush1.bf16.xpose.msra.mxu0 0
        %2022 = vmatprep.subr.bf16.mxu0 0
        %2023 = vmatpush1.bf16.xpose.msra.mxu0 0
        %2024 = vmatprep.subr.bf16.mxu0 0
        %2025 = vmatpush1.bf16.xpose.msra.mxu0 0
        %2026 = vmatprep.subr.bf16.mxu0 0
        %2027 = vmatpush1.bf16.xpose.msra.mxu0 0
        %2028 = vmatprep.subr.bf16.mxu0 0
        %2029 = vmatpush1.bf16.xpose.msra.mxu0 0
        %2030 = vmatprep.subr.bf16.mxu0 0
        %2031 = vmatpush1.bf16.xpose.msra.mxu0 0
        %2032 = vmatprep.subr.bf16.mxu0 0
        %2033 = vmatpush1.bf16.xpose.msra.mxu0 0
        %2034 = vmatprep.subr.bf16.mxu0 0
        %2035 = vmatpush1.bf16.xpose.msra.mxu0 0
        %2036 = vmatprep.subr.bf16.mxu0 0
        %2037 = vmatpush1.bf16.xpose.msra.mxu0 0
        %2038 = vmatprep.subr.bf16.mxu0 0
        %2039 = vmatpush1.bf16.xpose.msra.mxu0 0
        %2040 = vmatprep.subr.bf16.mxu0 0
        %2041 = vmatpush1.bf16.xpose.msra.mxu0 0
        %2042 = vmatprep.subr.bf16.mxu0 0
        %2043 = vmatpush1.bf16.xpose.msra.mxu0 0
        %2044 = vmatprep.subr.bf16.mxu0 0
        %2045 = vmatpush1.bf16.xpose.msra.mxu0 0
        %2046 = vmatprep.mubr.bf16.mxu0 0
        %2047 = vmatmul.mubr.bf16.gmra.mrb[0].mxu0 %v2009
        %v2048 = vpop.f32.mrb[0].mxu0
        %v2049 = vadd.f32 0.0, %v2048
        %v2050 = vpop.f32.mrb[0].mxu0
        %v2051 = vpop.f32.mrb[0].mxu0
        %v2052 = vadd.f32 0.0, %v2051
        %v2053 = vpop.f32.mrb[0].mxu0
        %2054 = vdwg.mxu0
        %v2056 = vsel %vm1819, %v1780, 0
        %v2059 = vsel %vm1819, %v1794, 0
        %2061 = vmatprep.subr.bf16.mxu0 0
        %2062 = vmatpush1.bf16.xpose.msra.mxu0 %v2059
        %2063 = vmatprep.subr.bf16.mxu0 0
        %2064 = vmatpush1.bf16.xpose.msra.mxu0 0
        %2065 = vmatprep.subr.bf16.mxu0 0
        %2066 = vmatpush1.bf16.xpose.msra.mxu0 0
        %2067 = vmatprep.subr.bf16.mxu0 0
        %2068 = vmatpush1.bf16.xpose.msra.mxu0 0
        %2069 = vmatprep.subr.bf16.mxu0 0
        %2070 = vmatpush1.bf16.xpose.msra.mxu0 0
        %2071 = vmatprep.subr.bf16.mxu0 0
        %2072 = vmatpush1.bf16.xpose.msra.mxu0 0
        %2073 = vmatprep.subr.bf16.mxu0 0
        %2074 = vmatpush1.bf16.xpose.msra.mxu0 0
        %2075 = vmatprep.subr.bf16.mxu0 0
        %2076 = vmatpush1.bf16.xpose.msra.mxu0 0
        %2077 = vmatprep.subr.bf16.mxu0 0
        %2078 = vmatpush1.bf16.xpose.msra.mxu0 0
        %2079 = vmatprep.subr.bf16.mxu0 0
        %2080 = vmatpush1.bf16.xpose.msra.mxu0 0
        %2081 = vmatprep.subr.bf16.mxu0 0
        %2082 = vmatpush1.bf16.xpose.msra.mxu0 0
        %2083 = vmatprep.subr.bf16.mxu0 0
        %2084 = vmatpush1.bf16.xpose.msra.mxu0 0
        %2085 = vmatprep.subr.bf16.mxu0 0
        %2086 = vmatpush1.bf16.xpose.msra.mxu0 0
        %2087 = vmatprep.subr.bf16.mxu0 0
        %2088 = vmatpush1.bf16.xpose.msra.mxu0 0
        %2089 = vmatprep.subr.bf16.mxu0 0
        %2090 = vmatpush1.bf16.xpose.msra.mxu0 0
        %2091 = vmatprep.subr.bf16.mxu0 0
        %2092 = vmatpush1.bf16.xpose.msra.mxu0 0
        %2093 = vmatprep.mubr.bf16.mxu0 0
        %2094 = vmatmul.mubr.bf16.gmra.mrb[0].mxu0 %v2056
        %v2095 = vpop.f32.mrb[0].mxu0
        %v2096 = vadd.f32 0.0, %v2095
        %v2097 = vpop.f32.mrb[0].mxu0
        %v2098 = vpop.f32.mrb[0].mxu0
        %v2099 = vadd.f32 0.0, %v2098
        %v2100 = vpop.f32.mrb[0].mxu0
        %2101 = vdwg.mxu0
        %v2103 = vsel %vm1819, %v1782, 0
        %v2106 = vsel %vm1819, %v1796, 0
        %2108 = vmatprep.subr.bf16.mxu0 0
        %2109 = vmatpush1.bf16.xpose.msra.mxu0 %v2106
        %2110 = vmatprep.subr.bf16.mxu0 0
        %2111 = vmatpush1.bf16.xpose.msra.mxu0 0
        %2112 = vmatprep.subr.bf16.mxu0 0
        %2113 = vmatpush1.bf16.xpose.msra.mxu0 0
        %2114 = vmatprep.subr.bf16.mxu0 0
        %2115 = vmatpush1.bf16.xpose.msra.mxu0 0
        %2116 = vmatprep.subr.bf16.mxu0 0
        %2117 = vmatpush1.bf16.xpose.msra.mxu0 0
        %2118 = vmatprep.subr.bf16.mxu0 0
        %2119 = vmatpush1.bf16.xpose.msra.mxu0 0
        %2120 = vmatprep.subr.bf16.mxu0 0
        %2121 = vmatpush1.bf16.xpose.msra.mxu0 0
        %2122 = vmatprep.subr.bf16.mxu0 0
        %2123 = vmatpush1.bf16.xpose.msra.mxu0 0
        %2124 = vmatprep.subr.bf16.mxu0 0
        %2125 = vmatpush1.bf16.xpose.msra.mxu0 0
        %2126 = vmatprep.subr.bf16.mxu0 0
        %2127 = vmatpush1.bf16.xpose.msra.mxu0 0
        %2128 = vmatprep.subr.bf16.mxu0 0
        %2129 = vmatpush1.bf16.xpose.msra.mxu0 0
        %2130 = vmatprep.subr.bf16.mxu0 0
        %2131 = vmatpush1.bf16.xpose.msra.mxu0 0
        %2132 = vmatprep.subr.bf16.mxu0 0
        %2133 = vmatpush1.bf16.xpose.msra.mxu0 0
        %2134 = vmatprep.subr.bf16.mxu0 0
        %2135 = vmatpush1.bf16.xpose.msra.mxu0 0
        %2136 = vmatprep.subr.bf16.mxu0 0
        %2137 = vmatpush1.bf16.xpose.msra.mxu0 0
        %2138 = vmatprep.subr.bf16.mxu0 0
        %2139 = vmatpush1.bf16.xpose.msra.mxu0 0
        %2140 = vmatprep.mubr.bf16.mxu0 0
        %2141 = vmatmul.mubr.bf16.gmra.mrb[0].mxu0 %v2103
        %v2142 = vpop.f32.mrb[0].mxu0
        %v2143 = vadd.f32 0.0, %v2142
        %v2144 = vpop.f32.mrb[0].mxu0
        %v2145 = vpop.f32.mrb[0].mxu0
        %v2146 = vadd.f32 0.0, %v2145
        %v2147 = vpop.f32.mrb[0].mxu0
        %2148 = vdwg.mxu0
        %v2150 = vsel %vm1819, %v1784, 0
        %v2153 = vsel %vm1819, %v1798, 0
        %2155 = vmatprep.subr.bf16.mxu0 0
        %2156 = vmatpush1.bf16.xpose.msra.mxu0 %v2153
        %2157 = vmatprep.subr.bf16.mxu0 0
        %2158 = vmatpush1.bf16.xpose.msra.mxu0 0
        %2159 = vmatprep.subr.bf16.mxu0 0
        %2160 = vmatpush1.bf16.xpose.msra.mxu0 0
        %2161 = vmatprep.subr.bf16.mxu0 0
        %2162 = vmatpush1.bf16.xpose.msra.mxu0 0
        %2163 = vmatprep.subr.bf16.mxu0 0
        %2164 = vmatpush1.bf16.xpose.msra.mxu0 0
        %2165 = vmatprep.subr.bf16.mxu0 0
        %2166 = vmatpush1.bf16.xpose.msra.mxu0 0
        %2167 = vmatprep.subr.bf16.mxu0 0
        %2168 = vmatpush1.bf16.xpose.msra.mxu0 0
        %2169 = vmatprep.subr.bf16.mxu0 0
        %2170 = vmatpush1.bf16.xpose.msra.mxu0 0
        %2171 = vmatprep.subr.bf16.mxu0 0
        %2172 = vmatpush1.bf16.xpose.msra.mxu0 0
        %2173 = vmatprep.subr.bf16.mxu0 0
        %2174 = vmatpush1.bf16.xpose.msra.mxu0 0
        %2175 = vmatprep.subr.bf16.mxu0 0
        %2176 = vmatpush1.bf16.xpose.msra.mxu0 0
        %2177 = vmatprep.subr.bf16.mxu0 0
        %2178 = vmatpush1.bf16.xpose.msra.mxu0 0
        %2179 = vmatprep.subr.bf16.mxu0 0
        %2180 = vmatpush1.bf16.xpose.msra.mxu0 0
        %2181 = vmatprep.subr.bf16.mxu0 0
        %2182 = vmatpush1.bf16.xpose.msra.mxu0 0
        %2183 = vmatprep.subr.bf16.mxu0 0
        %2184 = vmatpush1.bf16.xpose.msra.mxu0 0
        %2185 = vmatprep.subr.bf16.mxu0 0
        %2186 = vmatpush1.bf16.xpose.msra.mxu0 0
        %2187 = vmatprep.mubr.bf16.mxu0 0
        %2188 = vmatmul.mubr.bf16.gmra.mrb[0].mxu0 %v2150
        %v2189 = vpop.f32.mrb[0].mxu0
        %v2190 = vadd.f32 0.0, %v2189
        %v2191 = vpop.f32.mrb[0].mxu0
        %v2192 = vpop.f32.mrb[0].mxu0
        %v2193 = vadd.f32 0.0, %v2192
        %v2194 = vpop.f32.mrb[0].mxu0
        %2195 = vdwg.mxu0
        %vm2196 = vcmask 130048
        %v2197 = vsel %vm2196, %v1861, -inf
        %2198 = vmax.xlane.f32.xlu0 %v2197
        %v2199 = vpop.xlane.xlu0 %2198
        %v2200 = vsel %vm2196, %v1864, -inf
        %2201 = vmax.xlane.f32.xlu0 %v2200
        %v2202 = vpop.xlane.xlu0 %2201
        %v2203 = vsel %vm2196, %v1908, -inf
        %2204 = vmax.xlane.f32.xlu0 %v2203
        %v2205 = vpop.xlane.xlu0 %2204
        %v2206 = vsel %vm2196, %v1911, -inf
        %2207 = vmax.xlane.f32.xlu0 %v2206
        %v2208 = vpop.xlane.xlu0 %2207
        %v2209 = vsel %vm2196, %v1955, -inf
        %2210 = vmax.xlane.f32.xlu0 %v2209
        %v2211 = vpop.xlane.xlu0 %2210
        %v2212 = vsel %vm2196, %v1958, -inf
        %2213 = vmax.xlane.f32.xlu0 %v2212
        %v2214 = vpop.xlane.xlu0 %2213
        %v2215 = vsel %vm2196, %v2002, -inf
        %2216 = vmax.xlane.f32.xlu0 %v2215
        %v2217 = vpop.xlane.xlu0 %2216
        %v2218 = vsel %vm2196, %v2005, -inf
        %2219 = vmax.xlane.f32.xlu0 %v2218
        %v2220 = vpop.xlane.xlu0 %2219
        %v2221 = vsel %vm2196, %v2049, -inf
        %2222 = vmax.xlane.f32.xlu0 %v2221
        %v2223 = vpop.xlane.xlu0 %2222
        %v2224 = vsel %vm2196, %v2052, -inf
        %2225 = vmax.xlane.f32.xlu0 %v2224
        %v2226 = vpop.xlane.xlu0 %2225
        %v2227 = vsel %vm2196, %v2096, -inf
        %2228 = vmax.xlane.f32.xlu0 %v2227
        %v2229 = vpop.xlane.xlu0 %2228
        %v2230 = vsel %vm2196, %v2099, -inf
        %2231 = vmax.xlane.f32.xlu0 %v2230
        %v2232 = vpop.xlane.xlu0 %2231
        %v2233 = vsel %vm2196, %v2143, -inf
        %2234 = vmax.xlane.f32.xlu0 %v2233
        %v2235 = vpop.xlane.xlu0 %2234
        %v2236 = vsel %vm2196, %v2146, -inf
        %2237 = vmax.xlane.f32.xlu0 %v2236
        %v2238 = vpop.xlane.xlu0 %2237
        %v2239 = vsel %vm2196, %v2190, -inf
        %2240 = vmax.xlane.f32.xlu0 %v2239
        %v2241 = vpop.xlane.xlu0 %2240
        %v2242 = vsel %vm2196, %v2193, -inf
        %2243 = vmax.xlane.f32.xlu0 %v2242
        %v2244 = vpop.xlane.xlu0 %2243
        %v2245 = vsub.f32 %v1861, %v2199
        %v2246 = vsub.f32 %v1864, %v2202
        %v2247 = vsub.f32 %v1908, %v2205
        %v2248 = vsub.f32 %v1911, %v2208
        %v2249 = vsub.f32 %v1955, %v2211
        %v2250 = vsub.f32 %v1958, %v2214
        %v2251 = vsub.f32 %v2002, %v2217
        %v2252 = vsub.f32 %v2005, %v2220
        %v2253 = vsub.f32 %v2049, %v2223
        %v2254 = vsub.f32 %v2052, %v2226
        %v2255 = vsub.f32 %v2096, %v2229
        %v2256 = vsub.f32 %v2099, %v2232
        %v2257 = vsub.f32 %v2143, %v2235
        %v2258 = vsub.f32 %v2146, %v2238
        %v2259 = vsub.f32 %v2190, %v2241
        %v2260 = vsub.f32 %v2193, %v2244
        %v2261 = vmul.f32 %v2245, 1.442695
        %v2262 = vpow.pop %v2261
        %v2263 = vmul.f32 %v2246, 1.442695
        %v2264 = vpow.pop %v2263
        %v2265 = vmul.f32 %v2247, 1.442695
        %v2266 = vpow.pop %v2265
        %v2267 = vmul.f32 %v2248, 1.442695
        %v2268 = vpow.pop %v2267
        %v2269 = vmul.f32 %v2249, 1.442695
        %v2270 = vpow.pop %v2269
        %v2271 = vmul.f32 %v2250, 1.442695
        %v2272 = vpow.pop %v2271
        %v2273 = vmul.f32 %v2251, 1.442695
        %v2274 = vpow.pop %v2273
        %v2275 = vmul.f32 %v2252, 1.442695
        %v2276 = vpow.pop %v2275
        %v2277 = vmul.f32 %v2253, 1.442695
        %v2278 = vpow.pop %v2277
        %v2279 = vmul.f32 %v2254, 1.442695
        %v2280 = vpow.pop %v2279
        %v2281 = vmul.f32 %v2255, 1.442695
        %v2282 = vpow.pop %v2281
        %v2283 = vmul.f32 %v2256, 1.442695
        %v2284 = vpow.pop %v2283
        %v2285 = vmul.f32 %v2257, 1.442695
        %v2286 = vpow.pop %v2285
        %v2287 = vmul.f32 %v2258, 1.442695
        %v2288 = vpow.pop %v2287
        %v2289 = vmul.f32 %v2259, 1.442695
        %v2290 = vpow.pop %v2289
        %v2291 = vmul.f32 %v2260, 1.442695
        %v2292 = vpow.pop %v2291
        %v2293 = vsel %vm2196, %v2262, 0.0
        %2294 = vadd.xlane.f32.xlu0 %v2293
        %v2295 = vpop.xlane.xlu0 %2294
        %v2296 = vsel %vm2196, %v2264, 0.0
        %2297 = vadd.xlane.f32.xlu0 %v2296
        %v2298 = vpop.xlane.xlu0 %2297
        %v2299 = vsel %vm2196, %v2266, 0.0
        %2300 = vadd.xlane.f32.xlu0 %v2299
        %v2301 = vpop.xlane.xlu0 %2300
        %v2302 = vsel %vm2196, %v2268, 0.0
        %2303 = vadd.xlane.f32.xlu0 %v2302
        %v2304 = vpop.xlane.xlu0 %2303
        %v2305 = vsel %vm2196, %v2270, 0.0
        %2306 = vadd.xlane.f32.xlu0 %v2305
        %v2307 = vpop.xlane.xlu0 %2306
        %v2308 = vsel %vm2196, %v2272, 0.0
        %2309 = vadd.xlane.f32.xlu0 %v2308
        %v2310 = vpop.xlane.xlu0 %2309
        %v2311 = vsel %vm2196, %v2274, 0.0
        %2312 = vadd.xlane.f32.xlu0 %v2311
        %v2313 = vpop.xlane.xlu0 %2312
        %v2314 = vsel %vm2196, %v2276, 0.0
        %2315 = vadd.xlane.f32.xlu0 %v2314
        %v2316 = vpop.xlane.xlu0 %2315
        %v2317 = vsel %vm2196, %v2278, 0.0
        %2318 = vadd.xlane.f32.xlu0 %v2317
        %v2319 = vpop.xlane.xlu0 %2318
        %v2320 = vsel %vm2196, %v2280, 0.0
        %2321 = vadd.xlane.f32.xlu0 %v2320
        %v2322 = vpop.xlane.xlu0 %2321
        %v2323 = vsel %vm2196, %v2282, 0.0
        %2324 = vadd.xlane.f32.xlu0 %v2323
        %v2325 = vpop.xlane.xlu0 %2324
        %v2326 = vsel %vm2196, %v2284, 0.0
        %2327 = vadd.xlane.f32.xlu0 %v2326
        %v2328 = vpop.xlane.xlu0 %2327
        %v2329 = vsel %vm2196, %v2286, 0.0
        %2330 = vadd.xlane.f32.xlu0 %v2329
        %v2331 = vpop.xlane.xlu0 %2330
        %v2332 = vsel %vm2196, %v2288, 0.0
        %2333 = vadd.xlane.f32.xlu0 %v2332
        %v2334 = vpop.xlane.xlu0 %2333
        %v2335 = vsel %vm2196, %v2290, 0.0
        %2336 = vadd.xlane.f32.xlu0 %v2335
        %v2337 = vpop.xlane.xlu0 %2336
        %v2338 = vsel %vm2196, %v2292, 0.0
        %2339 = vadd.xlane.f32.xlu0 %v2338
        %v2340 = vpop.xlane.xlu0 %2339
        %v2341 = vrcp.pop %v2295
        %v2342 = vrcp.pop %v2298
        %v2343 = vrcp.pop %v2301
        %v2344 = vrcp.pop %v2304
        %v2345 = vrcp.pop %v2307
        %v2346 = vrcp.pop %v2310
        %v2347 = vrcp.pop %v2313
        %v2348 = vrcp.pop %v2316
        %v2349 = vrcp.pop %v2319
        %v2350 = vrcp.pop %v2322
        %v2351 = vrcp.pop %v2325
        %v2352 = vrcp.pop %v2328
        %v2353 = vrcp.pop %v2331
        %v2354 = vrcp.pop %v2334
        %v2355 = vrcp.pop %v2337
        %v2356 = vrcp.pop %v2340
        %v2357 = vmul.f32 %v2262, %v2341
        %v2358 = vmul.f32 %v2264, %v2342
        %v2359 = vmul.f32 %v2266, %v2343
        %v2360 = vmul.f32 %v2268, %v2344
        %v2361 = vmul.f32 %v2270, %v2345
        %v2362 = vmul.f32 %v2272, %v2346
        %v2363 = vmul.f32 %v2274, %v2347
        %v2364 = vmul.f32 %v2276, %v2348
        %v2365 = vmul.f32 %v2278, %v2349
        %v2366 = vmul.f32 %v2280, %v2350
        %v2367 = vmul.f32 %v2282, %v2351
        %v2368 = vmul.f32 %v2284, %v2352
        %v2369 = vmul.f32 %v2286, %v2353
        %v2370 = vmul.f32 %v2288, %v2354
        %v2371 = vmul.f32 %v2290, %v2355
        %v2372 = vmul.f32 %v2292, %v2356
        %v2373 = vpack.c.bf16 %v2358, %v2357
        %v2374 = vpack.c.bf16 %v2360, %v2359
        %v2375 = vpack.c.bf16 %v2362, %v2361
        %v2376 = vpack.c.bf16 %v2364, %v2363
        %v2377 = vpack.c.bf16 %v2366, %v2365
        %v2378 = vpack.c.bf16 %v2368, %v2367
        %v2379 = vpack.c.bf16 %v2370, %v2369
        %v2380 = vpack.c.bf16 %v2372, %v2371
        %v2382 = vsel %vm2196, %v2373, 0
        %2384 = vmatprep.subr.bf16.mxu0 0
        %2385 = vmatpush1.bf16.msra.mxu0 %v1769
        %2386 = vmatprep.subr.bf16.mxu0 0
        %2387 = vmatpush1.bf16.msra.mxu0 0
        %2388 = vmatprep.subr.bf16.mxu0 0
        %2389 = vmatpush1.bf16.msra.mxu0 0
        %2390 = vmatprep.subr.bf16.mxu0 0
        %2391 = vmatpush1.bf16.msra.mxu0 0
        %2392 = vmatprep.subr.bf16.mxu0 0
        %2393 = vmatpush1.bf16.msra.mxu0 0
        %2394 = vmatprep.subr.bf16.mxu0 0
        %2395 = vmatpush1.bf16.msra.mxu0 0
        %2396 = vmatprep.subr.bf16.mxu0 0
        %2397 = vmatpush1.bf16.msra.mxu0 0
        %2398 = vmatprep.subr.bf16.mxu0 0
        %2399 = vmatpush1.bf16.msra.mxu0 0
        %2400 = vmatprep.subr.bf16.mxu0 0
        %2401 = vmatpush1.bf16.msra.mxu0 0
        %2402 = vmatprep.subr.bf16.mxu0 0
        %2403 = vmatpush1.bf16.msra.mxu0 0
        %2404 = vmatprep.subr.bf16.mxu0 0
        %2405 = vmatpush1.bf16.msra.mxu0 0
        %2406 = vmatprep.subr.bf16.mxu0 0
        %2407 = vmatpush1.bf16.msra.mxu0 0
        %2408 = vmatprep.subr.bf16.mxu0 0
        %2409 = vmatpush1.bf16.msra.mxu0 0
        %2410 = vmatprep.subr.bf16.mxu0 0
        %2411 = vmatpush1.bf16.msra.mxu0 0
        %2412 = vmatprep.subr.bf16.mxu0 0
        %2413 = vmatpush1.bf16.msra.mxu0 0
        %2414 = vmatprep.subr.bf16.mxu0 0
        %2415 = vmatpush1.bf16.msra.mxu0 0
        %2416 = vmatprep.mubr.bf16.mxu0 0
        %2417 = vmatmul.mubr.bf16.gmra.mrb[0].mxu0 %v2382
        %v2418 = vpop.f32.mrb[0].mxu0
        %v2419 = vadd.f32 0.0, %v2418
        %v2420 = vpop.f32.mrb[0].mxu0
        %v2421 = vpop.f32.mrb[0].mxu0
        %v2422 = vadd.f32 0.0, %v2421
        %v2423 = vpop.f32.mrb[0].mxu0
        %2424 = vdwg.mxu0
        %v2426 = vsel %vm2196, %v2374, 0
        %2428 = vmatprep.subr.bf16.mxu0 0
        %2429 = vmatpush1.bf16.msra.mxu0 %v1770
        %2430 = vmatprep.subr.bf16.mxu0 0
        %2431 = vmatpush1.bf16.msra.mxu0 0
        %2432 = vmatprep.subr.bf16.mxu0 0
        %2433 = vmatpush1.bf16.msra.mxu0 0
        %2434 = vmatprep.subr.bf16.mxu0 0
        %2435 = vmatpush1.bf16.msra.mxu0 0
        %2436 = vmatprep.subr.bf16.mxu0 0
        %2437 = vmatpush1.bf16.msra.mxu0 0
        %2438 = vmatprep.subr.bf16.mxu0 0
        %2439 = vmatpush1.bf16.msra.mxu0 0
        %2440 = vmatprep.subr.bf16.mxu0 0
        %2441 = vmatpush1.bf16.msra.mxu0 0
        %2442 = vmatprep.subr.bf16.mxu0 0
        %2443 = vmatpush1.bf16.msra.mxu0 0
        %2444 = vmatprep.subr.bf16.mxu0 0
        %2445 = vmatpush1.bf16.msra.mxu0 0
        %2446 = vmatprep.subr.bf16.mxu0 0
        %2447 = vmatpush1.bf16.msra.mxu0 0
        %2448 = vmatprep.subr.bf16.mxu0 0
        %2449 = vmatpush1.bf16.msra.mxu0 0
        %2450 = vmatprep.subr.bf16.mxu0 0
        %2451 = vmatpush1.bf16.msra.mxu0 0
        %2452 = vmatprep.subr.bf16.mxu0 0
        %2453 = vmatpush1.bf16.msra.mxu0 0
        %2454 = vmatprep.subr.bf16.mxu0 0
        %2455 = vmatpush1.bf16.msra.mxu0 0
        %2456 = vmatprep.subr.bf16.mxu0 0
        %2457 = vmatpush1.bf16.msra.mxu0 0
        %2458 = vmatprep.subr.bf16.mxu0 0
        %2459 = vmatpush1.bf16.msra.mxu0 0
        %2460 = vmatprep.mubr.bf16.mxu0 0
        %2461 = vmatmul.mubr.bf16.gmra.mrb[0].mxu0 %v2426
        %v2462 = vpop.f32.mrb[0].mxu0
        %v2463 = vadd.f32 0.0, %v2462
        %v2464 = vpop.f32.mrb[0].mxu0
        %v2465 = vpop.f32.mrb[0].mxu0
        %v2466 = vadd.f32 0.0, %v2465
        %v2467 = vpop.f32.mrb[0].mxu0
        %2468 = vdwg.mxu0
        %v2470 = vsel %vm2196, %v2375, 0
        %2472 = vmatprep.subr.bf16.mxu0 0
        %2473 = vmatpush1.bf16.msra.mxu0 %v1802
        %2474 = vmatprep.subr.bf16.mxu0 0
        %2475 = vmatpush1.bf16.msra.mxu0 0
        %2476 = vmatprep.subr.bf16.mxu0 0
        %2477 = vmatpush1.bf16.msra.mxu0 0
        %2478 = vmatprep.subr.bf16.mxu0 0
        %2479 = vmatpush1.bf16.msra.mxu0 0
        %2480 = vmatprep.subr.bf16.mxu0 0
        %2481 = vmatpush1.bf16.msra.mxu0 0
        %2482 = vmatprep.subr.bf16.mxu0 0
        %2483 = vmatpush1.bf16.msra.mxu0 0
        %2484 = vmatprep.subr.bf16.mxu0 0
        %2485 = vmatpush1.bf16.msra.mxu0 0
        %2486 = vmatprep.subr.bf16.mxu0 0
        %2487 = vmatpush1.bf16.msra.mxu0 0
        %2488 = vmatprep.subr.bf16.mxu0 0
        %2489 = vmatpush1.bf16.msra.mxu0 0
        %2490 = vmatprep.subr.bf16.mxu0 0
        %2491 = vmatpush1.bf16.msra.mxu0 0
        %2492 = vmatprep.subr.bf16.mxu0 0
        %2493 = vmatpush1.bf16.msra.mxu0 0
        %2494 = vmatprep.subr.bf16.mxu0 0
        %2495 = vmatpush1.bf16.msra.mxu0 0
        %2496 = vmatprep.subr.bf16.mxu0 0
        %2497 = vmatpush1.bf16.msra.mxu0 0
        %2498 = vmatprep.subr.bf16.mxu0 0
        %2499 = vmatpush1.bf16.msra.mxu0 0
        %2500 = vmatprep.subr.bf16.mxu0 0
        %2501 = vmatpush1.bf16.msra.mxu0 0
        %2502 = vmatprep.subr.bf16.mxu0 0
        %2503 = vmatpush1.bf16.msra.mxu0 0
        %2504 = vmatprep.mubr.bf16.mxu0 0
        %2505 = vmatmul.mubr.bf16.gmra.mrb[0].mxu0 %v2470
        %v2506 = vpop.f32.mrb[0].mxu0
        %v2507 = vadd.f32 0.0, %v2506
        %v2508 = vpop.f32.mrb[0].mxu0
        %v2509 = vpop.f32.mrb[0].mxu0
        %v2510 = vadd.f32 0.0, %v2509
        %v2511 = vpop.f32.mrb[0].mxu0
        %2512 = vdwg.mxu0
        %v2514 = vsel %vm2196, %v2376, 0
        %2516 = vmatprep.subr.bf16.mxu0 0
        %2517 = vmatpush1.bf16.msra.mxu0 %v1804
        %2518 = vmatprep.subr.bf16.mxu0 0
        %2519 = vmatpush1.bf16.msra.mxu0 0
        %2520 = vmatprep.subr.bf16.mxu0 0
        %2521 = vmatpush1.bf16.msra.mxu0 0
        %2522 = vmatprep.subr.bf16.mxu0 0
        %2523 = vmatpush1.bf16.msra.mxu0 0
        %2524 = vmatprep.subr.bf16.mxu0 0
        %2525 = vmatpush1.bf16.msra.mxu0 0
        %2526 = vmatprep.subr.bf16.mxu0 0
        %2527 = vmatpush1.bf16.msra.mxu0 0
        %2528 = vmatprep.subr.bf16.mxu0 0
        %2529 = vmatpush1.bf16.msra.mxu0 0
        %2530 = vmatprep.subr.bf16.mxu0 0
        %2531 = vmatpush1.bf16.msra.mxu0 0
        %2532 = vmatprep.subr.bf16.mxu0 0
        %2533 = vmatpush1.bf16.msra.mxu0 0
        %2534 = vmatprep.subr.bf16.mxu0 0
        %2535 = vmatpush1.bf16.msra.mxu0 0
        %2536 = vmatprep.subr.bf16.mxu0 0
        %2537 = vmatpush1.bf16.msra.mxu0 0
        %2538 = vmatprep.subr.bf16.mxu0 0
        %2539 = vmatpush1.bf16.msra.mxu0 0
        %2540 = vmatprep.subr.bf16.mxu0 0
        %2541 = vmatpush1.bf16.msra.mxu0 0
        %2542 = vmatprep.subr.bf16.mxu0 0
        %2543 = vmatpush1.bf16.msra.mxu0 0
        %2544 = vmatprep.subr.bf16.mxu0 0
        %2545 = vmatpush1.bf16.msra.mxu0 0
        %2546 = vmatprep.subr.bf16.mxu0 0
        %2547 = vmatpush1.bf16.msra.mxu0 0
        %2548 = vmatprep.mubr.bf16.mxu0 0
        %2549 = vmatmul.mubr.bf16.gmra.mrb[0].mxu0 %v2514
        %v2550 = vpop.f32.mrb[0].mxu0
        %v2551 = vadd.f32 0.0, %v2550
        %v2552 = vpop.f32.mrb[0].mxu0
        %v2553 = vpop.f32.mrb[0].mxu0
        %v2554 = vadd.f32 0.0, %v2553
        %v2555 = vpop.f32.mrb[0].mxu0
        %2556 = vdwg.mxu0
        %v2558 = vsel %vm2196, %v2377, 0
        %2560 = vmatprep.subr.bf16.mxu0 0
        %2561 = vmatpush1.bf16.msra.mxu0 %v1808
        %2562 = vmatprep.subr.bf16.mxu0 0
        %2563 = vmatpush1.bf16.msra.mxu0 0
        %2564 = vmatprep.subr.bf16.mxu0 0
        %2565 = vmatpush1.bf16.msra.mxu0 0
        %2566 = vmatprep.subr.bf16.mxu0 0
        %2567 = vmatpush1.bf16.msra.mxu0 0
        %2568 = vmatprep.subr.bf16.mxu0 0
        %2569 = vmatpush1.bf16.msra.mxu0 0
        %2570 = vmatprep.subr.bf16.mxu0 0
        %2571 = vmatpush1.bf16.msra.mxu0 0
        %2572 = vmatprep.subr.bf16.mxu0 0
        %2573 = vmatpush1.bf16.msra.mxu0 0
        %2574 = vmatprep.subr.bf16.mxu0 0
        %2575 = vmatpush1.bf16.msra.mxu0 0
        %2576 = vmatprep.subr.bf16.mxu0 0
        %2577 = vmatpush1.bf16.msra.mxu0 0
        %2578 = vmatprep.subr.bf16.mxu0 0
        %2579 = vmatpush1.bf16.msra.mxu0 0
        %2580 = vmatprep.subr.bf16.mxu0 0
        %2581 = vmatpush1.bf16.msra.mxu0 0
        %2582 = vmatprep.subr.bf16.mxu0 0
        %2583 = vmatpush1.bf16.msra.mxu0 0
        %2584 = vmatprep.subr.bf16.mxu0 0
        %2585 = vmatpush1.bf16.msra.mxu0 0
        %2586 = vmatprep.subr.bf16.mxu0 0
        %2587 = vmatpush1.bf16.msra.mxu0 0
        %2588 = vmatprep.subr.bf16.mxu0 0
        %2589 = vmatpush1.bf16.msra.mxu0 0
        %2590 = vmatprep.subr.bf16.mxu0 0
        %2591 = vmatpush1.bf16.msra.mxu0 0
        %2592 = vmatprep.mubr.bf16.mxu0 0
        %2593 = vmatmul.mubr.bf16.gmra.mrb[0].mxu0 %v2558
        %v2594 = vpop.f32.mrb[0].mxu0
        %v2595 = vadd.f32 0.0, %v2594
        %v2596 = vpop.f32.mrb[0].mxu0
        %v2597 = vpop.f32.mrb[0].mxu0
        %v2598 = vadd.f32 0.0, %v2597
        %v2599 = vpop.f32.mrb[0].mxu0
        %2600 = vdwg.mxu0
        %v2602 = vsel %vm2196, %v2378, 0
        %2604 = vmatprep.subr.bf16.mxu0 0
        %2605 = vmatpush1.bf16.msra.mxu0 %v1810
        %2606 = vmatprep.subr.bf16.mxu0 0
        %2607 = vmatpush1.bf16.msra.mxu0 0
        %2608 = vmatprep.subr.bf16.mxu0 0
        %2609 = vmatpush1.bf16.msra.mxu0 0
        %2610 = vmatprep.subr.bf16.mxu0 0
        %2611 = vmatpush1.bf16.msra.mxu0 0
        %2612 = vmatprep.subr.bf16.mxu0 0
        %2613 = vmatpush1.bf16.msra.mxu0 0
        %2614 = vmatprep.subr.bf16.mxu0 0
        %2615 = vmatpush1.bf16.msra.mxu0 0
        %2616 = vmatprep.subr.bf16.mxu0 0
        %2617 = vmatpush1.bf16.msra.mxu0 0
        %2618 = vmatprep.subr.bf16.mxu0 0
        %2619 = vmatpush1.bf16.msra.mxu0 0
        %2620 = vmatprep.subr.bf16.mxu0 0
        %2621 = vmatpush1.bf16.msra.mxu0 0
        %2622 = vmatprep.subr.bf16.mxu0 0
        %2623 = vmatpush1.bf16.msra.mxu0 0
        %2624 = vmatprep.subr.bf16.mxu0 0
        %2625 = vmatpush1.bf16.msra.mxu0 0
        %2626 = vmatprep.subr.bf16.mxu0 0
        %2627 = vmatpush1.bf16.msra.mxu0 0
        %2628 = vmatprep.subr.bf16.mxu0 0
        %2629 = vmatpush1.bf16.msra.mxu0 0
        %2630 = vmatprep.subr.bf16.mxu0 0
        %2631 = vmatpush1.bf16.msra.mxu0 0
        %2632 = vmatprep.subr.bf16.mxu0 0
        %2633 = vmatpush1.bf16.msra.mxu0 0
        %2634 = vmatprep.subr.bf16.mxu0 0
        %2635 = vmatpush1.bf16.msra.mxu0 0
        %2636 = vmatprep.mubr.bf16.mxu0 0
        %2637 = vmatmul.mubr.bf16.gmra.mrb[0].mxu0 %v2602
        %v2638 = vpop.f32.mrb[0].mxu0
        %v2639 = vadd.f32 0.0, %v2638
        %v2640 = vpop.f32.mrb[0].mxu0
        %v2641 = vpop.f32.mrb[0].mxu0
        %v2642 = vadd.f32 0.0, %v2641
        %v2643 = vpop.f32.mrb[0].mxu0
        %2644 = vdwg.mxu0
        %v2646 = vsel %vm2196, %v2379, 0
        %2648 = vmatprep.subr.bf16.mxu0 0
        %2649 = vmatpush1.bf16.msra.mxu0 %v1814
        %2650 = vmatprep.subr.bf16.mxu0 0
        %2651 = vmatpush1.bf16.msra.mxu0 0
        %2652 = vmatprep.subr.bf16.mxu0 0
        %2653 = vmatpush1.bf16.msra.mxu0 0
        %2654 = vmatprep.subr.bf16.mxu0 0
        %2655 = vmatpush1.bf16.msra.mxu0 0
        %2656 = vmatprep.subr.bf16.mxu0 0
        %2657 = vmatpush1.bf16.msra.mxu0 0
        %2658 = vmatprep.subr.bf16.mxu0 0
        %2659 = vmatpush1.bf16.msra.mxu0 0
        %2660 = vmatprep.subr.bf16.mxu0 0
        %2661 = vmatpush1.bf16.msra.mxu0 0
        %2662 = vmatprep.subr.bf16.mxu0 0
        %2663 = vmatpush1.bf16.msra.mxu0 0
        %2664 = vmatprep.subr.bf16.mxu0 0
        %2665 = vmatpush1.bf16.msra.mxu0 0
        %2666 = vmatprep.subr.bf16.mxu0 0
        %2667 = vmatpush1.bf16.msra.mxu0 0
        %2668 = vmatprep.subr.bf16.mxu0 0
        %2669 = vmatpush1.bf16.msra.mxu0 0
        %2670 = vmatprep.subr.bf16.mxu0 0
        %2671 = vmatpush1.bf16.msra.mxu0 0
        %2672 = vmatprep.subr.bf16.mxu0 0
        %2673 = vmatpush1.bf16.msra.mxu0 0
        %2674 = vmatprep.subr.bf16.mxu0 0
        %2675 = vmatpush1.bf16.msra.mxu0 0
        %2676 = vmatprep.subr.bf16.mxu0 0
        %2677 = vmatpush1.bf16.msra.mxu0 0
        %2678 = vmatprep.subr.bf16.mxu0 0
        %2679 = vmatpush1.bf16.msra.mxu0 0
        %2680 = vmatprep.mubr.bf16.mxu0 0
        %2681 = vmatmul.mubr.bf16.gmra.mrb[0].mxu0 %v2646
        %v2682 = vpop.f32.mrb[0].mxu0
        %v2683 = vadd.f32 0.0, %v2682
        %v2684 = vpop.f32.mrb[0].mxu0
        %v2685 = vpop.f32.mrb[0].mxu0
        %v2686 = vadd.f32 0.0, %v2685
        %v2687 = vpop.f32.mrb[0].mxu0
        %2688 = vdwg.mxu0
        %v2690 = vsel %vm2196, %v2380, 0
        %2692 = vmatprep.subr.bf16.mxu0 0
        %2693 = vmatpush1.bf16.msra.mxu0 %v1816
        %2694 = vmatprep.subr.bf16.mxu0 0
        %2695 = vmatpush1.bf16.msra.mxu0 0
        %2696 = vmatprep.subr.bf16.mxu0 0
        %2697 = vmatpush1.bf16.msra.mxu0 0
        %2698 = vmatprep.subr.bf16.mxu0 0
        %2699 = vmatpush1.bf16.msra.mxu0 0
        %2700 = vmatprep.subr.bf16.mxu0 0
        %2701 = vmatpush1.bf16.msra.mxu0 0
        %2702 = vmatprep.subr.bf16.mxu0 0
        %2703 = vmatpush1.bf16.msra.mxu0 0
        %2704 = vmatprep.subr.bf16.mxu0 0
        %2705 = vmatpush1.bf16.msra.mxu0 0
        %2706 = vmatprep.subr.bf16.mxu0 0
        %2707 = vmatpush1.bf16.msra.mxu0 0
        %2708 = vmatprep.subr.bf16.mxu0 0
        %2709 = vmatpush1.bf16.msra.mxu0 0
        %2710 = vmatprep.subr.bf16.mxu0 0
        %2711 = vmatpush1.bf16.msra.mxu0 0
        %2712 = vmatprep.subr.bf16.mxu0 0
        %2713 = vmatpush1.bf16.msra.mxu0 0
        %2714 = vmatprep.subr.bf16.mxu0 0
        %2715 = vmatpush1.bf16.msra.mxu0 0
        %2716 = vmatprep.subr.bf16.mxu0 0
        %2717 = vmatpush1.bf16.msra.mxu0 0
        %2718 = vmatprep.subr.bf16.mxu0 0
        %2719 = vmatpush1.bf16.msra.mxu0 0
        %2720 = vmatprep.subr.bf16.mxu0 0
        %2721 = vmatpush1.bf16.msra.mxu0 0
        %2722 = vmatprep.subr.bf16.mxu0 0
        %2723 = vmatpush1.bf16.msra.mxu0 0
        %2724 = vmatprep.mubr.bf16.mxu0 0
        %2725 = vmatmul.mubr.bf16.gmra.mrb[0].mxu0 %v2690
        %v2726 = vpop.f32.mrb[0].mxu0
        %v2727 = vadd.f32 0.0, %v2726
        %v2728 = vpop.f32.mrb[0].mxu0
        %v2729 = vpop.f32.mrb[0].mxu0
        %v2730 = vadd.f32 0.0, %v2729
        %v2731 = vpop.f32.mrb[0].mxu0
        %2732 = vdwg.mxu0
        %v2733 = vpack.c.bf16 %v2422, %v2419
        %v2734 = vpack.c.bf16 %v2466, %v2463
        %v2735 = vpack.c.bf16 %v2510, %v2507
        %v2736 = vpack.c.bf16 %v2554, %v2551
        %v2737 = vpack.c.bf16 %v2598, %v2595
        %v2738 = vpack.c.bf16 %v2642, %v2639
        %v2739 = vpack.c.bf16 %v2686, %v2683
        %v2740 = vpack.c.bf16 %v2730, %v2727
        %2743 = vrot.lane.b32.xlu0 %v2735, 32
        %v2744 = vpop.permute.xlu0 %2743
        %2745 = vrot.lane.b32.xlu0 %v2736, 32
        %v2746 = vpop.permute.xlu0 %2745
        %2749 = vrot.lane.b32.xlu0 %v2737, 64
        %v2750 = vpop.permute.xlu0 %2749
        %2751 = vrot.lane.b32.xlu0 %v2738, 64
        %v2752 = vpop.permute.xlu0 %2751
        %2755 = vrot.lane.b32.xlu0 %v2739, 96
        %v2756 = vpop.permute.xlu0 %2755
        %2757 = vrot.lane.b32.xlu0 %v2740, 96
        %v2758 = vpop.permute.xlu0 %2757
        %v2761 = vsel %vm1819, %v2733, %v2744
        %v2764 = vsel %vm1819, %v2734, %v2746
        %vm2765 = vcmask 523264
        %v2767 = vsel %vm2765, %v2761, %v2750
        %v2769 = vsel %vm2765, %v2764, %v2752
        %vm2770 = vcmask 785408
        %v2772 = vsel %vm2770, %v2767, %v2756
        %v2775 = vsel %vm2770, %v2769, %v2758
        %v2777 = vld [vmem:[%s757] sm:$0xf]
        %v2778 = vld [vmem:[%s757 + $0x4] sm:$0xf]
        %v2779 = vld [vmem:[%s757 + $0x8] sm:$0xf]
        %v2780 = vld [vmem:[%s757 + $0xc] sm:$0xf]
        %v2781 = vld [vmem:[%s757 + $0x10] sm:$0xf]
        %v2782 = vld [vmem:[%s757 + $0x14] sm:$0xf]
        %v2783 = vld [vmem:[%s757 + $0x18] sm:$0xf]
        %v2784 = vld [vmem:[%s757 + $0x1c] sm:$0xf]
        %v2785 = vld [vmem:[%s757 + $0x20] sm:$0xf]
        %v2786 = vld [vmem:[%s757 + $0x24] sm:$0xf]
        %v2787 = vld [vmem:[%s757 + $0x28] sm:$0xf]
        %v2788 = vld [vmem:[%s757 + $0x2c] sm:$0xf]
        %v2789 = vld [vmem:[%s757 + $0x30] sm:$0xf]
        %v2790 = vld [vmem:[%s757 + $0x34] sm:$0xf]
        %v2791 = vld [vmem:[%s757 + $0x38] sm:$0xf]
        %v2792 = vld [vmem:[%s757 + $0x3c] sm:$0xf]
        %v2809 = vunpack.c.l.b16 %v2777
        %v2810 = vunpack.c.l.b16 %v2778
        %v2811 = vunpack.c.l.b16 %v2779
        %v2812 = vunpack.c.l.b16 %v2780
        %v2813 = vunpack.c.l.b16 %v2781
        %v2814 = vunpack.c.l.b16 %v2782
        %v2815 = vunpack.c.l.b16 %v2783
        %v2816 = vunpack.c.l.b16 %v2784
        %v2817 = vunpack.c.l.b16 %v2785
        %v2818 = vunpack.c.l.b16 %v2786
        %v2819 = vunpack.c.l.b16 %v2787
        %v2820 = vunpack.c.l.b16 %v2788
        %v2821 = vunpack.c.l.b16 %v2789
        %v2822 = vunpack.c.l.b16 %v2790
        %v2823 = vunpack.c.l.b16 %v2791
        %v2824 = vunpack.c.l.b16 %v2792
        %v2825 = vpack.c.b16 %v2810, %v2809
        %v2826 = vpack.c.b16 %v2812, %v2811
        %v2827 = vpack.c.b16 %v2814, %v2813
        %v2828 = vpack.c.b16 %v2816, %v2815
        %v2829 = vpack.c.b16 %v2818, %v2817
        %v2830 = vpack.c.b16 %v2820, %v2819
        %v2831 = vpack.c.b16 %v2822, %v2821
        %v2832 = vpack.c.b16 %v2824, %v2823
        %2841 = vmatprep.subr.bf16.mxu0 0
        %2842 = vmatpush1.bf16.msra.mxu0 %v2825
        %2843 = vmatprep.subr.bf16.mxu0 0
        %2844 = vmatpush1.bf16.msra.mxu0 %v2826
        %2845 = vmatprep.subr.bf16.mxu0 0
        %2846 = vmatpush1.bf16.msra.mxu0 %v2827
        %2847 = vmatprep.subr.bf16.mxu0 0
        %2848 = vmatpush1.bf16.msra.mxu0 %v2828
        %2849 = vmatprep.subr.bf16.mxu0 0
        %2850 = vmatpush1.bf16.msra.mxu0 %v2829
        %2851 = vmatprep.subr.bf16.mxu0 0
        %2852 = vmatpush1.bf16.msra.mxu0 %v2830
        %2853 = vmatprep.subr.bf16.mxu0 0
        %2854 = vmatpush1.bf16.msra.mxu0 %v2831
        %2855 = vmatprep.subr.bf16.mxu0 0
        %2856 = vmatpush1.bf16.msra.mxu0 %v2832
        %2857 = vmatprep.subr.bf16.mxu0 0
        %2858 = vmatpush1.bf16.msra.mxu0 0
        %2859 = vmatprep.subr.bf16.mxu0 0
        %2860 = vmatpush1.bf16.msra.mxu0 0
        %2861 = vmatprep.subr.bf16.mxu0 0
        %2862 = vmatpush1.bf16.msra.mxu0 0
        %2863 = vmatprep.subr.bf16.mxu0 0
        %2864 = vmatpush1.bf16.msra.mxu0 0
        %2865 = vmatprep.subr.bf16.mxu0 0
        %2866 = vmatpush1.bf16.msra.mxu0 0
        %2867 = vmatprep.subr.bf16.mxu0 0
        %2868 = vmatpush1.bf16.msra.mxu0 0
        %2869 = vmatprep.subr.bf16.mxu0 0
        %2870 = vmatpush1.bf16.msra.mxu0 0
        %2871 = vmatprep.subr.bf16.mxu0 0
        %2872 = vmatpush1.bf16.msra.mxu0 0
        %2873 = vmatprep.mubr.bf16.mxu0 0
        %2874 = vmatmul.mubr.bf16.gmra.mrb[0].mxu0 %v2772
        %v2875 = vpop.f32.mrb[0].mxu0
        %v2876 = vadd.f32 0.0, %v2875
        %v2877 = vpop.f32.mrb[0].mxu0
        %v2878 = vpop.f32.mrb[0].mxu0
        %v2879 = vadd.f32 0.0, %v2878
        %v2880 = vpop.f32.mrb[0].mxu0
        %2881 = vmatprep.mubr.bf16.mxu0 0
        %2882 = vmatmul.mubr.bf16.gmra.mrb[0].mxu0 %v2775
        %v2883 = vpop.f32.mrb[0].mxu0
        %v2884 = vadd.f32 0.0, %v2883
        %v2885 = vpop.f32.mrb[0].mxu0
        %v2886 = vpop.f32.mrb[0].mxu0
        %v2887 = vadd.f32 0.0, %v2886
        %v2888 = vpop.f32.mrb[0].mxu0
        %2889 = vdwg.mxu0
        %v2890 = vadd.f32 %v1409, %v2876
        %v2891 = vadd.f32 %v1410, %v2879
        %v2892 = vadd.f32 %v1411, %v2884
        %v2893 = vadd.f32 %v1412, %v2887
        %v2894 = vld [vmem:[%s760] sm:$0x1]
        %v2896 = vlaneseq
        %v2897 = vshrl.u32 %v2896, 7
        %v2898 = vsub.s32 0, %v2897
        %v2899 = vrot.slane %v2894, %v2898
        %v2901 = vadd.f32 %v2890, %v2899
        %v2902 = vadd.f32 %v2891, %v2899
        %v2903 = vadd.f32 %v2892, %v2899
        %v2904 = vadd.f32 %v2893, %v2899
        %v2905 = vld [vmem:[%s763] sm:$0x1]
        %v2906 = vld [vmem:[%s766] sm:$0x1]
        %2907 = vadd.xlane.f32.xlu0 %v2901
        %v2908 = vpop.xlane.xlu0 %2907
        %2909 = vadd.xlane.f32.xlu0 %v2902
        %v2910 = vpop.xlane.xlu0 %2909
        %2911 = vadd.xlane.f32.xlu0 %v2903
        %v2912 = vpop.xlane.xlu0 %2911
        %2913 = vadd.xlane.f32.xlu0 %v2904
        %v2914 = vpop.xlane.xlu0 %2913
        %v2915 = vmul.f32 %v2908, %v1423
        %v2916 = vmul.f32 %v2910, %v1423
        %v2917 = vmul.f32 %v2912, %v1423
        %v2918 = vmul.f32 %v2914, %v1423
        %v2919 = vsub.f32 %v2901, %v2915
        %v2920 = vsub.f32 %v2902, %v2916
        %v2921 = vsub.f32 %v2903, %v2917
        %v2922 = vsub.f32 %v2904, %v2918
        %v2923 = vmul.f32 %v2919, %v2919
        %v2924 = vmul.f32 %v2920, %v2920
        %v2925 = vmul.f32 %v2921, %v2921
        %v2926 = vmul.f32 %v2922, %v2922
        %2927 = vadd.xlane.f32.xlu0 %v2923
        %v2928 = vpop.xlane.xlu0 %2927
        %2929 = vadd.xlane.f32.xlu0 %v2924
        %v2930 = vpop.xlane.xlu0 %2929
        %2931 = vadd.xlane.f32.xlu0 %v2925
        %v2932 = vpop.xlane.xlu0 %2931
        %2933 = vadd.xlane.f32.xlu0 %v2926
        %v2934 = vpop.xlane.xlu0 %2933
        %v2935 = vmul.f32 %v2928, %v1423
        %v2936 = vmul.f32 %v2930, %v1423
        %v2937 = vmul.f32 %v2932, %v1423
        %v2938 = vmul.f32 %v2934, %v1423
        %v2939 = vadd.f32 %v2935, 1e-06
        %v2940 = vadd.f32 %v2936, 1e-06
        %v2941 = vadd.f32 %v2937, 1e-06
        %v2942 = vadd.f32 %v2938, 1e-06
        %v2943 = vrsqrt.pop %v2939
        %v2944 = vrsqrt.pop %v2940
        %v2945 = vrsqrt.pop %v2941
        %v2946 = vrsqrt.pop %v2942
        %v2947 = vmul.f32 %v2919, %v2943
        %v2948 = vmul.f32 %v2920, %v2944
        %v2949 = vmul.f32 %v2921, %v2945
        %v2950 = vmul.f32 %v2922, %v2946
        %v2952 = vlaneseq
        %v2953 = vshrl.u32 %v2952, 7
        %v2954 = vsub.s32 0, %v2953
        %v2955 = vrot.slane %v2905, %v2954
        %v2957 = vmul.f32 %v2947, %v2955
        %v2958 = vmul.f32 %v2948, %v2955
        %v2959 = vmul.f32 %v2949, %v2955
        %v2960 = vmul.f32 %v2950, %v2955
        %v2962 = vlaneseq
        %v2963 = vshrl.u32 %v2962, 7
        %v2964 = vsub.s32 0, %v2963
        %v2965 = vrot.slane %v2906, %v2964
        %v2967 = vadd.f32 %v2957, %v2965
        %v2968 = vadd.f32 %v2958, %v2965
        %v2969 = vadd.f32 %v2959, %v2965
        %v2970 = vadd.f32 %v2960, %v2965
        %v2971 = vpack.c.bf16 %v2968, %v2967
        %v2972 = vpack.c.bf16 %v2970, %v2969
        %v2973 = vld [vmem:[%s771] sm:$0xff]
        %v2974 = vld [vmem:[%s771 + $0x8] sm:$0xff]
        %v2975 = vld [vmem:[%s771 + $0x10] sm:$0xff]
        %v2976 = vld [vmem:[%s771 + $0x18] sm:$0xff]
        %v2977 = vld [vmem:[%s771 + $0x20] sm:$0xff]
        %v2978 = vld [vmem:[%s771 + $0x28] sm:$0xff]
        %v2979 = vld [vmem:[%s771 + $0x30] sm:$0xff]
        %v2980 = vld [vmem:[%s771 + $0x38] sm:$0xff]
        %v2981 = vld [vmem:[%s771 + $0x40] sm:$0xff]
        %v2982 = vld [vmem:[%s771 + $0x48] sm:$0xff]
        %v2983 = vld [vmem:[%s771 + $0x50] sm:$0xff]
        %v2984 = vld [vmem:[%s771 + $0x58] sm:$0xff]
        %v2985 = vld [vmem:[%s771 + $0x60] sm:$0xff]
        %v2986 = vld [vmem:[%s771 + $0x68] sm:$0xff]
        %v2987 = vld [vmem:[%s771 + $0x70] sm:$0xff]
        %v2988 = vld [vmem:[%s771 + $0x78] sm:$0xff]
        %v2989 = vld [vmem:[%s771 + $0x80] sm:$0xff]
        %v2990 = vld [vmem:[%s771 + $0x88] sm:$0xff]
        %v2991 = vld [vmem:[%s771 + $0x90] sm:$0xff]
        %v2992 = vld [vmem:[%s771 + $0x98] sm:$0xff]
        %v2993 = vld [vmem:[%s771 + $0xa0] sm:$0xff]
        %v2994 = vld [vmem:[%s771 + $0xa8] sm:$0xff]
        %v2995 = vld [vmem:[%s771 + $0xb0] sm:$0xff]
        %v2996 = vld [vmem:[%s771 + $0xb8] sm:$0xff]
        %v2997 = vld [vmem:[%s771 + $0xc0] sm:$0xff]
        %v2998 = vld [vmem:[%s771 + $0xc8] sm:$0xff]
        %v2999 = vld [vmem:[%s771 + $0xd0] sm:$0xff]
        %v3000 = vld [vmem:[%s771 + $0xd8] sm:$0xff]
        %v3001 = vld [vmem:[%s771 + $0xe0] sm:$0xff]
        %v3002 = vld [vmem:[%s771 + $0xe8] sm:$0xff]
        %v3003 = vld [vmem:[%s771 + $0xf0] sm:$0xff]
        %v3004 = vld [vmem:[%s771 + $0xf8] sm:$0xff]
        %v3005 = vld [vmem:[%s775] sm:$0xf]
        %v3007 = vlaneseq
        %v3008 = vshrl.u32 %v3007, 7
        %v3009 = vsub.s32 0, %v3008
        %v3010 = vrot.slane %v3005, %v3009
        %v3011 = vlaneseq
        %v3012 = vshrl.u32 %v3011, 7
        %v3013 = vsub.s32 1, %v3012
        %v3014 = vrot.slane %v3005, %v3013
        %v3015 = vlaneseq
        %v3016 = vshrl.u32 %v3015, 7
        %v3017 = vsub.s32 2, %v3016
        %v3018 = vrot.slane %v3005, %v3017
        %v3019 = vlaneseq
        %v3020 = vshrl.u32 %v3019, 7
        %v3021 = vsub.s32 3, %v3020
        %v3022 = vrot.slane %v3005, %v3021
        %v3059 = vunpack.c.l.b16 %v2973
        %v3060 = vunpack.c.h.b16 %v2973
        %v3061 = vunpack.c.l.b16 %v2974
        %v3062 = vunpack.c.h.b16 %v2974
        %v3063 = vunpack.c.l.b16 %v2975
        %v3064 = vunpack.c.h.b16 %v2975
        %v3065 = vunpack.c.l.b16 %v2976
        %v3066 = vunpack.c.h.b16 %v2976
        %v3067 = vunpack.c.l.b16 %v2977
        %v3068 = vunpack.c.h.b16 %v2977
        %v3069 = vunpack.c.l.b16 %v2978
        %v3070 = vunpack.c.h.b16 %v2978
        %v3071 = vunpack.c.l.b16 %v2979
        %v3072 = vunpack.c.h.b16 %v2979
        %v3073 = vunpack.c.l.b16 %v2980
        %v3074 = vunpack.c.h.b16 %v2980
        %v3075 = vunpack.c.l.b16 %v2981
        %v3076 = vunpack.c.h.b16 %v2981
        %v3077 = vunpack.c.l.b16 %v2982
        %v3078 = vunpack.c.h.b16 %v2982
        %v3079 = vunpack.c.l.b16 %v2983
        %v3080 = vunpack.c.h.b16 %v2983
        %v3081 = vunpack.c.l.b16 %v2984
        %v3082 = vunpack.c.h.b16 %v2984
        %v3083 = vunpack.c.l.b16 %v2985
        %v3084 = vunpack.c.h.b16 %v2985
        %v3085 = vunpack.c.l.b16 %v2986
        %v3086 = vunpack.c.h.b16 %v2986
        %v3087 = vunpack.c.l.b16 %v2987
        %v3088 = vunpack.c.h.b16 %v2987
        %v3089 = vunpack.c.l.b16 %v2988
        %v3090 = vunpack.c.h.b16 %v2988
        %v3091 = vunpack.c.l.b16 %v2989
        %v3092 = vunpack.c.h.b16 %v2989
        %v3093 = vunpack.c.l.b16 %v2990
        %v3094 = vunpack.c.h.b16 %v2990
        %v3095 = vunpack.c.l.b16 %v2991
        %v3096 = vunpack.c.h.b16 %v2991
        %v3097 = vunpack.c.l.b16 %v2992
        %v3098 = vunpack.c.h.b16 %v2992
        %v3099 = vunpack.c.l.b16 %v2993
        %v3100 = vunpack.c.h.b16 %v2993
        %v3101 = vunpack.c.l.b16 %v2994
        %v3102 = vunpack.c.h.b16 %v2994
        %v3103 = vunpack.c.l.b16 %v2995
        %v3104 = vunpack.c.h.b16 %v2995
        %v3105 = vunpack.c.l.b16 %v2996
        %v3106 = vunpack.c.h.b16 %v2996
        %v3107 = vunpack.c.l.b16 %v2997
        %v3108 = vunpack.c.h.b16 %v2997
        %v3109 = vunpack.c.l.b16 %v2998
        %v3110 = vunpack.c.h.b16 %v2998
        %v3111 = vunpack.c.l.b16 %v2999
        %v3112 = vunpack.c.h.b16 %v2999
        %v3113 = vunpack.c.l.b16 %v3000
        %v3114 = vunpack.c.h.b16 %v3000
        %v3115 = vunpack.c.l.b16 %v3001
        %v3116 = vunpack.c.h.b16 %v3001
        %v3117 = vunpack.c.l.b16 %v3002
        %v3118 = vunpack.c.h.b16 %v3002
        %v3119 = vunpack.c.l.b16 %v3003
        %v3120 = vunpack.c.h.b16 %v3003
        %v3121 = vunpack.c.l.b16 %v3004
        %v3122 = vunpack.c.h.b16 %v3004
        %v3123 = vpack.c.b16 %v3063, %v3059
        %v3124 = vpack.c.b16 %v3064, %v3060
        %v3125 = vpack.c.b16 %v3065, %v3061
        %v3126 = vpack.c.b16 %v3066, %v3062
        %v3127 = vpack.c.b16 %v3071, %v3067
        %v3128 = vpack.c.b16 %v3072, %v3068
        %v3129 = vpack.c.b16 %v3073, %v3069
        %v3130 = vpack.c.b16 %v3074, %v3070
        %v3131 = vpack.c.b16 %v3079, %v3075
        %v3132 = vpack.c.b16 %v3080, %v3076
        %v3133 = vpack.c.b16 %v3081, %v3077
        %v3134 = vpack.c.b16 %v3082, %v3078
        %v3135 = vpack.c.b16 %v3087, %v3083
        %v3136 = vpack.c.b16 %v3088, %v3084
        %v3137 = vpack.c.b16 %v3089, %v3085
        %v3138 = vpack.c.b16 %v3090, %v3086
        %v3139 = vpack.c.b16 %v3095, %v3091
        %v3140 = vpack.c.b16 %v3096, %v3092
        %v3141 = vpack.c.b16 %v3097, %v3093
        %v3142 = vpack.c.b16 %v3098, %v3094
        %v3143 = vpack.c.b16 %v3103, %v3099
        %v3144 = vpack.c.b16 %v3104, %v3100
        %v3145 = vpack.c.b16 %v3105, %v3101
        %v3146 = vpack.c.b16 %v3106, %v3102
        %v3147 = vpack.c.b16 %v3111, %v3107
        %v3148 = vpack.c.b16 %v3112, %v3108
        %v3149 = vpack.c.b16 %v3113, %v3109
        %v3150 = vpack.c.b16 %v3114, %v3110
        %v3151 = vpack.c.b16 %v3119, %v3115
        %v3152 = vpack.c.b16 %v3120, %v3116
        %v3153 = vpack.c.b16 %v3121, %v3117
        %v3154 = vpack.c.b16 %v3122, %v3118
        %3187 = vmatprep.subr.bf16.mxu0 %v3124
        %3188 = vmatpush1.bf16.msra.mxu0 %v3123
        %3189 = vmatprep.subr.bf16.mxu0 %v3128
        %3190 = vmatpush1.bf16.msra.mxu0 %v3127
        %3191 = vmatprep.subr.bf16.mxu0 %v3132
        %3192 = vmatpush1.bf16.msra.mxu0 %v3131
        %3193 = vmatprep.subr.bf16.mxu0 %v3136
        %3194 = vmatpush1.bf16.msra.mxu0 %v3135
        %3195 = vmatprep.subr.bf16.mxu0 %v3140
        %3196 = vmatpush1.bf16.msra.mxu0 %v3139
        %3197 = vmatprep.subr.bf16.mxu0 %v3144
        %3198 = vmatpush1.bf16.msra.mxu0 %v3143
        %3199 = vmatprep.subr.bf16.mxu0 %v3148
        %3200 = vmatpush1.bf16.msra.mxu0 %v3147
        %3201 = vmatprep.subr.bf16.mxu0 %v3152
        %3202 = vmatpush1.bf16.msra.mxu0 %v3151
        %3203 = vmatprep.subr.bf16.mxu0 0
        %3204 = vmatpush1.bf16.msra.mxu0 0
        %3205 = vmatprep.subr.bf16.mxu0 0
        %3206 = vmatpush1.bf16.msra.mxu0 0
        %3207 = vmatprep.subr.bf16.mxu0 0
        %3208 = vmatpush1.bf16.msra.mxu0 0
        %3209 = vmatprep.subr.bf16.mxu0 0
        %3210 = vmatpush1.bf16.msra.mxu0 0
        %3211 = vmatprep.subr.bf16.mxu0 0
        %3212 = vmatpush1.bf16.msra.mxu0 0
        %3213 = vmatprep.subr.bf16.mxu0 0
        %3214 = vmatpush1.bf16.msra.mxu0 0
        %3215 = vmatprep.subr.bf16.mxu0 0
        %3216 = vmatpush1.bf16.msra.mxu0 0
        %3217 = vmatprep.subr.bf16.mxu0 0
        %3218 = vmatpush1.bf16.msra.mxu0 0
        %3219 = vmatprep.mubr.bf16.mxu0 0
        %3220 = vmatmul.mubr.bf16.gmra.mrb[0].mxu0 %v2971
        %v3221 = vpop.f32.mrb[0].mxu0
        %v3222 = vadd.f32 %v3010, %v3221
        %v3223 = vpop.f32.mrb[0].mxu0
        %v3224 = vadd.f32 %v3014, %v3223
        %v3225 = vpop.f32.mrb[0].mxu0
        %v3226 = vadd.f32 %v3010, %v3225
        %v3227 = vpop.f32.mrb[0].mxu0
        %v3228 = vadd.f32 %v3014, %v3227
        %3229 = vmatprep.mubr.bf16.mxu0 0
        %3230 = vmatmul.mubr.bf16.gmra.mrb[0].mxu0 %v2972
        %v3231 = vpop.f32.mrb[0].mxu0
        %v3232 = vadd.f32 %v3010, %v3231
        %v3233 = vpop.f32.mrb[0].mxu0
        %v3234 = vadd.f32 %v3014, %v3233
        %v3235 = vpop.f32.mrb[0].mxu0
        %v3236 = vadd.f32 %v3010, %v3235
        %v3237 = vpop.f32.mrb[0].mxu0
        %v3238 = vadd.f32 %v3014, %v3237
        %3239 = vdwg.mxu0
        %3240 = vmatprep.subr.bf16.mxu0 %v3126
        %3241 = vmatpush1.bf16.msra.mxu0 %v3125
        %3242 = vmatprep.subr.bf16.mxu0 %v3130
        %3243 = vmatpush1.bf16.msra.mxu0 %v3129
        %3244 = vmatprep.subr.bf16.mxu0 %v3134
        %3245 = vmatpush1.bf16.msra.mxu0 %v3133
        %3246 = vmatprep.subr.bf16.mxu0 %v3138
        %3247 = vmatpush1.bf16.msra.mxu0 %v3137
        %3248 = vmatprep.subr.bf16.mxu0 %v3142
        %3249 = vmatpush1.bf16.msra.mxu0 %v3141
        %3250 = vmatprep.subr.bf16.mxu0 %v3146
        %3251 = vmatpush1.bf16.msra.mxu0 %v3145
        %3252 = vmatprep.subr.bf16.mxu0 %v3150
        %3253 = vmatpush1.bf16.msra.mxu0 %v3149
        %3254 = vmatprep.subr.bf16.mxu0 %v3154
        %3255 = vmatpush1.bf16.msra.mxu0 %v3153
        %3256 = vmatprep.subr.bf16.mxu0 0
        %3257 = vmatpush1.bf16.msra.mxu0 0
        %3258 = vmatprep.subr.bf16.mxu0 0
        %3259 = vmatpush1.bf16.msra.mxu0 0
        %3260 = vmatprep.subr.bf16.mxu0 0
        %3261 = vmatpush1.bf16.msra.mxu0 0
        %3262 = vmatprep.subr.bf16.mxu0 0
        %3263 = vmatpush1.bf16.msra.mxu0 0
        %3264 = vmatprep.subr.bf16.mxu0 0
        %3265 = vmatpush1.bf16.msra.mxu0 0
        %3266 = vmatprep.subr.bf16.mxu0 0
        %3267 = vmatpush1.bf16.msra.mxu0 0
        %3268 = vmatprep.subr.bf16.mxu0 0
        %3269 = vmatpush1.bf16.msra.mxu0 0
        %3270 = vmatprep.subr.bf16.mxu0 0
        %3271 = vmatpush1.bf16.msra.mxu0 0
        %3272 = vmatprep.mubr.bf16.mxu0 0
        %3273 = vmatmul.mubr.bf16.gmra.mrb[0].mxu0 %v2971
        %v3274 = vpop.f32.mrb[0].mxu0
        %v3275 = vadd.f32 %v3018, %v3274
        %v3276 = vpop.f32.mrb[0].mxu0
        %v3277 = vadd.f32 %v3022, %v3276
        %v3278 = vpop.f32.mrb[0].mxu0
        %v3279 = vadd.f32 %v3018, %v3278
        %v3280 = vpop.f32.mrb[0].mxu0
        %v3281 = vadd.f32 %v3022, %v3280
        %3282 = vmatprep.mubr.bf16.mxu0 0
        %3283 = vmatmul.mubr.bf16.gmra.mrb[0].mxu0 %v2972
        %v3284 = vpop.f32.mrb[0].mxu0
        %v3285 = vadd.f32 %v3018, %v3284
        %v3286 = vpop.f32.mrb[0].mxu0
        %v3287 = vadd.f32 %v3022, %v3286
        %v3288 = vpop.f32.mrb[0].mxu0
        %v3289 = vadd.f32 %v3018, %v3288
        %v3290 = vpop.f32.mrb[0].mxu0
        %v3291 = vadd.f32 %v3022, %v3290
        %3292 = vdwg.mxu0
        %v3293 = vmul.f32 %v3222, 0.5
        %v3294 = vmul.f32 %v3224, 0.5
        %v3295 = vmul.f32 %v3275, 0.5
        %v3296 = vmul.f32 %v3277, 0.5
        %v3297 = vmul.f32 %v3226, 0.5
        %v3298 = vmul.f32 %v3228, 0.5
        %v3299 = vmul.f32 %v3279, 0.5
        %v3300 = vmul.f32 %v3281, 0.5
        %v3301 = vmul.f32 %v3232, 0.5
        %v3302 = vmul.f32 %v3234, 0.5
        %v3303 = vmul.f32 %v3285, 0.5
        %v3304 = vmul.f32 %v3287, 0.5
        %v3305 = vmul.f32 %v3236, 0.5
        %v3306 = vmul.f32 %v3238, 0.5
        %v3307 = vmul.f32 %v3289, 0.5
        %v3308 = vmul.f32 %v3291, 0.5
        %v3309 = vmul.f32 %v3222, 0.044715
        %v3310 = vmul.f32 %v3224, 0.044715
        %v3311 = vmul.f32 %v3275, 0.044715
        %v3312 = vmul.f32 %v3277, 0.044715
        %v3313 = vmul.f32 %v3226, 0.044715
        %v3314 = vmul.f32 %v3228, 0.044715
        %v3315 = vmul.f32 %v3279, 0.044715
        %v3316 = vmul.f32 %v3281, 0.044715
        %v3317 = vmul.f32 %v3232, 0.044715
        %v3318 = vmul.f32 %v3234, 0.044715
        %v3319 = vmul.f32 %v3285, 0.044715
        %v3320 = vmul.f32 %v3287, 0.044715
        %v3321 = vmul.f32 %v3236, 0.044715
        %v3322 = vmul.f32 %v3238, 0.044715
        %v3323 = vmul.f32 %v3289, 0.044715
        %v3324 = vmul.f32 %v3291, 0.044715
        %v3325 = vmul.f32 %v3309, %v3222
        %v3326 = vmul.f32 %v3310, %v3224
        %v3327 = vmul.f32 %v3311, %v3275
        %v3328 = vmul.f32 %v3312, %v3277
        %v3329 = vmul.f32 %v3313, %v3226
        %v3330 = vmul.f32 %v3314, %v3228
        %v3331 = vmul.f32 %v3315, %v3279
        %v3332 = vmul.f32 %v3316, %v3281
        %v3333 = vmul.f32 %v3317, %v3232
        %v3334 = vmul.f32 %v3318, %v3234
        %v3335 = vmul.f32 %v3319, %v3285
        %v3336 = vmul.f32 %v3320, %v3287
        %v3337 = vmul.f32 %v3321, %v3236
        %v3338 = vmul.f32 %v3322, %v3238
        %v3339 = vmul.f32 %v3323, %v3289
        %v3340 = vmul.f32 %v3324, %v3291
        %v3341 = vmul.f32 %v3325, %v3222
        %v3342 = vmul.f32 %v3326, %v3224
        %v3343 = vmul.f32 %v3327, %v3275
        %v3344 = vmul.f32 %v3328, %v3277
        %v3345 = vmul.f32 %v3329, %v3226
        %v3346 = vmul.f32 %v3330, %v3228
        %v3347 = vmul.f32 %v3331, %v3279
        %v3348 = vmul.f32 %v3332, %v3281
        %v3349 = vmul.f32 %v3333, %v3232
        %v3350 = vmul.f32 %v3334, %v3234
        %v3351 = vmul.f32 %v3335, %v3285
        %v3352 = vmul.f32 %v3336, %v3287
        %v3353 = vmul.f32 %v3337, %v3236
        %v3354 = vmul.f32 %v3338, %v3238
        %v3355 = vmul.f32 %v3339, %v3289
        %v3356 = vmul.f32 %v3340, %v3291
        %v3357 = vadd.f32 %v3222, %v3341
        %v3358 = vadd.f32 %v3224, %v3342
        %v3359 = vadd.f32 %v3275, %v3343
        %v3360 = vadd.f32 %v3277, %v3344
        %v3361 = vadd.f32 %v3226, %v3345
        %v3362 = vadd.f32 %v3228, %v3346
        %v3363 = vadd.f32 %v3279, %v3347
        %v3364 = vadd.f32 %v3281, %v3348
        %v3365 = vadd.f32 %v3232, %v3349
        %v3366 = vadd.f32 %v3234, %v3350
        %v3367 = vadd.f32 %v3285, %v3351
        %v3368 = vadd.f32 %v3287, %v3352
        %v3369 = vadd.f32 %v3236, %v3353
        %v3370 = vadd.f32 %v3238, %v3354
        %v3371 = vadd.f32 %v3289, %v3355
        %v3372 = vadd.f32 %v3291, %v3356
        %v3373 = vmul.f32 %v3357, 0.7978846
        %v3374 = vmul.f32 %v3358, 0.7978846
        %v3375 = vmul.f32 %v3359, 0.7978846
        %v3376 = vmul.f32 %v3360, 0.7978846
        %v3377 = vmul.f32 %v3361, 0.7978846
        %v3378 = vmul.f32 %v3362, 0.7978846
        %v3379 = vmul.f32 %v3363, 0.7978846
        %v3380 = vmul.f32 %v3364, 0.7978846
        %v3381 = vmul.f32 %v3365, 0.7978846
        %v3382 = vmul.f32 %v3366, 0.7978846
        %v3383 = vmul.f32 %v3367, 0.7978846
        %v3384 = vmul.f32 %v3368, 0.7978846
        %v3385 = vmul.f32 %v3369, 0.7978846
        %v3386 = vmul.f32 %v3370, 0.7978846
        %v3387 = vmul.f32 %v3371, 0.7978846
        %v3388 = vmul.f32 %v3372, 0.7978846
        %v3389 = vtanh.pop %v3373
        %v3390 = vtanh.pop %v3374
        %v3391 = vtanh.pop %v3375
        %v3392 = vtanh.pop %v3376
        %v3393 = vtanh.pop %v3377
        %v3394 = vtanh.pop %v3378
        %v3395 = vtanh.pop %v3379
        %v3396 = vtanh.pop %v3380
        %v3397 = vtanh.pop %v3381
        %v3398 = vtanh.pop %v3382
        %v3399 = vtanh.pop %v3383
        %v3400 = vtanh.pop %v3384
        %v3401 = vtanh.pop %v3385
        %v3402 = vtanh.pop %v3386
        %v3403 = vtanh.pop %v3387
        %v3404 = vtanh.pop %v3388
        %v3405 = vadd.f32 %v3389, 1.0
        %v3406 = vadd.f32 %v3390, 1.0
        %v3407 = vadd.f32 %v3391, 1.0
        %v3408 = vadd.f32 %v3392, 1.0
        %v3409 = vadd.f32 %v3393, 1.0
        %v3410 = vadd.f32 %v3394, 1.0
        %v3411 = vadd.f32 %v3395, 1.0
        %v3412 = vadd.f32 %v3396, 1.0
        %v3413 = vadd.f32 %v3397, 1.0
        %v3414 = vadd.f32 %v3398, 1.0
        %v3415 = vadd.f32 %v3399, 1.0
        %v3416 = vadd.f32 %v3400, 1.0
        %v3417 = vadd.f32 %v3401, 1.0
        %v3418 = vadd.f32 %v3402, 1.0
        %v3419 = vadd.f32 %v3403, 1.0
        %v3420 = vadd.f32 %v3404, 1.0
        %v3421 = vmul.f32 %v3293, %v3405
        %v3422 = vmul.f32 %v3294, %v3406
        %v3423 = vmul.f32 %v3295, %v3407
        %v3424 = vmul.f32 %v3296, %v3408
        %v3425 = vmul.f32 %v3297, %v3409
        %v3426 = vmul.f32 %v3298, %v3410
        %v3427 = vmul.f32 %v3299, %v3411
        %v3428 = vmul.f32 %v3300, %v3412
        %v3429 = vmul.f32 %v3301, %v3413
        %v3430 = vmul.f32 %v3302, %v3414
        %v3431 = vmul.f32 %v3303, %v3415
        %v3432 = vmul.f32 %v3304, %v3416
        %v3433 = vmul.f32 %v3305, %v3417
        %v3434 = vmul.f32 %v3306, %v3418
        %v3435 = vmul.f32 %v3307, %v3419
        %v3436 = vmul.f32 %v3308, %v3420
        %v3437 = vpack.c.bf16 %v3425, %v3421
        %v3438 = vpack.c.bf16 %v3426, %v3422
        %v3439 = vpack.c.bf16 %v3427, %v3423
        %v3440 = vpack.c.bf16 %v3428, %v3424
        %v3441 = vpack.c.bf16 %v3433, %v3429
        %v3442 = vpack.c.bf16 %v3434, %v3430
        %v3443 = vpack.c.bf16 %v3435, %v3431
        %v3444 = vpack.c.bf16 %v3436, %v3432
        %v3445 = vld [vmem:[%s780] sm:$0xf]
        %v3446 = vld [vmem:[%s780 + $0x4] sm:$0xf]
        %v3447 = vld [vmem:[%s780 + $0x8] sm:$0xf]
        %v3448 = vld [vmem:[%s780 + $0xc] sm:$0xf]
        %v3449 = vld [vmem:[%s780 + $0x10] sm:$0xf]
        %v3450 = vld [vmem:[%s780 + $0x14] sm:$0xf]
        %v3451 = vld [vmem:[%s780 + $0x18] sm:$0xf]
        %v3452 = vld [vmem:[%s780 + $0x1c] sm:$0xf]
        %v3453 = vld [vmem:[%s780 + $0x20] sm:$0xf]
        %v3454 = vld [vmem:[%s780 + $0x24] sm:$0xf]
        %v3455 = vld [vmem:[%s780 + $0x28] sm:$0xf]
        %v3456 = vld [vmem:[%s780 + $0x2c] sm:$0xf]
        %v3457 = vld [vmem:[%s780 + $0x30] sm:$0xf]
        %v3458 = vld [vmem:[%s780 + $0x34] sm:$0xf]
        %v3459 = vld [vmem:[%s780 + $0x38] sm:$0xf]
        %v3460 = vld [vmem:[%s780 + $0x3c] sm:$0xf]
        %v3461 = vld [vmem:[%s780 + $0x40] sm:$0xf]
        %v3462 = vld [vmem:[%s780 + $0x44] sm:$0xf]
        %v3463 = vld [vmem:[%s780 + $0x48] sm:$0xf]
        %v3464 = vld [vmem:[%s780 + $0x4c] sm:$0xf]
        %v3465 = vld [vmem:[%s780 + $0x50] sm:$0xf]
        %v3466 = vld [vmem:[%s780 + $0x54] sm:$0xf]
        %v3467 = vld [vmem:[%s780 + $0x58] sm:$0xf]
        %v3468 = vld [vmem:[%s780 + $0x5c] sm:$0xf]
        %v3469 = vld [vmem:[%s780 + $0x60] sm:$0xf]
        %v3470 = vld [vmem:[%s780 + $0x64] sm:$0xf]
        %v3471 = vld [vmem:[%s780 + $0x68] sm:$0xf]
        %v3472 = vld [vmem:[%s780 + $0x6c] sm:$0xf]
        %v3473 = vld [vmem:[%s780 + $0x70] sm:$0xf]
        %v3474 = vld [vmem:[%s780 + $0x74] sm:$0xf]
        %v3475 = vld [vmem:[%s780 + $0x78] sm:$0xf]
        %v3476 = vld [vmem:[%s780 + $0x7c] sm:$0xf]
        %v3477 = vld [vmem:[%s780 + $0x80] sm:$0xf]
        %v3478 = vld [vmem:[%s780 + $0x84] sm:$0xf]
        %v3479 = vld [vmem:[%s780 + $0x88] sm:$0xf]
        %v3480 = vld [vmem:[%s780 + $0x8c] sm:$0xf]
        %v3481 = vld [vmem:[%s780 + $0x90] sm:$0xf]
        %v3482 = vld [vmem:[%s780 + $0x94] sm:$0xf]
        %v3483 = vld [vmem:[%s780 + $0x98] sm:$0xf]
        %v3484 = vld [vmem:[%s780 + $0x9c] sm:$0xf]
        %v3485 = vld [vmem:[%s780 + $0xa0] sm:$0xf]
        %v3486 = vld [vmem:[%s780 + $0xa4] sm:$0xf]
        %v3487 = vld [vmem:[%s780 + $0xa8] sm:$0xf]
        %v3488 = vld [vmem:[%s780 + $0xac] sm:$0xf]
        %v3489 = vld [vmem:[%s780 + $0xb0] sm:$0xf]
        %v3490 = vld [vmem:[%s780 + $0xb4] sm:$0xf]
        %v3491 = vld [vmem:[%s780 + $0xb8] sm:$0xf]
        %v3492 = vld [vmem:[%s780 + $0xbc] sm:$0xf]
        %v3493 = vld [vmem:[%s780 + $0xc0] sm:$0xf]
        %v3494 = vld [vmem:[%s780 + $0xc4] sm:$0xf]
        %v3495 = vld [vmem:[%s780 + $0xc8] sm:$0xf]
        %v3496 = vld [vmem:[%s780 + $0xcc] sm:$0xf]
        %v3497 = vld [vmem:[%s780 + $0xd0] sm:$0xf]
        %v3498 = vld [vmem:[%s780 + $0xd4] sm:$0xf]
        %v3499 = vld [vmem:[%s780 + $0xd8] sm:$0xf]
        %v3500 = vld [vmem:[%s780 + $0xdc] sm:$0xf]
        %v3501 = vld [vmem:[%s780 + $0xe0] sm:$0xf]
        %v3502 = vld [vmem:[%s780 + $0xe4] sm:$0xf]
        %v3503 = vld [vmem:[%s780 + $0xe8] sm:$0xf]
        %v3504 = vld [vmem:[%s780 + $0xec] sm:$0xf]
        %v3505 = vld [vmem:[%s780 + $0xf0] sm:$0xf]
        %v3506 = vld [vmem:[%s780 + $0xf4] sm:$0xf]
        %v3507 = vld [vmem:[%s780 + $0xf8] sm:$0xf]
        %v3508 = vld [vmem:[%s780 + $0xfc] sm:$0xf]
        %v3509 = vld [vmem:[%s783] sm:$0x1]
        %v3511 = vlaneseq
        %v3512 = vshrl.u32 %v3511, 7
        %v3513 = vsub.s32 0, %v3512
        %v3514 = vrot.slane %v3509, %v3513
        %v3580 = vunpack.c.l.b16 %v3445
        %v3581 = vunpack.c.l.b16 %v3446
        %v3582 = vunpack.c.l.b16 %v3447
        %v3583 = vunpack.c.l.b16 %v3448
        %v3584 = vunpack.c.l.b16 %v3449
        %v3585 = vunpack.c.l.b16 %v3450
        %v3586 = vunpack.c.l.b16 %v3451
        %v3587 = vunpack.c.l.b16 %v3452
        %v3588 = vunpack.c.l.b16 %v3453
        %v3589 = vunpack.c.l.b16 %v3454
        %v3590 = vunpack.c.l.b16 %v3455
        %v3591 = vunpack.c.l.b16 %v3456
        %v3592 = vunpack.c.l.b16 %v3457
        %v3593 = vunpack.c.l.b16 %v3458
        %v3594 = vunpack.c.l.b16 %v3459
        %v3595 = vunpack.c.l.b16 %v3460
        %v3596 = vunpack.c.l.b16 %v3461
        %v3597 = vunpack.c.l.b16 %v3462
        %v3598 = vunpack.c.l.b16 %v3463
        %v3599 = vunpack.c.l.b16 %v3464
        %v3600 = vunpack.c.l.b16 %v3465
        %v3601 = vunpack.c.l.b16 %v3466
        %v3602 = vunpack.c.l.b16 %v3467
        %v3603 = vunpack.c.l.b16 %v3468
        %v3604 = vunpack.c.l.b16 %v3469
        %v3605 = vunpack.c.l.b16 %v3470
        %v3606 = vunpack.c.l.b16 %v3471
        %v3607 = vunpack.c.l.b16 %v3472
        %v3608 = vunpack.c.l.b16 %v3473
        %v3609 = vunpack.c.l.b16 %v3474
        %v3610 = vunpack.c.l.b16 %v3475
        %v3611 = vunpack.c.l.b16 %v3476
        %v3612 = vunpack.c.l.b16 %v3477
        %v3613 = vunpack.c.l.b16 %v3478
        %v3614 = vunpack.c.l.b16 %v3479
        %v3615 = vunpack.c.l.b16 %v3480
        %v3616 = vunpack.c.l.b16 %v3481
        %v3617 = vunpack.c.l.b16 %v3482
        %v3618 = vunpack.c.l.b16 %v3483
        %v3619 = vunpack.c.l.b16 %v3484
        %v3620 = vunpack.c.l.b16 %v3485
        %v3621 = vunpack.c.l.b16 %v3486
        %v3622 = vunpack.c.l.b16 %v3487
        %v3623 = vunpack.c.l.b16 %v3488
        %v3624 = vunpack.c.l.b16 %v3489
        %v3625 = vunpack.c.l.b16 %v3490
        %v3626 = vunpack.c.l.b16 %v3491
        %v3627 = vunpack.c.l.b16 %v3492
        %v3628 = vunpack.c.l.b16 %v3493
        %v3629 = vunpack.c.l.b16 %v3494
        %v3630 = vunpack.c.l.b16 %v3495
        %v3631 = vunpack.c.l.b16 %v3496
        %v3632 = vunpack.c.l.b16 %v3497
        %v3633 = vunpack.c.l.b16 %v3498
        %v3634 = vunpack.c.l.b16 %v3499
        %v3635 = vunpack.c.l.b16 %v3500
        %v3636 = vunpack.c.l.b16 %v3501
        %v3637 = vunpack.c.l.b16 %v3502
        %v3638 = vunpack.c.l.b16 %v3503
        %v3639 = vunpack.c.l.b16 %v3504
        %v3640 = vunpack.c.l.b16 %v3505
        %v3641 = vunpack.c.l.b16 %v3506
        %v3642 = vunpack.c.l.b16 %v3507
        %v3643 = vunpack.c.l.b16 %v3508
        %v3644 = vpack.c.b16 %v3581, %v3580
        %v3645 = vpack.c.b16 %v3583, %v3582
        %v3646 = vpack.c.b16 %v3585, %v3584
        %v3647 = vpack.c.b16 %v3587, %v3586
        %v3648 = vpack.c.b16 %v3589, %v3588
        %v3649 = vpack.c.b16 %v3591, %v3590
        %v3650 = vpack.c.b16 %v3593, %v3592
        %v3651 = vpack.c.b16 %v3595, %v3594
        %v3652 = vpack.c.b16 %v3597, %v3596
        %v3653 = vpack.c.b16 %v3599, %v3598
        %v3654 = vpack.c.b16 %v3601, %v3600
        %v3655 = vpack.c.b16 %v3603, %v3602
        %v3656 = vpack.c.b16 %v3605, %v3604
        %v3657 = vpack.c.b16 %v3607, %v3606
        %v3658 = vpack.c.b16 %v3609, %v3608
        %v3659 = vpack.c.b16 %v3611, %v3610
        %v3660 = vpack.c.b16 %v3613, %v3612
        %v3661 = vpack.c.b16 %v3615, %v3614
        %v3662 = vpack.c.b16 %v3617, %v3616
        %v3663 = vpack.c.b16 %v3619, %v3618
        %v3664 = vpack.c.b16 %v3621, %v3620
        %v3665 = vpack.c.b16 %v3623, %v3622
        %v3666 = vpack.c.b16 %v3625, %v3624
        %v3667 = vpack.c.b16 %v3627, %v3626
        %v3668 = vpack.c.b16 %v3629, %v3628
        %v3669 = vpack.c.b16 %v3631, %v3630
        %v3670 = vpack.c.b16 %v3633, %v3632
        %v3671 = vpack.c.b16 %v3635, %v3634
        %v3672 = vpack.c.b16 %v3637, %v3636
        %v3673 = vpack.c.b16 %v3639, %v3638
        %v3674 = vpack.c.b16 %v3641, %v3640
        %v3675 = vpack.c.b16 %v3643, %v3642
        %3708 = vmatprep.subr.bf16.mxu0 0
        %3709 = vmatpush1.bf16.msra.mxu0 %v3644
        %3710 = vmatprep.subr.bf16.mxu0 0
        %3711 = vmatpush1.bf16.msra.mxu0 %v3645
        %3712 = vmatprep.subr.bf16.mxu0 0
        %3713 = vmatpush1.bf16.msra.mxu0 %v3646
        %3714 = vmatprep.subr.bf16.mxu0 0
        %3715 = vmatpush1.bf16.msra.mxu0 %v3647
        %3716 = vmatprep.subr.bf16.mxu0 0
        %3717 = vmatpush1.bf16.msra.mxu0 %v3648
        %3718 = vmatprep.subr.bf16.mxu0 0
        %3719 = vmatpush1.bf16.msra.mxu0 %v3649
        %3720 = vmatprep.subr.bf16.mxu0 0
        %3721 = vmatpush1.bf16.msra.mxu0 %v3650
        %3722 = vmatprep.subr.bf16.mxu0 0
        %3723 = vmatpush1.bf16.msra.mxu0 %v3651
        %3724 = vmatprep.subr.bf16.mxu0 0
        %3725 = vmatpush1.bf16.msra.mxu0 %v3652
        %3726 = vmatprep.subr.bf16.mxu0 0
        %3727 = vmatpush1.bf16.msra.mxu0 %v3653
        %3728 = vmatprep.subr.bf16.mxu0 0
        %3729 = vmatpush1.bf16.msra.mxu0 %v3654
        %3730 = vmatprep.subr.bf16.mxu0 0
        %3731 = vmatpush1.bf16.msra.mxu0 %v3655
        %3732 = vmatprep.subr.bf16.mxu0 0
        %3733 = vmatpush1.bf16.msra.mxu0 %v3656
        %3734 = vmatprep.subr.bf16.mxu0 0
        %3735 = vmatpush1.bf16.msra.mxu0 %v3657
        %3736 = vmatprep.subr.bf16.mxu0 0
        %3737 = vmatpush1.bf16.msra.mxu0 %v3658
        %3738 = vmatprep.subr.bf16.mxu0 0
        %3739 = vmatpush1.bf16.msra.mxu0 %v3659
        %3740 = vmatprep.mubr.bf16.mxu0 %v3438
        %3741 = vmatmul.mubr.bf16.gmra.mrb[0].mxu0 %v3437
        %v3742 = vpop.f32.mrb[0].mxu0
        %v3743 = vadd.f32 %v3514, %v3742
        %v3744 = vpop.f32.mrb[0].mxu0
        %v3745 = vpop.f32.mrb[0].mxu0
        %v3746 = vadd.f32 %v3514, %v3745
        %v3747 = vpop.f32.mrb[0].mxu0
        %3748 = vmatprep.mubr.bf16.mxu0 %v3442
        %3749 = vmatmul.mubr.bf16.gmra.mrb[0].mxu0 %v3441
        %v3750 = vpop.f32.mrb[0].mxu0
        %v3751 = vadd.f32 %v3514, %v3750
        %v3752 = vpop.f32.mrb[0].mxu0
        %v3753 = vpop.f32.mrb[0].mxu0
        %v3754 = vadd.f32 %v3514, %v3753
        %v3755 = vpop.f32.mrb[0].mxu0
        %3756 = vdwg.mxu0
        %3757 = vmatprep.subr.bf16.mxu0 0
        %3758 = vmatpush1.bf16.msra.mxu0 %v3660
        %3759 = vmatprep.subr.bf16.mxu0 0
        %3760 = vmatpush1.bf16.msra.mxu0 %v3661
        %3761 = vmatprep.subr.bf16.mxu0 0
        %3762 = vmatpush1.bf16.msra.mxu0 %v3662
        %3763 = vmatprep.subr.bf16.mxu0 0
        %3764 = vmatpush1.bf16.msra.mxu0 %v3663
        %3765 = vmatprep.subr.bf16.mxu0 0
        %3766 = vmatpush1.bf16.msra.mxu0 %v3664
        %3767 = vmatprep.subr.bf16.mxu0 0
        %3768 = vmatpush1.bf16.msra.mxu0 %v3665
        %3769 = vmatprep.subr.bf16.mxu0 0
        %3770 = vmatpush1.bf16.msra.mxu0 %v3666
        %3771 = vmatprep.subr.bf16.mxu0 0
        %3772 = vmatpush1.bf16.msra.mxu0 %v3667
        %3773 = vmatprep.subr.bf16.mxu0 0
        %3774 = vmatpush1.bf16.msra.mxu0 %v3668
        %3775 = vmatprep.subr.bf16.mxu0 0
        %3776 = vmatpush1.bf16.msra.mxu0 %v3669
        %3777 = vmatprep.subr.bf16.mxu0 0
        %3778 = vmatpush1.bf16.msra.mxu0 %v3670
        %3779 = vmatprep.subr.bf16.mxu0 0
        %3780 = vmatpush1.bf16.msra.mxu0 %v3671
        %3781 = vmatprep.subr.bf16.mxu0 0
        %3782 = vmatpush1.bf16.msra.mxu0 %v3672
        %3783 = vmatprep.subr.bf16.mxu0 0
        %3784 = vmatpush1.bf16.msra.mxu0 %v3673
        %3785 = vmatprep.subr.bf16.mxu0 0
        %3786 = vmatpush1.bf16.msra.mxu0 %v3674
        %3787 = vmatprep.subr.bf16.mxu0 0
        %3788 = vmatpush1.bf16.msra.mxu0 %v3675
        %3789 = vmatprep.mubr.bf16.mxu0 %v3440
        %3790 = vmatmul.mubr.bf16.gmra.mrb[0].mxu0 %v3439
        %v3791 = vpop.f32.mrb[0].mxu0
        %v3792 = vadd.f32 %v3743, %v3791
        %v3793 = vpop.f32.mrb[0].mxu0
        %v3794 = vpop.f32.mrb[0].mxu0
        %v3795 = vadd.f32 %v3746, %v3794
        %v3796 = vpop.f32.mrb[0].mxu0
        %3797 = vmatprep.mubr.bf16.mxu0 %v3444
        %3798 = vmatmul.mubr.bf16.gmra.mrb[0].mxu0 %v3443
        %v3799 = vpop.f32.mrb[0].mxu0
        %v3800 = vadd.f32 %v3751, %v3799
        %v3801 = vpop.f32.mrb[0].mxu0
        %v3802 = vpop.f32.mrb[0].mxu0
        %v3803 = vadd.f32 %v3754, %v3802
        %v3804 = vpop.f32.mrb[0].mxu0
        %3805 = vdwg.mxu0
        %v3806 = vadd.f32 %v2901, %v3792
        %v3807 = vadd.f32 %v2902, %v3795
        %v3808 = vadd.f32 %v2903, %v3800
        %v3809 = vadd.f32 %v2904, %v3803
        %3810 = vst [vmem:[#allocation2] sm:$0xff] %v3806
        %3811 = vst [vmem:[#allocation2 + $0x8] sm:$0xff] %v3807
        %3812 = vst [vmem:[#allocation2 + $0x10] sm:$0xff] %v3808
        %3813 = vst [vmem:[#allocation2 + $0x18] sm:$0xff] %v3809
        %p3814 = scmp.eq.s32.totalorder %s37, 1
        // Predicated region
        $region97: #{encoder_forward.1} parent=91 // pred_check
          %p3815 = pneg %p3814
        $region98: #{encoder_forward.1} parent=91 // pred_check_branch
          %3817 = sbr.rel (%p3815) target = $region100
        $region99: #{encoder_forward.1} parent=91 // pred_region
          %v3818 = vld [vmem:[%s16] sm:$0x1]
          %v3819 = vld [vmem:[%s17] sm:$0x1]
          %3820 = vadd.xlane.f32.xlu0 %v3806
          %v3821 = vpop.xlane.xlu0 %3820
          %3822 = vadd.xlane.f32.xlu0 %v3807
          %v3823 = vpop.xlane.xlu0 %3822
          %3824 = vadd.xlane.f32.xlu0 %v3808
          %v3825 = vpop.xlane.xlu0 %3824
          %3826 = vadd.xlane.f32.xlu0 %v3809
          %v3827 = vpop.xlane.xlu0 %3826
          %v3828 = vmul.f32 %v3821, %v1423
          %v3829 = vmul.f32 %v3823, %v1423
          %v3830 = vmul.f32 %v3825, %v1423
          %v3831 = vmul.f32 %v3827, %v1423
          %v3832 = vsub.f32 %v3806, %v3828
          %v3833 = vsub.f32 %v3807, %v3829
          %v3834 = vsub.f32 %v3808, %v3830
          %v3835 = vsub.f32 %v3809, %v3831
          %v3836 = vmul.f32 %v3832, %v3832
          %v3837 = vmul.f32 %v3833, %v3833
          %v3838 = vmul.f32 %v3834, %v3834
          %v3839 = vmul.f32 %v3835, %v3835
          %3840 = vadd.xlane.f32.xlu0 %v3836
          %v3841 = vpop.xlane.xlu0 %3840
          %3842 = vadd.xlane.f32.xlu0 %v3837
          %v3843 = vpop.xlane.xlu0 %3842
          %3844 = vadd.xlane.f32.xlu0 %v3838
          %v3845 = vpop.xlane.xlu0 %3844
          %3846 = vadd.xlane.f32.xlu0 %v3839
          %v3847 = vpop.xlane.xlu0 %3846
          %v3848 = vmul.f32 %v3841, %v1423
          %v3849 = vmul.f32 %v3843, %v1423
          %v3850 = vmul.f32 %v3845, %v1423
          %v3851 = vmul.f32 %v3847, %v1423
          %v3852 = vadd.f32 %v3848, 1e-06
          %v3853 = vadd.f32 %v3849, 1e-06
          %v3854 = vadd.f32 %v3850, 1e-06
          %v3855 = vadd.f32 %v3851, 1e-06
          %v3856 = vrsqrt.pop %v3852
          %v3857 = vrsqrt.pop %v3853
          %v3858 = vrsqrt.pop %v3854
          %v3859 = vrsqrt.pop %v3855
          %v3860 = vmul.f32 %v3832, %v3856
          %v3861 = vmul.f32 %v3833, %v3857
          %v3862 = vmul.f32 %v3834, %v3858
          %v3863 = vmul.f32 %v3835, %v3859
          %v3865 = vlaneseq
          %v3866 = vshrl.u32 %v3865, 7
          %v3867 = vsub.s32 0, %v3866
          %v3868 = vrot.slane %v3818, %v3867
          %v3870 = vmul.f32 %v3860, %v3868
          %v3871 = vmul.f32 %v3861, %v3868
          %v3872 = vmul.f32 %v3862, %v3868
          %v3873 = vmul.f32 %v3863, %v3868
          %v3875 = vlaneseq
          %v3876 = vshrl.u32 %v3875, 7
          %v3877 = vsub.s32 0, %v3876
          %v3878 = vrot.slane %v3819, %v3877
          %v3880 = vadd.f32 %v3870, %v3878
          %v3881 = vadd.f32 %v3871, %v3878
          %v3882 = vadd.f32 %v3872, %v3878
          %v3883 = vadd.f32 %v3873, %v3878
          %3884 = vst [vmem:[%s732] sm:$0xff] %v3880
          %3885 = vst [vmem:[%s732 + $0x8] sm:$0xff] %v3881
          %3886 = vst [vmem:[%s732 + $0x10] sm:$0xff] %v3882
          %3887 = vst [vmem:[%s732 + $0x18] sm:$0xff] %v3883
        $region100: #{encoder_forward.1} parent=91 // pred_fallthru
          _
        %s3888 = sand.u32 %s495, 1
        %s3889 = scalar_lea.sflag [#allocation4], %s3888
        %s3890 = sand.u32 %s495, 1
        %s3891 = smul.addr %s3890, 32
        %s3892 = scalar_lea.vmem [#allocation3], %s3891
        // Predicated region
        $region101: #{encoder_forward.1} parent=91 // pred_check
          %p3893 = pneg %p505
        $region102: #{encoder_forward.1} parent=91 // pred_check_branch
          %3895 = sbr.rel (%p3893) target = $region104
        $region103: #{encoder_forward.1} parent=91 // pred_region
          %s3897 = ssub.s32 512, 512
          %3898 = vsyncadd %s3889, %s3897
          %s3899 = smul.addr %s36, 4
          %s3900 = smul.addr %s3899, 128
          %s3901 = scalar_lea.hbm %s18, %s3900
          %s3902 = sshll.u32 %s3892, 4
          %s3903 = int_to_ptr.vmem [resolvable:$true] %s3902
          %3908 = dma.vmem_to_hbm [thread:$0]  %s3903, 512, %s3901, %s3889, 128, 128, 8
        $region104: #{encoder_forward.1} parent=91 // pred_fallthru
          _
      $region92: #{encoder_forward.1} parent=5 // pred_fallthru
        _
      %p3909 = scmp.le.s32.totalorder 2, %s27
      // Predicated region
      $region105: #{encoder_forward.1} parent=5 // pred_check
        %p3910 = pneg %p3909
      $region106: #{encoder_forward.1} parent=5 // pred_check_branch
        %3912 = sbr.rel (%p3910) target = $region108
      $region107: #{encoder_forward.1} parent=5 // pred_region
        %s3913 = ssub.s32 %s27, 2
        // Predicated region
        $region109: #{encoder_forward.1} parent=107 // pred_check
          %p3914 = pneg %p511
        $region110: #{encoder_forward.1} parent=107 // pred_check_branch
          %3916 = sbr.rel (%p3914) target = $region112
        $region111: #{encoder_forward.1} parent=107 // pred_region
          %s3917 = sand.u32 %s496, 1
          %s3918 = scalar_lea.sflag [#allocation4], %s3917
          %s3919 = sand.u32 %s496, 1
          %s3920 = smul.addr %s3919, 32
          %s3921 = scalar_lea.vmem [#allocation3], %s3920
          %3922 = dma.done %s3918, 512
        $region112: #{encoder_forward.1} parent=107 // pred_fallthru
          _
      $region108: #{encoder_forward.1} parent=5 // pred_fallthru
        _
    $region6: #{encoder_forward.1} parent=1 // loop_footer
      %s31 = sadd.s32 1, %s27
    $region7: #{encoder_forward.1} parent=1 // loop_footer_branch
      %26 = sbr.rel target = $region3
    $region8: #{encoder_forward.1} parent=1 // loop_exit
      _
    %3923 = vsyncpa [#allocation4], 1
    %s3924 = scalar_lea.sflag [#allocation4], 1
    %3925 = vsyncpa %s3924, 1

</llo_original>
